<compile_context>
chip_gen: v7x
topology: tpu7x:2x2x1
jax: 0.10.0
libtpu: 0.0.40
codegen_flags: <defaults>
</compile_context>

<pallas_src>
import numpy as np
import jax
import jax.numpy as jnp
from jax.experimental import pallas as pl
from jax.experimental.pallas import tpu as pltpu

EUCLIDEAN_DIM = 128
HYPERBOLIC_DIM = 128
COMBINED_DIM = EUCLIDEAN_DIM + HYPERBOLIC_DIM   # 256
HIDDEN_DIM = 512                                # hardcoded in the module
CURVATURE = 0.7


def _gelu_exact(x):
    # nn.GELU() default = exact (erf-based) GELU
    return 0.5 * x * (1.0 + jax.lax.erf(x * np.float32(1.0 / np.sqrt(2.0))))


def _gelu_tanh(x):
    # tanh approximation: transcendental goes to the EUP slot instead of a
    # long erf polynomial on the (saturating) VPU slot.
    c0 = np.float32(np.sqrt(2.0 / np.pi))
    c1 = np.float32(0.044715)
    return 0.5 * x * (1.0 + jnp.tanh(c0 * (x + c1 * x * x * x)))


def _make_kernel(curvature, approx_gelu):
    sqrt_c = np.float32(np.sqrt(curvature))
    inv_sqrt_c = np.float32(1.0 / np.sqrt(curvature))
    gelu = _gelu_tanh if approx_gelu else _gelu_exact

    def kernel(t_ref, g_ref,
               w1_ref, b1_ref,           # fused first layers [256,1024],[1,1024]
               w2e_ref, b2e_ref,         # [512,128],[1,128]
               w2h_ref, b2h_ref,         # [512,128],[1,128]
               ve_ref, vh_ref,           # folded attention vectors [1,128]
               s_ref,                    # SMEM (2,): folded scalar offsets
               eu_out, hy_out, fused_out):
        # combined = cat([temporal, graph], -1)                        [bm, 256]
        # (inputs already arrive in the MXU dtype, so no per-step convert)
        combined = jnp.concatenate([t_ref[...], g_ref[...]], axis=-1)
        combined = combined.astype(w1_ref.dtype)

        # fused first layer: one [bm,256] @ [256,1024] matmul, f32 accumulate
        h = jnp.dot(combined, w1_ref[...],
                    preferred_element_type=jnp.float32) + b1_ref[...]
        h1 = gelu(h[:, :HIDDEN_DIM])                 # euclidean branch [bm,512]
        h2 = gelu(h[:, HIDDEN_DIM:])                 # hyperbolic branch [bm,512]

        euclidean = jnp.dot(h1.astype(w2e_ref.dtype), w2e_ref[...],
                            preferred_element_type=jnp.float32) + b2e_ref[...]
        h_pre = jnp.dot(h2.astype(w2h_ref.dtype), w2h_ref[...],
                        preferred_element_type=jnp.float32) + b2h_ref[...]

        # PoincareBall(c).expmap0(u) = tanh(sqrt(c)*||u||) * u / (sqrt(c)*||u||)
        # single rsqrt (EUP); group the [bm,1] factors before broadcasting.
        ss = jnp.sum(h_pre * h_pre, axis=-1, keepdims=True)
        ss = jnp.maximum(ss, np.float32(1e-30))      # == norm.clamp_min(1e-15)
        r = jax.lax.rsqrt(ss)                        # 1 / ||u||
        scn = sqrt_c * ss * r                        # sqrt(c) * ||u||
        hyperbolic = h_pre * (jnp.tanh(scn) * (r * inv_sqrt_c))

        # folded CrossManifoldAttention fusion (exact up to fp reassociation)
        ae = jax.nn.sigmoid(
            jnp.sum(euclidean * ve_ref[...], axis=-1, keepdims=True) + s_ref[0])
        ah = jax.nn.sigmoid(
            jnp.sum(hyperbolic * vh_ref[...], axis=-1, keepdims=True) + s_ref[1])
        fused = ae * euclidean + ah * hyperbolic

        eu_out[...] = euclidean.astype(eu_out.dtype)
        hy_out[...] = hyperbolic.astype(hy_out.dtype)
        fused_out[...] = fused.astype(fused_out.dtype)

    return kernel


def _prepare_params(params, matmul_dtype):
    """Host-side algebraic folding of the module's weights."""
    (w1e, b1e, w2e, b2e, w1h, b1h, w2h, b2h,
     weu, beu, why, bhy, wattn, battn) = params

    # fuse the two first-layer projections
    w1 = jnp.concatenate([w1e, w1h], axis=1)                     # [256, 1024]
    b1 = jnp.concatenate([b1e, b1h], axis=1)                     # [1, 1024]

    # fold attn_weights (applied to cat(q, q)) and the q-projections:
    #   score = x @ (W @ wf) + (b @ wf + battn),  wf = wattn[:d] + wattn[d:]
    wf = (wattn[:, :EUCLIDEAN_DIM] + wattn[:, EUCLIDEAN_DIM:]).T  # [128, 1]
    v_e = (weu @ wf).T                                            # [1, 128]
    v_h = (why @ wf).T                                            # [1, 128]
    s = jnp.concatenate([(beu @ wf).reshape(1) + battn.reshape(1),
                         (bhy @ wf).reshape(1) + battn.reshape(1)])  # (2,) f32

    if matmul_dtype is not None:
        w1 = w1.astype(matmul_dtype)
        w2e = w2e.astype(matmul_dtype)
        w2h = w2h.astype(matmul_dtype)
    # biases, folded attention vectors and scalar offsets stay f32
    return w1, b1, w2e, b2e, w2h, b2h, v_e, v_h, s


def hybrid_space_transformer(temporal, graph, params, curvature=CURVATURE,
                             bm=128, matmul_dtype=jnp.bfloat16,
                             approx_gelu=True, out_dtype=jnp.float32):
    """Fused forward pass.

    matmul_dtype: MXU input dtype.  bf16 is the default on ALL generations
      (f32 MXU inputs are multi-pass emulation); pass None for the f32-exact
      path.  Accumulation and elementwise math is always f32.
    bm: batch tile.  128 keeps the grid length >= 2 at B >= 256 so both v7x
      TensorCores get work; raise it (256-512) for large batches on the
      single-TC v5e/v6e.  TODO(synk): keep the grid even on v7x when raising.
    approx_gelu: tanh-approx GELU (EUP) vs exact erf GELU (VPU polynomial).
    out_dtype: output dtype; bf16 halves output HBM traffic if downstream
      consumers accept it.
    """
    B = temporal.shape[0]
    Bp = ((B + bm - 1) // bm) * bm
    if Bp != B:
        pad = Bp - B
        temporal = jnp.pad(temporal, ((0, pad), (0, 0)))
        graph = jnp.pad(graph, ((0, pad), (0, 0)))

    if matmul_dtype is not None:
        # cast activations host-side so `combined` is built directly in the
        # MXU dtype (halves per-step activation DMA + drops in-kernel convert)
        temporal = temporal.astype(matmul_dtype)
        graph = graph.astype(matmul_dtype)

    w1, b1, w2e, b2e, w2h, b2h, v_e, v_h, s = _prepare_params(params, matmul_dtype)

    def rows_spec(d):
        return pl.BlockSpec((bm, d), lambda i: (i, 0))

    def full_spec(arr):
        # grid-invariant weights/biases: constant index_map -> fetched once
        return pl.BlockSpec(arr.shape, lambda i: (0,) * arr.ndim)

    in_specs = [rows_spec(EUCLIDEAN_DIM), rows_spec(HYPERBOLIC_DIM),
                full_spec(w1), full_spec(b1),
                full_spec(w2e), full_spec(b2e),
                full_spec(w2h), full_spec(b2h),
                full_spec(v_e), full_spec(v_h),
                pl.BlockSpec(memory_space=pltpu.MemorySpace.SMEM)]
    out_specs = (rows_spec(EUCLIDEAN_DIM),
                 rows_spec(HYPERBOLIC_DIM),
                 rows_spec(EUCLIDEAN_DIM))
    out_shape = (jax.ShapeDtypeStruct((Bp, EUCLIDEAN_DIM), out_dtype),
                 jax.ShapeDtypeStruct((Bp, HYPERBOLIC_DIM), out_dtype),
                 jax.ShapeDtypeStruct((Bp, EUCLIDEAN_DIM), out_dtype))

    euclidean, hyperbolic, fused = pl.pallas_call(
        _make_kernel(curvature, approx_gelu),
        out_shape=out_shape,
        grid=(Bp // bm,),
        in_specs=in_specs,
        out_specs=out_specs,
        compiler_params=pltpu.CompilerParams(
            dimension_semantics=("parallel",)),
    )(temporal, graph, w1, b1, w2e, b2e, w2h, b2h, v_e, v_h, s)

    if Bp != B:
        euclidean, hyperbolic, fused = (euclidean[:B], hyperbolic[:B], fused[:B])
    return {"euclidean": euclidean, "hyperbolic": hyperbolic, "fused": fused}


def _init_linear(key, fan_in, fan_out):
    # PyTorch nn.Linear default init: U(-1/sqrt(fan_in), 1/sqrt(fan_in))
    kw, kb = jax.random.split(key)
    bound = 1.0 / np.sqrt(fan_in)
    W = jax.random.uniform(kw, (fan_in, fan_out), jnp.float32, -bound, bound)
    b = jax.random.uniform(kb, (1, fan_out), jnp.float32, -bound, bound)
    return W, b


def _reference(temporal, graph, params, curvature=CURVATURE):
    (w1e, b1e, w2e, b2e, w1h, b1h, w2h, b2h,
     weu, beu, why, bhy, wattn, battn) = params
    gelu = lambda x: 0.5 * x * (1.0 + jax.lax.erf(x / jnp.sqrt(2.0)))
    combined = jnp.concatenate([temporal, graph], axis=-1)
    euclidean = gelu(combined @ w1e + b1e) @ w2e + b2e
    h_pre = gelu(combined @ w1h + b1h) @ w2h + b2h
    norm = jnp.maximum(jnp.linalg.norm(h_pre, axis=-1, keepdims=True), 1e-15)
    sc = jnp.sqrt(curvature) * norm
    hyperbolic = jnp.tanh(sc) * h_pre / sc
    q_e = euclidean @ weu + beu
    q_h = hyperbolic @ why + bhy
    ae = jax.nn.sigmoid(
        jnp.sum(jnp.concatenate([q_e, q_e], -1) * wattn, -1, keepdims=True) + battn)
    ah = jax.nn.sigmoid(
        jnp.sum(jnp.concatenate([q_h, q_h], -1) * wattn, -1, keepdims=True) + battn)
    fused = ae * euclidean + ah * hyperbolic
    return {"euclidean": euclidean, "hyperbolic": hyperbolic, "fused": fused}


if __name__ == "__main__":
    key = jax.random.PRNGKey(0)
    keys = jax.random.split(key, 10)

    B = 256            # -> grid of 2 tiles of bm=128 (both v7x TCs busy)
    temporal = jax.random.normal(keys[0], (B, EUCLIDEAN_DIM), jnp.float32)
    graph = jax.random.normal(keys[1], (B, HYPERBOLIC_DIM), jnp.float32)

    # proj_euclidean: Linear(256,512), Linear(512,128)
    w1e, b1e = _init_linear(keys[2], COMBINED_DIM, HIDDEN_DIM)
    w2e, b2e = _init_linear(keys[3], HIDDEN_DIM, EUCLIDEAN_DIM)
    # proj_hyperbolic: Linear(256,512), Linear(512,128)
    w1h, b1h = _init_linear(keys[4], COMBINED_DIM, HIDDEN_DIM)
    w2h, b2h = _init_linear(keys[5], HIDDEN_DIM, HYPERBOLIC_DIM)
    # fusion: W_euclidean, W_hyperbolic, attn_weights (stored as [1, 2*dim])
    weu, beu = _init_linear(keys[6], EUCLIDEAN_DIM, EUCLIDEAN_DIM)
    why, bhy = _init_linear(keys[7], HYPERBOLIC_DIM, HYPERBOLIC_DIM)
    wattn_col, battn = _init_linear(keys[8], COMBINED_DIM, 1)   # [256,1], [1,1]
    wattn = wattn_col.T                                         # [1, 256]

    params = (w1e, b1e, w2e, b2e, w1h, b1h, w2h, b2h,
              weu, beu, why, bhy, wattn, battn)

    ref = _reference(temporal, graph, params)

    # default fast path: bf16 MXU inputs (all generations) + tanh-approx GELU
    out = hybrid_space_transformer(temporal, graph, params)
    jax.block_until_ready(out)
    for k in ("euclidean", "hyperbolic", "fused"):
        np.testing.assert_allclose(np.asarray(out[k]), np.asarray(ref[k]),
                                   rtol=5e-2, atol=5e-2)

    # exact path: f32 MXU inputs + erf GELU (matches nn.GELU semantics tightly)
    out_exact = hybrid_space_transformer(temporal, graph, params,
                                         matmul_dtype=None, approx_gelu=False)
    jax.block_until_ready(out_exact)
    for k in ("euclidean", "hyperbolic", "fused"):
        np.testing.assert_allclose(np.asarray(out_exact[k]), np.asarray(ref[k]),
                                   rtol=2e-3, atol=2e-3)

    print("KERNEL_OK")
</pallas_src>

<mosaic_0001>
module attributes {stable_mosaic.version = 11 : i64} {
  func.func @kernel(%arg0: i32, %arg1: memref<128x128xbf16, #tpu.memory_space<vmem>>, %arg2: memref<128x128xbf16, #tpu.memory_space<vmem>>, %arg3: memref<256x1024xbf16, #tpu.memory_space<vmem>>, %arg4: memref<1x1024xf32, #tpu.memory_space<vmem>>, %arg5: memref<512x128xbf16, #tpu.memory_space<vmem>>, %arg6: memref<1x128xf32, #tpu.memory_space<vmem>>, %arg7: memref<512x128xbf16, #tpu.memory_space<vmem>>, %arg8: memref<1x128xf32, #tpu.memory_space<vmem>>, %arg9: memref<1x128xf32, #tpu.memory_space<vmem>>, %arg10: memref<1x128xf32, #tpu.memory_space<vmem>>, %arg11: memref<2xf32, #tpu.memory_space<smem>>, %arg12: memref<128x128xf32, #tpu.memory_space<vmem>>, %arg13: memref<128x128xf32, #tpu.memory_space<vmem>>, %arg14: memref<128x128xf32, #tpu.memory_space<vmem>>) attributes {dimension_semantics = [#tpu.dimension_semantics<parallel>], iteration_bounds = array<i64: 2>, scalar_prefetch = 0 : i64, scratch_operands = 0 : i64, tpu.core_type = #tpu.core_type<tc>, window_params = [{transform_indices = @transform_0, window_bounds = array<i64: 128, 128>}, {transform_indices = @transform_1, window_bounds = array<i64: 128, 128>}, {pipeline_mode = #tpu.pipeline_mode<synchronous>, transform_indices = @transform_2, window_bounds = array<i64: 256, 1024>}, {pipeline_mode = #tpu.pipeline_mode<synchronous>, transform_indices = @transform_3, window_bounds = array<i64: 1, 1024>}, {pipeline_mode = #tpu.pipeline_mode<synchronous>, transform_indices = @transform_4, window_bounds = array<i64: 512, 128>}, {pipeline_mode = #tpu.pipeline_mode<synchronous>, transform_indices = @transform_5, window_bounds = array<i64: 1, 128>}, {pipeline_mode = #tpu.pipeline_mode<synchronous>, transform_indices = @transform_6, window_bounds = array<i64: 512, 128>}, {pipeline_mode = #tpu.pipeline_mode<synchronous>, transform_indices = @transform_7, window_bounds = array<i64: 1, 128>}, {pipeline_mode = #tpu.pipeline_mode<synchronous>, transform_indices = @transform_8, window_bounds = array<i64: 1, 128>}, {pipeline_mode = #tpu.pipeline_mode<synchronous>, transform_indices = @transform_9, window_bounds = array<i64: 1, 128>}, {transform_indices = @transform_10, window_bounds = array<i64: 2>}, {transform_indices = @transform_11, window_bounds = array<i64: 128, 128>}, {transform_indices = @transform_12, window_bounds = array<i64: 128, 128>}, {transform_indices = @transform_13, window_bounds = array<i64: 128, 128>}]} {
    %c0 = arith.constant 0 : index
    %c0_0 = arith.constant 0 : index
    %0 = vector.load %arg1[%c0, %c0_0] : memref<128x128xbf16, #tpu.memory_space<vmem>>, vector<128x128xbf16>
    %c0_1 = arith.constant 0 : index
    %c0_2 = arith.constant 0 : index
    %1 = vector.load %arg2[%c0_1, %c0_2] : memref<128x128xbf16, #tpu.memory_space<vmem>>, vector<128x128xbf16>
    %2 = tpu.concatenate %0, %1 in 1 : vector<128x128xbf16>, vector<128x128xbf16> -> vector<128x256xbf16>
    %c0_3 = arith.constant 0 : index
    %c0_4 = arith.constant 0 : index
    %3 = vector.load %arg3[%c0_3, %c0_4] : memref<256x1024xbf16, #tpu.memory_space<vmem>>, vector<256x1024xbf16>
    %cst = arith.constant dense<0.000000e+00> : vector<128x1024xf32>
    %4 = tpu.matmul %2, %3, %cst {dimension_numbers = #tpu.dot_dimension_numbers<[1], [0], [0], [1], [0, 0, 1, 1], [], []>} : vector<128x256xbf16>, vector<256x1024xbf16>, vector<128x1024xf32> -> vector<128x1024xf32>
    %c0_5 = arith.constant 0 : index
    %c0_6 = arith.constant 0 : index
    %5 = vector.load %arg4[%c0_5, %c0_6] : memref<1x1024xf32, #tpu.memory_space<vmem>>, vector<1x1024xf32>
    %6 = vector.broadcast %5 : vector<1x1024xf32> to vector<128x1024xf32>
    %7 = arith.addf %4, %6 : vector<128x1024xf32>
    %8 = vector.extract_strided_slice %7 {offsets = [0, 0], sizes = [128, 512], strides = [1, 1]} : vector<128x1024xf32> to vector<128x512xf32>
    %cst_7 = arith.constant 5.000000e-01 : f32
    %9 = vector.broadcast %cst_7 : f32 to vector<128x512xf32>
    %10 = arith.mulf %9, %8 : vector<128x512xf32>
    %cst_8 = arith.constant 4.471500e-02 : f32
    %11 = vector.broadcast %cst_8 : f32 to vector<128x512xf32>
    %12 = arith.mulf %11, %8 : vector<128x512xf32>
    %13 = arith.mulf %12, %8 : vector<128x512xf32>
    %14 = arith.mulf %13, %8 : vector<128x512xf32>
    %15 = arith.addf %8, %14 : vector<128x512xf32>
    %cst_9 = arith.constant 0.797884583 : f32
    %16 = vector.broadcast %cst_9 : f32 to vector<128x512xf32>
    %17 = arith.mulf %16, %15 : vector<128x512xf32>
    %18 = math.tanh %17 : vector<128x512xf32>
    %cst_10 = arith.constant 1.000000e+00 : f32
    %19 = vector.broadcast %cst_10 : f32 to vector<128x512xf32>
    %20 = arith.addf %19, %18 : vector<128x512xf32>
    %21 = arith.mulf %10, %20 : vector<128x512xf32>
    %22 = vector.extract_strided_slice %7 {offsets = [0, 512], sizes = [128, 512], strides = [1, 1]} : vector<128x1024xf32> to vector<128x512xf32>
    %cst_11 = arith.constant 5.000000e-01 : f32
    %23 = vector.broadcast %cst_11 : f32 to vector<128x512xf32>
    %24 = arith.mulf %23, %22 : vector<128x512xf32>
    %cst_12 = arith.constant 4.471500e-02 : f32
    %25 = vector.broadcast %cst_12 : f32 to vector<128x512xf32>
    %26 = arith.mulf %25, %22 : vector<128x512xf32>
    %27 = arith.mulf %26, %22 : vector<128x512xf32>
    %28 = arith.mulf %27, %22 : vector<128x512xf32>
    %29 = arith.addf %22, %28 : vector<128x512xf32>
    %cst_13 = arith.constant 0.797884583 : f32
    %30 = vector.broadcast %cst_13 : f32 to vector<128x512xf32>
    %31 = arith.mulf %30, %29 : vector<128x512xf32>
    %32 = math.tanh %31 : vector<128x512xf32>
    %cst_14 = arith.constant 1.000000e+00 : f32
    %33 = vector.broadcast %cst_14 : f32 to vector<128x512xf32>
    %34 = arith.addf %33, %32 : vector<128x512xf32>
    %35 = arith.mulf %24, %34 : vector<128x512xf32>
    %36 = arith.truncf %21 : vector<128x512xf32> to vector<128x512xbf16>
    %c0_15 = arith.constant 0 : index
    %c0_16 = arith.constant 0 : index
    %37 = vector.load %arg5[%c0_15, %c0_16] : memref<512x128xbf16, #tpu.memory_space<vmem>>, vector<512x128xbf16>
    %cst_17 = arith.constant dense<0.000000e+00> : vector<128x128xf32>
    %38 = tpu.matmul %36, %37, %cst_17 {dimension_numbers = #tpu.dot_dimension_numbers<[1], [0], [0], [1], [0, 0, 1, 1], [], []>} : vector<128x512xbf16>, vector<512x128xbf16>, vector<128x128xf32> -> vector<128x128xf32>
    %c0_18 = arith.constant 0 : index
    %c0_19 = arith.constant 0 : index
    %39 = vector.load %arg6[%c0_18, %c0_19] : memref<1x128xf32, #tpu.memory_space<vmem>>, vector<1x128xf32>
    %40 = vector.broadcast %39 : vector<1x128xf32> to vector<128x128xf32>
    %41 = arith.addf %38, %40 : vector<128x128xf32>
    %42 = arith.truncf %35 : vector<128x512xf32> to vector<128x512xbf16>
    %c0_20 = arith.constant 0 : index
    %c0_21 = arith.constant 0 : index
    %43 = vector.load %arg7[%c0_20, %c0_21] : memref<512x128xbf16, #tpu.memory_space<vmem>>, vector<512x128xbf16>
    %cst_22 = arith.constant dense<0.000000e+00> : vector<128x128xf32>
    %44 = tpu.matmul %42, %43, %cst_22 {dimension_numbers = #tpu.dot_dimension_numbers<[1], [0], [0], [1], [0, 0, 1, 1], [], []>} : vector<128x512xbf16>, vector<512x128xbf16>, vector<128x128xf32> -> vector<128x128xf32>
    %c0_23 = arith.constant 0 : index
    %c0_24 = arith.constant 0 : index
    %45 = vector.load %arg8[%c0_23, %c0_24] : memref<1x128xf32, #tpu.memory_space<vmem>>, vector<1x128xf32>
    %46 = vector.broadcast %45 : vector<1x128xf32> to vector<128x128xf32>
    %47 = arith.addf %44, %46 : vector<128x128xf32>
    %48 = arith.mulf %47, %47 : vector<128x128xf32>
    %cst_25 = arith.constant dense<0.000000e+00> : vector<128xf32>
    %49 = vector.multi_reduction <add>, %48, %cst_25 [1] : vector<128x128xf32> to vector<128xf32>
    %50 = vector.shape_cast %49 : vector<128xf32> to vector<128x1xf32>
    %cst_26 = arith.constant 1.000000e-30 : f32
    %51 = vector.broadcast %cst_26 : f32 to vector<128x1xf32>
    %52 = arith.maximumf %50, %51 : vector<128x1xf32>
    %53 = math.rsqrt %52 : vector<128x1xf32>
    %cst_27 = arith.constant 8.366600e-01 : f32
    %54 = vector.broadcast %cst_27 : f32 to vector<128x1xf32>
    %55 = arith.mulf %54, %52 : vector<128x1xf32>
    %56 = arith.mulf %55, %53 : vector<128x1xf32>
    %57 = math.tanh %56 : vector<128x1xf32>
    %cst_28 = arith.constant 1.19522858 : f32
    %58 = vector.broadcast %cst_28 : f32 to vector<128x1xf32>
    %59 = arith.mulf %53, %58 : vector<128x1xf32>
    %60 = arith.mulf %57, %59 : vector<128x1xf32>
    %61 = vector.broadcast %60 : vector<128x1xf32> to vector<128x128xf32>
    %62 = arith.mulf %47, %61 : vector<128x128xf32>
    %c0_29 = arith.constant 0 : index
    %c0_30 = arith.constant 0 : index
    %63 = vector.load %arg9[%c0_29, %c0_30] : memref<1x128xf32, #tpu.memory_space<vmem>>, vector<1x128xf32>
    %64 = vector.broadcast %63 : vector<1x128xf32> to vector<128x128xf32>
    %65 = arith.mulf %41, %64 : vector<128x128xf32>
    %cst_31 = arith.constant dense<0.000000e+00> : vector<128xf32>
    %66 = vector.multi_reduction <add>, %65, %cst_31 [1] : vector<128x128xf32> to vector<128xf32>
    %67 = vector.shape_cast %66 : vector<128xf32> to vector<128x1xf32>
    %c0_32 = arith.constant 0 : index
    %68 = memref.load %arg11[%c0_32] : memref<2xf32, #tpu.memory_space<smem>>
    %69 = vector.broadcast %68 : f32 to vector<128x1xf32>
    %70 = arith.addf %67, %69 : vector<128x1xf32>
    %71 = arith.negf %70 : vector<128x1xf32>
    %72 = math.exp %71 : vector<128x1xf32>
    %cst_33 = arith.constant 1.000000e+00 : f32
    %73 = vector.broadcast %cst_33 : f32 to vector<128x1xf32>
    %74 = arith.addf %73, %72 : vector<128x1xf32>
    %75 = arith.divf %73, %74 : vector<128x1xf32>
    %c0_34 = arith.constant 0 : index
    %c0_35 = arith.constant 0 : index
    %76 = vector.load %arg10[%c0_34, %c0_35] : memref<1x128xf32, #tpu.memory_space<vmem>>, vector<1x128xf32>
    %77 = vector.broadcast %76 : vector<1x128xf32> to vector<128x128xf32>
    %78 = arith.mulf %62, %77 : vector<128x128xf32>
    %cst_36 = arith.constant dense<0.000000e+00> : vector<128xf32>
    %79 = vector.multi_reduction <add>, %78, %cst_36 [1] : vector<128x128xf32> to vector<128xf32>
    %80 = vector.shape_cast %79 : vector<128xf32> to vector<128x1xf32>
    %c1 = arith.constant 1 : index
    %81 = memref.load %arg11[%c1] : memref<2xf32, #tpu.memory_space<smem>>
    %82 = vector.broadcast %81 : f32 to vector<128x1xf32>
    %83 = arith.addf %80, %82 : vector<128x1xf32>
    %84 = arith.negf %83 : vector<128x1xf32>
    %85 = math.exp %84 : vector<128x1xf32>
    %cst_37 = arith.constant 1.000000e+00 : f32
    %86 = vector.broadcast %cst_37 : f32 to vector<128x1xf32>
    %87 = arith.addf %86, %85 : vector<128x1xf32>
    %88 = arith.divf %86, %87 : vector<128x1xf32>
    %89 = vector.broadcast %75 : vector<128x1xf32> to vector<128x128xf32>
    %90 = arith.mulf %89, %41 : vector<128x128xf32>
    %91 = vector.broadcast %88 : vector<128x1xf32> to vector<128x128xf32>
    %92 = arith.mulf %91, %62 : vector<128x128xf32>
    %93 = arith.addf %90, %92 : vector<128x128xf32>
    %c0_38 = arith.constant 0 : index
    %c0_39 = arith.constant 0 : index
    %94 = vector.load %arg12[%c0_38, %c0_39] : memref<128x128xf32, #tpu.memory_space<vmem>>, vector<128x128xf32>
    tpu.vector_store %arg12[%c0_38, %c0_39], %41 {strides = array<i32>} : memref<128x128xf32, #tpu.memory_space<vmem>>, vector<128x128xf32>,
    %c0_40 = arith.constant 0 : index
    %c0_41 = arith.constant 0 : index
    %95 = vector.load %arg13[%c0_40, %c0_41] : memref<128x128xf32, #tpu.memory_space<vmem>>, vector<128x128xf32>
    tpu.vector_store %arg13[%c0_40, %c0_41], %62 {strides = array<i32>} : memref<128x128xf32, #tpu.memory_space<vmem>>, vector<128x128xf32>,
    %c0_42 = arith.constant 0 : index
    %c0_43 = arith.constant 0 : index
    %96 = vector.load %arg14[%c0_42, %c0_43] : memref<128x128xf32, #tpu.memory_space<vmem>>, vector<128x128xf32>
    tpu.vector_store %arg14[%c0_42, %c0_43], %93 {strides = array<i32>} : memref<128x128xf32, #tpu.memory_space<vmem>>, vector<128x128xf32>,
    return
  }
  func.func @transform_0(%arg0: i32) -> (i32, i32) {
    %c0_i32 = arith.constant 0 : i32
    %c0_i32_0 = arith.constant 0 : i32
    return %arg0, %c0_i32 : i32, i32
  }
  func.func @transform_1(%arg0: i32) -> (i32, i32) {
    %c0_i32 = arith.constant 0 : i32
    %c0_i32_0 = arith.constant 0 : i32
    return %arg0, %c0_i32 : i32, i32
  }
  func.func @transform_2(%arg0: i32) -> (i32, i32) {
    %c0_i32 = arith.constant 0 : i32
    %c0_i32_0 = arith.constant 0 : i32
    %c0_i32_1 = arith.constant 0 : i32
    return %c0_i32, %c0_i32_0 : i32, i32
  }
  func.func @transform_3(%arg0: i32) -> (i32, i32) {
    %c0_i32 = arith.constant 0 : i32
    %c0_i32_0 = arith.constant 0 : i32
    %c0_i32_1 = arith.constant 0 : i32
    return %c0_i32, %c0_i32_0 : i32, i32
  }
  func.func @transform_4(%arg0: i32) -> (i32, i32) {
    %c0_i32 = arith.constant 0 : i32
    %c0_i32_0 = arith.constant 0 : i32
    %c0_i32_1 = arith.constant 0 : i32
    return %c0_i32, %c0_i32_0 : i32, i32
  }
  func.func @transform_5(%arg0: i32) -> (i32, i32) {
    %c0_i32 = arith.constant 0 : i32
    %c0_i32_0 = arith.constant 0 : i32
    %c0_i32_1 = arith.constant 0 : i32
    return %c0_i32, %c0_i32_0 : i32, i32
  }
  func.func @transform_6(%arg0: i32) -> (i32, i32) {
    %c0_i32 = arith.constant 0 : i32
    %c0_i32_0 = arith.constant 0 : i32
    %c0_i32_1 = arith.constant 0 : i32
    return %c0_i32, %c0_i32_0 : i32, i32
  }
  func.func @transform_7(%arg0: i32) -> (i32, i32) {
    %c0_i32 = arith.constant 0 : i32
    %c0_i32_0 = arith.constant 0 : i32
    %c0_i32_1 = arith.constant 0 : i32
    return %c0_i32, %c0_i32_0 : i32, i32
  }
  func.func @transform_8(%arg0: i32) -> (i32, i32) {
    %c0_i32 = arith.constant 0 : i32
    %c0_i32_0 = arith.constant 0 : i32
    %c0_i32_1 = arith.constant 0 : i32
    return %c0_i32, %c0_i32_0 : i32, i32
  }
  func.func @transform_9(%arg0: i32) -> (i32, i32) {
    %c0_i32 = arith.constant 0 : i32
    %c0_i32_0 = arith.constant 0 : i32
    %c0_i32_1 = arith.constant 0 : i32
    return %c0_i32, %c0_i32_0 : i32, i32
  }
  func.func @transform_10(%arg0: i32) -> i32 {
    %c0_i32 = arith.constant 0 : i32
    %c0_i32_0 = arith.constant 0 : i32
    return %c0_i32 : i32
  }
  func.func @transform_11(%arg0: i32) -> (i32, i32) {
    %c0_i32 = arith.constant 0 : i32
    %c0_i32_0 = arith.constant 0 : i32
    return %arg0, %c0_i32 : i32, i32
  }
  func.func @transform_12(%arg0: i32) -> (i32, i32) {
    %c0_i32 = arith.constant 0 : i32
    %c0_i32_0 = arith.constant 0 : i32
    return %arg0, %c0_i32 : i32, i32
  }
  func.func @transform_13(%arg0: i32) -> (i32, i32) {
    %c0_i32 = arith.constant 0 : i32
    %c0_i32_0 = arith.constant 0 : i32
    return %arg0, %c0_i32 : i32, i32
  }
}

</mosaic_0001>

<llo_original>
// kernel: tpu_custom_call.1
$region0: #{tpu_custom_call.1}
  #allocation0 [shape = 'u32[]', space=smem, size = 0x4, offset = 0x4, fixed_abs, tag = 'smem constant byte address 0x4 - core index']
  #allocation1 [shape = 'u32[144,128]{1,0:T(1,128)}', space=vmem, size = 0x12000, scoped, tag = 'internal scratch']
  %s0 = inlined_call_operand.hbm [shape: bf16[256,128], index: 0, kind: input, shape index: {}]
  %s1 = inlined_call_operand.hbm [shape: bf16[256,128], index: 1, kind: input, shape index: {}]
  %s2 = inlined_call_operand.hbm [shape: bf16[256,1024], index: 2, kind: input, shape index: {}]
  %s3 = inlined_call_operand.vmem [shape: f32[1,1024], index: 3, kind: input, shape index: {}]
  %s4 = inlined_call_operand.hbm [shape: bf16[512,128], index: 4, kind: input, shape index: {}]
  %s5 = inlined_call_operand.vmem [shape: f32[1,128], index: 5, kind: input, shape index: {}]
  %s6 = inlined_call_operand.hbm [shape: bf16[512,128], index: 6, kind: input, shape index: {}]
  %s7 = inlined_call_operand.vmem [shape: f32[1,128], index: 7, kind: input, shape index: {}]
  %s8 = inlined_call_operand.vmem [shape: f32[1,128], index: 8, kind: input, shape index: {}]
  %s9 = inlined_call_operand.vmem [shape: f32[1,128], index: 9, kind: input, shape index: {}]
  %s10 = inlined_call_operand.vmem [shape: f32[2], index: 10, kind: input, shape index: {}]
  %s11 = inlined_call_operand.hbm [shape: f32[256,128], index: 11, kind: output, shape index: {0}]
  %s12 = inlined_call_operand.hbm [shape: f32[256,128], index: 12, kind: output, shape index: {1}]
  %s13 = inlined_call_operand.hbm [shape: f32[256,128], index: 13, kind: output, shape index: {2}]
  %14 = xla_tuple %s11, %s12, %s13
  %s15 = sld [smem:[#allocation0]]
  $region117: #{tpu_custom_call.1} parent=0
    _
  %s17 = ssub.s32 1, %s15
  %s18 = scalar_select 0, %s17, %s15
  $region1: #{tpu_custom_call.1} parent=0
    #allocation2 [shape = 'u8[65536]{0}', space=vmem, size = 0x10000, scoped, tag = 'input window, operand 0']
    #allocation3 [shape = 's32[2]{0}', space=sflag, size = 0x8, scoped, tag = 'scoped memory for tpu_custom_call.1']
    #allocation4 [shape = 's32[2]{0}', space=sflag, size = 0x8, scoped, tag = 'scoped memory for tpu_custom_call.1']
    #allocation5 [shape = 's32[2]{0}', space=sflag, size = 0x8, scoped, tag = 'scoped memory for tpu_custom_call.1']
    #allocation6 [shape = 'u8[65536]{0}', space=vmem, size = 0x10000, scoped, tag = 'input window, operand 1']
    #allocation7 [shape = 's32[2]{0}', space=sflag, size = 0x8, scoped, tag = 'scoped memory for tpu_custom_call.1']
    #allocation8 [shape = 'u8[524288]{0}', space=vmem, size = 0x80000, scoped, tag = 'input window, operand 2, single buffered']
    #allocation9 [shape = 'u8[131072]{0}', space=vmem, size = 0x20000, scoped, tag = 'input window, operand 4, single buffered']
    #allocation10 [shape = 's32[1]{0}', space=sflag, size = 0x4, scoped, tag = 'scoped memory for tpu_custom_call.1']
    #allocation11 [shape = 'u8[131072]{0}', space=vmem, size = 0x20000, scoped, tag = 'input window, operand 6, single buffered']
    #allocation12 [shape = 'u8[512]{0}', space=smem, size = 0x200, scoped, tag = 'input window, operand 10, single buffered']
    #allocation13 [shape = 'u8[131072]{0}', space=vmem, size = 0x20000, scoped, tag = 'output window, operand 0']
    #allocation14 [shape = 'u8[131072]{0}', space=vmem, size = 0x20000, scoped, tag = 'output window, operand 1']
    #allocation15 [shape = 's32[2]{0}', space=sflag, size = 0x8, scoped, tag = 'scoped memory for tpu_custom_call.1']
    #allocation16 [shape = 'u8[131072]{0}', space=vmem, size = 0x20000, scoped, tag = 'output window, operand 2']
    %19 = vsyncpa [#allocation3], 0
    %s20 = scalar_lea.sflag [#allocation3], 1
    %21 = vsyncpa %s20, 0
    %22 = vsyncpa [#allocation7], 0
    %s23 = scalar_lea.sflag [#allocation7], 1
    %24 = vsyncpa %s23, 0
    %25 = vsyncpa [#allocation10], 0
    %26 = vsyncpa [#allocation5], 0
    %27 = vsyncpa [#allocation4], 0
    %s28 = scalar_lea.sflag [#allocation4], 1
    %29 = vsyncpa %s28, 0
    %30 = vsyncpa [#allocation15], 0
    %s31 = scalar_lea.sflag [#allocation15], 1
    %32 = vsyncpa %s31, 0
    loop: start=0, step=1, limit=4
    $region2: #{tpu_custom_call.1} parent=1 // loop_pre_header
      _
    $region3: #{tpu_custom_call.1} parent=1 // loop_header
      %s34 = sphi 0, %s38
      %p35 = scmp.ge.s32.totalorder %s34, 4
      %s44 = sphi 0, %s46
      %s47 = sphi 0, %s44
      %s48 = sphi 0, %s47
      %s64 = sphi 0, %s48
      %s70 = sphi 0, %s72
      %s73 = sphi 0, %s70
      %s74 = sphi 0, %s73
      %s90 = sphi 0, %s74
      %s94 = sphi 0, %s94
      %s96 = sphi 0, %s94
      %s97 = sphi 0, %s96
      %s111 = sphi 0, %s97
      %s115 = sphi 0, %s115
      %s117 = sphi 0, %s115
      %s118 = sphi 0, %s117
      %s132 = sphi 0, %s118
      %s136 = sphi 0, %s136
      %s138 = sphi 0, %s136
      %s139 = sphi 0, %s138
      %s153 = sphi 0, %s139
      %s157 = sphi 0, %s157
      %s159 = sphi 0, %s157
      %s160 = sphi 0, %s159
      %s174 = sphi 0, %s160
      %s178 = sphi 0, %s178
      %s180 = sphi 0, %s178
      %s181 = sphi 0, %s180
      %s195 = sphi 0, %s181
      %s199 = sphi 0, %s199
      %s201 = sphi 0, %s199
      %s202 = sphi 0, %s201
      %s216 = sphi 0, %s202
      %s220 = sphi 0, %s220
      %s222 = sphi 0, %s220
      %s223 = sphi 0, %s222
      %s237 = sphi 0, %s223
      %s241 = sphi 0, %s241
      %s243 = sphi 0, %s241
      %s244 = sphi 0, %s243
      %s258 = sphi 0, %s244
      %s262 = sphi 0, %s262
      %s264 = sphi 0, %s262
      %s265 = sphi 0, %s264
      %s279 = sphi 0, %s265
      %s285 = sphi 0, %s287
      %s288 = sphi 0, %s285
      %s289 = sphi 0, %s288
      %s305 = sphi 0, %s289
      %s311 = sphi 0, %s313
      %s314 = sphi 0, %s311
      %s315 = sphi 0, %s314
      %s331 = sphi 0, %s315
      %s337 = sphi 0, %s339
      %s340 = sphi 0, %s337
      %s341 = sphi 0, %s340
      %s357 = sphi 0, %s341
    $region4: #{tpu_custom_call.1} parent=1 // loop_header_branch
      %37 = sbr.rel (%p35) target = $region8
    $region5: #{tpu_custom_call.1} parent=1 // loop_body
      %s39 = ssub.s32 %s34, 1
      %s40 = ssub.s32 %s34, 2
      %s41 = sadd.s32 %s34, 1
      %s42 = ssub.s32 %s34, %s41
      %p43 = scmp.eq.s32.totalorder %s42, 0
      %s45 = sadd.s32 %s44, 1
      %s46 = scalar_select %p43, %s44, %s45
      %p49 = pneg %p43
      %p50 = scmp.eq.s32.totalorder %s34, 1
      %p51 = por %p49, %p50
      %p52 = scmp.ne.s32.totalorder %s44, %s47
      %p53 = scmp.eq.s32.totalorder %s34, 0
      %p54 = por %p52, %p53
      %p55 = scmp.ne.s32.totalorder %s44, %s47
      %p56 = scmp.eq.s32.totalorder %s39, 1
      %p57 = por %p55, %p56
      %p58 = scmp.ne.s32.totalorder %s47, %s48
      %p59 = scmp.eq.s32.totalorder %s39, 0
      %p60 = por %p58, %p59
      %p61 = scmp.ne.s32.totalorder %s47, %s48
      %p62 = scmp.eq.s32.totalorder %s40, 1
      %p63 = por %p61, %p62
      %p65 = scmp.ne.s32.totalorder %s48, %s64
      %p66 = scmp.eq.s32.totalorder %s40, 0
      %p67 = por %p65, %p66
      %s68 = ssub.s32 %s34, %s41
      %p69 = scmp.eq.s32.totalorder %s68, 0
      %s71 = sadd.s32 %s70, 1
      %s72 = scalar_select %p69, %s70, %s71
      %p75 = pneg %p69
      %p76 = scmp.eq.s32.totalorder %s34, 1
      %p77 = por %p75, %p76
      %p78 = scmp.ne.s32.totalorder %s70, %s73
      %p79 = scmp.eq.s32.totalorder %s34, 0
      %p80 = por %p78, %p79
      %p81 = scmp.ne.s32.totalorder %s70, %s73
      %p82 = scmp.eq.s32.totalorder %s39, 1
      %p83 = por %p81, %p82
      %p84 = scmp.ne.s32.totalorder %s73, %s74
      %p85 = scmp.eq.s32.totalorder %s39, 0
      %p86 = por %p84, %p85
      %p87 = scmp.ne.s32.totalorder %s73, %s74
      %p88 = scmp.eq.s32.totalorder %s40, 1
      %p89 = por %p87, %p88
      %p91 = scmp.ne.s32.totalorder %s74, %s90
      %p92 = scmp.eq.s32.totalorder %s40, 0
      %p93 = por %p91, %p92
      %s95 = sadd.s32 %s94, 1
      %p98 = scmp.eq.s32.totalorder %s34, 1
      %p99 = scmp.ne.s32.totalorder %s94, %s96
      %p100 = scmp.eq.s32.totalorder %s34, 0
      %p101 = por %p99, %p100
      %p102 = scmp.ne.s32.totalorder %s94, %s96
      %p103 = scmp.eq.s32.totalorder %s39, 1
      %p104 = por %p102, %p103
      %p105 = scmp.ne.s32.totalorder %s96, %s97
      %p106 = scmp.eq.s32.totalorder %s39, 0
      %p107 = por %p105, %p106
      %p108 = scmp.ne.s32.totalorder %s96, %s97
      %p109 = scmp.eq.s32.totalorder %s40, 1
      %p110 = por %p108, %p109
      %p112 = scmp.ne.s32.totalorder %s97, %s111
      %p113 = scmp.eq.s32.totalorder %s40, 0
      %p114 = por %p112, %p113
      %s116 = sadd.s32 %s115, 1
      %p119 = scmp.eq.s32.totalorder %s34, 1
      %p120 = scmp.ne.s32.totalorder %s115, %s117
      %p121 = scmp.eq.s32.totalorder %s34, 0
      %p122 = por %p120, %p121
      %p123 = scmp.ne.s32.totalorder %s115, %s117
      %p124 = scmp.eq.s32.totalorder %s39, 1
      %p125 = por %p123, %p124
      %p126 = scmp.ne.s32.totalorder %s117, %s118
      %p127 = scmp.eq.s32.totalorder %s39, 0
      %p128 = por %p126, %p127
      %p129 = scmp.ne.s32.totalorder %s117, %s118
      %p130 = scmp.eq.s32.totalorder %s40, 1
      %p131 = por %p129, %p130
      %p133 = scmp.ne.s32.totalorder %s118, %s132
      %p134 = scmp.eq.s32.totalorder %s40, 0
      %p135 = por %p133, %p134
      %s137 = sadd.s32 %s136, 1
      %p140 = scmp.eq.s32.totalorder %s34, 1
      %p141 = scmp.ne.s32.totalorder %s136, %s138
      %p142 = scmp.eq.s32.totalorder %s34, 0
      %p143 = por %p141, %p142
      %p144 = scmp.ne.s32.totalorder %s136, %s138
      %p145 = scmp.eq.s32.totalorder %s39, 1
      %p146 = por %p144, %p145
      %p147 = scmp.ne.s32.totalorder %s138, %s139
      %p148 = scmp.eq.s32.totalorder %s39, 0
      %p149 = por %p147, %p148
      %p150 = scmp.ne.s32.totalorder %s138, %s139
      %p151 = scmp.eq.s32.totalorder %s40, 1
      %p152 = por %p150, %p151
      %p154 = scmp.ne.s32.totalorder %s139, %s153
      %p155 = scmp.eq.s32.totalorder %s40, 0
      %p156 = por %p154, %p155
      %s158 = sadd.s32 %s157, 1
      %p161 = scmp.eq.s32.totalorder %s34, 1
      %p162 = scmp.ne.s32.totalorder %s157, %s159
      %p163 = scmp.eq.s32.totalorder %s34, 0
      %p164 = por %p162, %p163
      %p165 = scmp.ne.s32.totalorder %s157, %s159
      %p166 = scmp.eq.s32.totalorder %s39, 1
      %p167 = por %p165, %p166
      %p168 = scmp.ne.s32.totalorder %s159, %s160
      %p169 = scmp.eq.s32.totalorder %s39, 0
      %p170 = por %p168, %p169
      %p171 = scmp.ne.s32.totalorder %s159, %s160
      %p172 = scmp.eq.s32.totalorder %s40, 1
      %p173 = por %p171, %p172
      %p175 = scmp.ne.s32.totalorder %s160, %s174
      %p176 = scmp.eq.s32.totalorder %s40, 0
      %p177 = por %p175, %p176
      %s179 = sadd.s32 %s178, 1
      %p182 = scmp.eq.s32.totalorder %s34, 1
      %p183 = scmp.ne.s32.totalorder %s178, %s180
      %p184 = scmp.eq.s32.totalorder %s34, 0
      %p185 = por %p183, %p184
      %p186 = scmp.ne.s32.totalorder %s178, %s180
      %p187 = scmp.eq.s32.totalorder %s39, 1
      %p188 = por %p186, %p187
      %p189 = scmp.ne.s32.totalorder %s180, %s181
      %p190 = scmp.eq.s32.totalorder %s39, 0
      %p191 = por %p189, %p190
      %p192 = scmp.ne.s32.totalorder %s180, %s181
      %p193 = scmp.eq.s32.totalorder %s40, 1
      %p194 = por %p192, %p193
      %p196 = scmp.ne.s32.totalorder %s181, %s195
      %p197 = scmp.eq.s32.totalorder %s40, 0
      %p198 = por %p196, %p197
      %s200 = sadd.s32 %s199, 1
      %p203 = scmp.eq.s32.totalorder %s34, 1
      %p204 = scmp.ne.s32.totalorder %s199, %s201
      %p205 = scmp.eq.s32.totalorder %s34, 0
      %p206 = por %p204, %p205
      %p207 = scmp.ne.s32.totalorder %s199, %s201
      %p208 = scmp.eq.s32.totalorder %s39, 1
      %p209 = por %p207, %p208
      %p210 = scmp.ne.s32.totalorder %s201, %s202
      %p211 = scmp.eq.s32.totalorder %s39, 0
      %p212 = por %p210, %p211
      %p213 = scmp.ne.s32.totalorder %s201, %s202
      %p214 = scmp.eq.s32.totalorder %s40, 1
      %p215 = por %p213, %p214
      %p217 = scmp.ne.s32.totalorder %s202, %s216
      %p218 = scmp.eq.s32.totalorder %s40, 0
      %p219 = por %p217, %p218
      %s221 = sadd.s32 %s220, 1
      %p224 = scmp.eq.s32.totalorder %s34, 1
      %p225 = scmp.ne.s32.totalorder %s220, %s222
      %p226 = scmp.eq.s32.totalorder %s34, 0
      %p227 = por %p225, %p226
      %p228 = scmp.ne.s32.totalorder %s220, %s222
      %p229 = scmp.eq.s32.totalorder %s39, 1
      %p230 = por %p228, %p229
      %p231 = scmp.ne.s32.totalorder %s222, %s223
      %p232 = scmp.eq.s32.totalorder %s39, 0
      %p233 = por %p231, %p232
      %p234 = scmp.ne.s32.totalorder %s222, %s223
      %p235 = scmp.eq.s32.totalorder %s40, 1
      %p236 = por %p234, %p235
      %p238 = scmp.ne.s32.totalorder %s223, %s237
      %p239 = scmp.eq.s32.totalorder %s40, 0
      %p240 = por %p238, %p239
      %s242 = sadd.s32 %s241, 1
      %p245 = scmp.eq.s32.totalorder %s34, 1
      %p246 = scmp.ne.s32.totalorder %s241, %s243
      %p247 = scmp.eq.s32.totalorder %s34, 0
      %p248 = por %p246, %p247
      %p249 = scmp.ne.s32.totalorder %s241, %s243
      %p250 = scmp.eq.s32.totalorder %s39, 1
      %p251 = por %p249, %p250
      %p252 = scmp.ne.s32.totalorder %s243, %s244
      %p253 = scmp.eq.s32.totalorder %s39, 0
      %p254 = por %p252, %p253
      %p255 = scmp.ne.s32.totalorder %s243, %s244
      %p256 = scmp.eq.s32.totalorder %s40, 1
      %p257 = por %p255, %p256
      %p259 = scmp.ne.s32.totalorder %s244, %s258
      %p260 = scmp.eq.s32.totalorder %s40, 0
      %p261 = por %p259, %p260
      %s263 = sadd.s32 %s262, 1
      %p266 = scmp.eq.s32.totalorder %s34, 1
      %p267 = scmp.ne.s32.totalorder %s262, %s264
      %p268 = scmp.eq.s32.totalorder %s34, 0
      %p269 = por %p267, %p268
      %p270 = scmp.ne.s32.totalorder %s262, %s264
      %p271 = scmp.eq.s32.totalorder %s39, 1
      %p272 = por %p270, %p271
      %p273 = scmp.ne.s32.totalorder %s264, %s265
      %p274 = scmp.eq.s32.totalorder %s39, 0
      %p275 = por %p273, %p274
      %p276 = scmp.ne.s32.totalorder %s264, %s265
      %p277 = scmp.eq.s32.totalorder %s40, 1
      %p278 = por %p276, %p277
      %p280 = scmp.ne.s32.totalorder %s265, %s279
      %p281 = scmp.eq.s32.totalorder %s40, 0
      %p282 = por %p280, %p281
      %s283 = ssub.s32 %s34, %s41
      %p284 = scmp.eq.s32.totalorder %s283, 0
      %s286 = sadd.s32 %s285, 1
      %s287 = scalar_select %p284, %s285, %s286
      %p290 = pneg %p284
      %p291 = scmp.eq.s32.totalorder %s34, 1
      %p292 = por %p290, %p291
      %p293 = scmp.ne.s32.totalorder %s285, %s288
      %p294 = scmp.eq.s32.totalorder %s34, 0
      %p295 = por %p293, %p294
      %p296 = scmp.ne.s32.totalorder %s285, %s288
      %p297 = scmp.eq.s32.totalorder %s39, 1
      %p298 = por %p296, %p297
      %p299 = scmp.ne.s32.totalorder %s288, %s289
      %p300 = scmp.eq.s32.totalorder %s39, 0
      %p301 = por %p299, %p300
      %p302 = scmp.ne.s32.totalorder %s288, %s289
      %p303 = scmp.eq.s32.totalorder %s40, 1
      %p304 = por %p302, %p303
      %p306 = scmp.ne.s32.totalorder %s289, %s305
      %p307 = scmp.eq.s32.totalorder %s40, 0
      %p308 = por %p306, %p307
      %s309 = ssub.s32 %s34, %s41
      %p310 = scmp.eq.s32.totalorder %s309, 0
      %s312 = sadd.s32 %s311, 1
      %s313 = scalar_select %p310, %s311, %s312
      %p316 = pneg %p310
      %p317 = scmp.eq.s32.totalorder %s34, 1
      %p318 = por %p316, %p317
      %p319 = scmp.ne.s32.totalorder %s311, %s314
      %p320 = scmp.eq.s32.totalorder %s34, 0
      %p321 = por %p319, %p320
      %p322 = scmp.ne.s32.totalorder %s311, %s314
      %p323 = scmp.eq.s32.totalorder %s39, 1
      %p324 = por %p322, %p323
      %p325 = scmp.ne.s32.totalorder %s314, %s315
      %p326 = scmp.eq.s32.totalorder %s39, 0
      %p327 = por %p325, %p326
      %p328 = scmp.ne.s32.totalorder %s314, %s315
      %p329 = scmp.eq.s32.totalorder %s40, 1
      %p330 = por %p328, %p329
      %p332 = scmp.ne.s32.totalorder %s315, %s331
      %p333 = scmp.eq.s32.totalorder %s40, 0
      %p334 = por %p332, %p333
      %s335 = ssub.s32 %s34, %s41
      %p336 = scmp.eq.s32.totalorder %s335, 0
      %s338 = sadd.s32 %s337, 1
      %s339 = scalar_select %p336, %s337, %s338
      %p342 = pneg %p336
      %p343 = scmp.eq.s32.totalorder %s34, 1
      %p344 = por %p342, %p343
      %p345 = scmp.ne.s32.totalorder %s337, %s340
      %p346 = scmp.eq.s32.totalorder %s34, 0
      %p347 = por %p345, %p346
      %p348 = scmp.ne.s32.totalorder %s337, %s340
      %p349 = scmp.eq.s32.totalorder %s39, 1
      %p350 = por %p348, %p349
      %p351 = scmp.ne.s32.totalorder %s340, %s341
      %p352 = scmp.eq.s32.totalorder %s39, 0
      %p353 = por %p351, %p352
      %p354 = scmp.ne.s32.totalorder %s340, %s341
      %p355 = scmp.eq.s32.totalorder %s40, 1
      %p356 = por %p354, %p355
      %p358 = scmp.ne.s32.totalorder %s341, %s357
      %p359 = scmp.eq.s32.totalorder %s40, 0
      %p360 = por %p358, %p359
      %p361 = scmp.le.s32.totalorder 1, %s34
      %p362 = scmp.lt.s32.totalorder %s34, 3
      %p363 = pnand %p361, %p362
      %p364 = pneg %p363
      // Predicated region
      $region9: #{tpu_custom_call.1} parent=5 // pred_check
        _
      $region10: #{tpu_custom_call.1} parent=5 // pred_check_branch
        %366 = sbr.rel (%p363) target = $region12
      $region11: #{tpu_custom_call.1} parent=5 // pred_region
        %s367 = ssub.s32 %s34, 1
        // Predicated region
        $region13: #{tpu_custom_call.1} parent=11 // pred_check
          %p368 = pneg %p107
        $region14: #{tpu_custom_call.1} parent=11 // pred_check_branch
          %370 = sbr.rel (%p368) target = $region16
        $region15: #{tpu_custom_call.1} parent=11 // pred_region
          %s372 = ssub.s32 16384, 16384
          %373 = vsyncadd [#allocation7], %s372
          %s374 = sshll.u32 [#allocation8], 4
          %s375 = int_to_ptr.vmem [resolvable:$true] %s374
          %380 = dma.hbm_to_vmem [thread:$0]  %s2, 16384, %s375, [#allocation7], 512, 512, 32
        $region16: #{tpu_custom_call.1} parent=11 // pred_fallthru
          _
        // Predicated region
        $region17: #{tpu_custom_call.1} parent=11 // pred_check
          %p381 = pneg %p128
        $region18: #{tpu_custom_call.1} parent=11 // pred_check_branch
          %383 = sbr.rel (%p381) target = $region20
        $region19: #{tpu_custom_call.1} parent=11 // pred_region
          _
        $region20: #{tpu_custom_call.1} parent=11 // pred_fallthru
          _
        // Predicated region
        $region21: #{tpu_custom_call.1} parent=11 // pred_check
          %p384 = pneg %p149
        $region22: #{tpu_custom_call.1} parent=11 // pred_check_branch
          %386 = sbr.rel (%p384) target = $region24
        $region23: #{tpu_custom_call.1} parent=11 // pred_region
          %s388 = ssub.s32 4096, 4096
          %389 = vsyncadd [#allocation10], %s388
          %s390 = sshll.u32 [#allocation9], 4
          %s391 = int_to_ptr.vmem [resolvable:$true] %s390
          %396 = dma.hbm_to_vmem [thread:$0]  %s4, 4096, %s391, [#allocation10], 64, 64, 4
        $region24: #{tpu_custom_call.1} parent=11 // pred_fallthru
          _
        // Predicated region
        $region25: #{tpu_custom_call.1} parent=11 // pred_check
          %p397 = pneg %p170
        $region26: #{tpu_custom_call.1} parent=11 // pred_check_branch
          %399 = sbr.rel (%p397) target = $region28
        $region27: #{tpu_custom_call.1} parent=11 // pred_region
          _
        $region28: #{tpu_custom_call.1} parent=11 // pred_fallthru
          _
        // Predicated region
        $region29: #{tpu_custom_call.1} parent=11 // pred_check
          %p400 = pneg %p191
        $region30: #{tpu_custom_call.1} parent=11 // pred_check_branch
          %402 = sbr.rel (%p400) target = $region32
        $region31: #{tpu_custom_call.1} parent=11 // pred_region
          %s404 = ssub.s32 4096, 4096
          %405 = vsyncadd [#allocation10], %s404
          %s406 = sshll.u32 [#allocation11], 4
          %s407 = int_to_ptr.vmem [resolvable:$true] %s406
          %412 = dma.hbm_to_vmem [thread:$0]  %s6, 4096, %s407, [#allocation10], 64, 64, 4
        $region32: #{tpu_custom_call.1} parent=11 // pred_fallthru
          _
        // Predicated region
        $region33: #{tpu_custom_call.1} parent=11 // pred_check
          %p413 = pneg %p212
        $region34: #{tpu_custom_call.1} parent=11 // pred_check_branch
          %415 = sbr.rel (%p413) target = $region36
        $region35: #{tpu_custom_call.1} parent=11 // pred_region
          _
        $region36: #{tpu_custom_call.1} parent=11 // pred_fallthru
          _
        // Predicated region
        $region37: #{tpu_custom_call.1} parent=11 // pred_check
          %p416 = pneg %p233
        $region38: #{tpu_custom_call.1} parent=11 // pred_check_branch
          %418 = sbr.rel (%p416) target = $region40
        $region39: #{tpu_custom_call.1} parent=11 // pred_region
          _
        $region40: #{tpu_custom_call.1} parent=11 // pred_fallthru
          _
        // Predicated region
        $region41: #{tpu_custom_call.1} parent=11 // pred_check
          %p419 = pneg %p254
        $region42: #{tpu_custom_call.1} parent=11 // pred_check_branch
          %421 = sbr.rel (%p419) target = $region44
        $region43: #{tpu_custom_call.1} parent=11 // pred_region
          _
        $region44: #{tpu_custom_call.1} parent=11 // pred_fallthru
          _
        // Predicated region
        $region45: #{tpu_custom_call.1} parent=11 // pred_check
          %p422 = pneg %p275
        $region46: #{tpu_custom_call.1} parent=11 // pred_check_branch
          %424 = sbr.rel (%p422) target = $region48
        $region47: #{tpu_custom_call.1} parent=11 // pred_region
          %s426 = ssub.s32 16, 16
          %427 = vsyncadd [#allocation5], %s426
          %s429 = sshll.u32 %s10, 4
          %s430 = int_to_ptr.vmem [resolvable:$true] %s429
          %432 = dma.vmem_to_smem %s430, 16, [#allocation12], [#allocation5]
        $region48: #{tpu_custom_call.1} parent=11 // pred_fallthru
          _
      $region12: #{tpu_custom_call.1} parent=5 // pred_fallthru
        _
      %p433 = scmp.lt.s32.totalorder %s34, 2
      // Predicated region
      $region49: #{tpu_custom_call.1} parent=5 // pred_check
        %p434 = pneg %p433
      $region50: #{tpu_custom_call.1} parent=5 // pred_check_branch
        %436 = sbr.rel (%p434) target = $region52
      $region51: #{tpu_custom_call.1} parent=5 // pred_region
        // Predicated region
        $region53: #{tpu_custom_call.1} parent=51 // pred_check
          %p437 = pneg %p54
        $region54: #{tpu_custom_call.1} parent=51 // pred_check_branch
          %439 = sbr.rel (%p437) target = $region56
        $region55: #{tpu_custom_call.1} parent=51 // pred_region
          %s440 = sand.u32 %s44, 1
          %s441 = scalar_lea.sflag [#allocation3], %s440
          %s442 = sand.u32 %s44, 1
          %s443 = smul.addr %s442, 64
          %s444 = scalar_lea.vmem [#allocation2], %s443
          %s445 = smul.u32 16, %s34
          %s447 = ssub.s32 1024, 1024
          %448 = vsyncadd %s441, %s447
          %s449 = smul.addr %s445, 64
          %s450 = scalar_lea.hbm %s0, %s449
          %s451 = sshll.u32 %s444, 4
          %s452 = int_to_ptr.vmem [resolvable:$true] %s451
          %457 = dma.hbm_to_vmem [thread:$0]  %s450, 1024, %s452, %s441, 64, 64, 4
        $region56: #{tpu_custom_call.1} parent=51 // pred_fallthru
          _
        // Predicated region
        $region57: #{tpu_custom_call.1} parent=51 // pred_check
          %p458 = pneg %p80
        $region58: #{tpu_custom_call.1} parent=51 // pred_check_branch
          %460 = sbr.rel (%p458) target = $region60
        $region59: #{tpu_custom_call.1} parent=51 // pred_region
          %s461 = sand.u32 %s34, 1
          %s462 = scalar_lea.sflag [#allocation7], %s461
          %s463 = sand.u32 %s70, 1
          %s464 = smul.addr %s463, 64
          %s465 = scalar_lea.vmem [#allocation6], %s464
          %s466 = smul.u32 16, %s34
          %s468 = ssub.s32 1024, 1024
          %469 = vsyncadd %s462, %s468
          %s470 = smul.addr %s466, 64
          %s471 = scalar_lea.hbm %s1, %s470
          %s472 = sshll.u32 %s465, 4
          %s473 = int_to_ptr.vmem [resolvable:$true] %s472
          %478 = dma.hbm_to_vmem [thread:$0]  %s471, 1024, %s473, %s462, 64, 64, 4
        $region60: #{tpu_custom_call.1} parent=51 // pred_fallthru
          _
      $region52: #{tpu_custom_call.1} parent=5 // pred_fallthru
        _
      %p479 = scmp.le.s32.totalorder 1, %s34
      %p480 = scmp.lt.s32.totalorder %s34, 3
      %p481 = pnand %p479, %p480
      %p482 = pneg %p481
      // Predicated region
      $region61: #{tpu_custom_call.1} parent=5 // pred_check
        _
      $region62: #{tpu_custom_call.1} parent=5 // pred_check_branch
        %484 = sbr.rel (%p481) target = $region64
      $region63: #{tpu_custom_call.1} parent=5 // pred_region
        %s485 = ssub.s32 %s34, 1
        %s486 = sand.u32 %s47, 1
        %s487 = scalar_lea.sflag [#allocation3], %s486
        %s488 = sand.u32 %s47, 1
        %s489 = smul.addr %s488, 64
        %s490 = scalar_lea.vmem [#allocation2], %s489
        // Predicated region
        $region65: #{tpu_custom_call.1} parent=63 // pred_check
          %p491 = pneg %p60
        $region66: #{tpu_custom_call.1} parent=63 // pred_check_branch
          %493 = sbr.rel (%p491) target = $region68
        $region67: #{tpu_custom_call.1} parent=63 // pred_region
          %494 = dma.done %s487, 1024
        $region68: #{tpu_custom_call.1} parent=63 // pred_fallthru
          _
        %s495 = sand.u32 %s39, 1
        %s496 = scalar_lea.sflag [#allocation7], %s495
        %s497 = sand.u32 %s73, 1
        %s498 = smul.addr %s497, 64
        %s499 = scalar_lea.vmem [#allocation6], %s498
        // Predicated region
        $region69: #{tpu_custom_call.1} parent=63 // pred_check
          %p500 = pneg %p86
        $region70: #{tpu_custom_call.1} parent=63 // pred_check_branch
          %502 = sbr.rel (%p500) target = $region72
        $region71: #{tpu_custom_call.1} parent=63 // pred_region
          %503 = dma.done %s496, 1024
        $region72: #{tpu_custom_call.1} parent=63 // pred_fallthru
          _
        // Predicated region
        $region73: #{tpu_custom_call.1} parent=63 // pred_check
          %p504 = pneg %p107
        $region74: #{tpu_custom_call.1} parent=63 // pred_check_branch
          %506 = sbr.rel (%p504) target = $region76
        $region75: #{tpu_custom_call.1} parent=63 // pred_region
          %507 = dma.done [#allocation7], 16384
        $region76: #{tpu_custom_call.1} parent=63 // pred_fallthru
          _
        // Predicated region
        $region77: #{tpu_custom_call.1} parent=63 // pred_check
          %p508 = pneg %p149
        $region78: #{tpu_custom_call.1} parent=63 // pred_check_branch
          %510 = sbr.rel (%p508) target = $region80
        $region79: #{tpu_custom_call.1} parent=63 // pred_region
          %511 = dma.done [#allocation10], 4096
        $region80: #{tpu_custom_call.1} parent=63 // pred_fallthru
          _
        // Predicated region
        $region81: #{tpu_custom_call.1} parent=63 // pred_check
          %p512 = pneg %p191
        $region82: #{tpu_custom_call.1} parent=63 // pred_check_branch
          %514 = sbr.rel (%p512) target = $region84
        $region83: #{tpu_custom_call.1} parent=63 // pred_region
          %515 = dma.done [#allocation10], 4096
        $region84: #{tpu_custom_call.1} parent=63 // pred_fallthru
          _
        // Predicated region
        $region85: #{tpu_custom_call.1} parent=63 // pred_check
          %p516 = pneg %p275
        $region86: #{tpu_custom_call.1} parent=63 // pred_check_branch
          %518 = sbr.rel (%p516) target = $region88
        $region87: #{tpu_custom_call.1} parent=63 // pred_region
          %519 = dma.done [#allocation5], 16
        $region88: #{tpu_custom_call.1} parent=63 // pred_fallthru
          _
        %520 = sfence
        %s521 = sand.u32 %s47, 1
        %s522 = scalar_lea.sflag [#allocation3], %s521
        %s523 = sand.u32 %s47, 1
        %s524 = smul.addr %s523, 64
        %s525 = scalar_lea.vmem [#allocation2], %s524
        %p526 = pneg %p60
        %p527 = pneg %p57
        %s528 = sand.u32 %s39, 1
        %s529 = scalar_lea.sflag [#allocation7], %s528
        %s530 = sand.u32 %s73, 1
        %s531 = smul.addr %s530, 64
        %s532 = scalar_lea.vmem [#allocation6], %s531
        %p533 = pneg %p86
        %p534 = pneg %p83
        %p535 = pneg %p107
        %p536 = pneg %p104
        %p537 = pneg %p128
        %p538 = pneg %p125
        %p539 = pneg %p149
        %p540 = pneg %p146
        %p541 = pneg %p170
        %p542 = pneg %p167
        %p543 = pneg %p191
        %p544 = pneg %p188
        %p545 = pneg %p212
        %p546 = pneg %p209
        %p547 = pneg %p233
        %p548 = pneg %p230
        %p549 = pneg %p254
        %p550 = pneg %p251
        %p551 = pneg %p275
        %p552 = pneg %p272
        %p553 = pneg %p301
        %p554 = pneg %p298
        %s555 = sand.u32 %s288, 1
        %s556 = scalar_lea.sflag [#allocation4], %s555
        %s557 = sand.u32 %s288, 1
        %s558 = smul.addr %s557, 128
        %s559 = scalar_lea.vmem [#allocation13], %s558
        %p560 = pneg %p327
        %p561 = pneg %p324
        %s562 = sand.u32 %s39, 1
        %s563 = scalar_lea.sflag [#allocation15], %s562
        %s564 = sand.u32 %s314, 1
        %s565 = smul.addr %s564, 128
        %s566 = scalar_lea.vmem [#allocation14], %s565
        %p567 = pneg %p353
        %p568 = pneg %p350
        %s569 = sand.u32 %s39, 1
        %s570 = scalar_lea.sflag [#allocation15], %s569
        %s571 = sand.u32 %s340, 1
        %s572 = smul.addr %s571, 128
        %s573 = scalar_lea.vmem [#allocation16], %s572
        %s574 = smul.u32 16, %s39
        %s575 = smul.u32 16, %s39
        %s576 = smul.u32 16, %s39
        %s577 = smul.u32 16, %s39
        %s578 = smul.u32 16, %s39
        %v580 = vld [vmem:[%s490] sm:$0xf]
        %v581 = vld [vmem:[%s490 + $0x4] sm:$0xf]
        %v582 = vld [vmem:[%s490 + $0x8] sm:$0xf]
        %v583 = vld [vmem:[%s490 + $0xc] sm:$0xf]
        %v584 = vld [vmem:[%s490 + $0x10] sm:$0xf]
        %v585 = vld [vmem:[%s490 + $0x14] sm:$0xf]
        %v586 = vld [vmem:[%s490 + $0x18] sm:$0xf]
        %v587 = vld [vmem:[%s490 + $0x1c] sm:$0xf]
        %v588 = vld [vmem:[%s490 + $0x20] sm:$0xf]
        %v589 = vld [vmem:[%s490 + $0x24] sm:$0xf]
        %v590 = vld [vmem:[%s490 + $0x28] sm:$0xf]
        %v591 = vld [vmem:[%s490 + $0x2c] sm:$0xf]
        %v592 = vld [vmem:[%s490 + $0x30] sm:$0xf]
        %v593 = vld [vmem:[%s490 + $0x34] sm:$0xf]
        %v594 = vld [vmem:[%s490 + $0x38] sm:$0xf]
        %v595 = vld [vmem:[%s490 + $0x3c] sm:$0xf]
        %v596 = vld [vmem:[%s499] sm:$0xf]
        %v597 = vld [vmem:[%s499 + $0x4] sm:$0xf]
        %v598 = vld [vmem:[%s499 + $0x8] sm:$0xf]
        %v599 = vld [vmem:[%s499 + $0xc] sm:$0xf]
        %v600 = vld [vmem:[%s499 + $0x10] sm:$0xf]
        %v601 = vld [vmem:[%s499 + $0x14] sm:$0xf]
        %v602 = vld [vmem:[%s499 + $0x18] sm:$0xf]
        %v603 = vld [vmem:[%s499 + $0x1c] sm:$0xf]
        %v604 = vld [vmem:[%s499 + $0x20] sm:$0xf]
        %v605 = vld [vmem:[%s499 + $0x24] sm:$0xf]
        %v606 = vld [vmem:[%s499 + $0x28] sm:$0xf]
        %v607 = vld [vmem:[%s499 + $0x2c] sm:$0xf]
        %v608 = vld [vmem:[%s499 + $0x30] sm:$0xf]
        %v609 = vld [vmem:[%s499 + $0x34] sm:$0xf]
        %v610 = vld [vmem:[%s499 + $0x38] sm:$0xf]
        %v611 = vld [vmem:[%s499 + $0x3c] sm:$0xf]
        %v628 = vunpack.c.l.b16 %v580
        %v629 = vunpack.c.l.b16 %v581
        %v630 = vunpack.c.l.b16 %v582
        %v631 = vunpack.c.l.b16 %v583
        %v632 = vunpack.c.l.b16 %v584
        %v633 = vunpack.c.l.b16 %v585
        %v634 = vunpack.c.l.b16 %v586
        %v635 = vunpack.c.l.b16 %v587
        %v636 = vunpack.c.l.b16 %v588
        %v637 = vunpack.c.l.b16 %v589
        %v638 = vunpack.c.l.b16 %v590
        %v639 = vunpack.c.l.b16 %v591
        %v640 = vunpack.c.l.b16 %v592
        %v641 = vunpack.c.l.b16 %v593
        %v642 = vunpack.c.l.b16 %v594
        %v643 = vunpack.c.l.b16 %v595
        %v644 = vpack.c.b16 %v629, %v628
        %v645 = vpack.c.b16 %v631, %v630
        %v646 = vpack.c.b16 %v633, %v632
        %v647 = vpack.c.b16 %v635, %v634
        %v648 = vpack.c.b16 %v637, %v636
        %v649 = vpack.c.b16 %v639, %v638
        %v650 = vpack.c.b16 %v641, %v640
        %v651 = vpack.c.b16 %v643, %v642
        %v676 = vunpack.c.l.b16 %v596
        %v677 = vunpack.c.l.b16 %v597
        %v678 = vunpack.c.l.b16 %v598
        %v679 = vunpack.c.l.b16 %v599
        %v680 = vunpack.c.l.b16 %v600
        %v681 = vunpack.c.l.b16 %v601
        %v682 = vunpack.c.l.b16 %v602
        %v683 = vunpack.c.l.b16 %v603
        %v684 = vunpack.c.l.b16 %v604
        %v685 = vunpack.c.l.b16 %v605
        %v686 = vunpack.c.l.b16 %v606
        %v687 = vunpack.c.l.b16 %v607
        %v688 = vunpack.c.l.b16 %v608
        %v689 = vunpack.c.l.b16 %v609
        %v690 = vunpack.c.l.b16 %v610
        %v691 = vunpack.c.l.b16 %v611
        %v692 = vpack.c.b16 %v677, %v676
        %v693 = vpack.c.b16 %v679, %v678
        %v694 = vpack.c.b16 %v681, %v680
        %v695 = vpack.c.b16 %v683, %v682
        %v696 = vpack.c.b16 %v685, %v684
        %v697 = vpack.c.b16 %v687, %v686
        %v698 = vpack.c.b16 %v689, %v688
        %v699 = vpack.c.b16 %v691, %v690
        %v708 = vld [vmem:[#allocation8] sm:$0xff]
        %v709 = vld [vmem:[#allocation8 + $0x8] sm:$0xff]
        %v710 = vld [vmem:[#allocation8 + $0x10] sm:$0xff]
        %v711 = vld [vmem:[#allocation8 + $0x18] sm:$0xff]
        %v712 = vld [vmem:[#allocation8 + $0x20] sm:$0xff]
        %v713 = vld [vmem:[#allocation8 + $0x28] sm:$0xff]
        %v714 = vld [vmem:[#allocation8 + $0x30] sm:$0xff]
        %v715 = vld [vmem:[#allocation8 + $0x38] sm:$0xff]
        %v716 = vld [vmem:[#allocation8 + $0x40] sm:$0xff]
        %v717 = vld [vmem:[#allocation8 + $0x48] sm:$0xff]
        %v718 = vld [vmem:[#allocation8 + $0x50] sm:$0xff]
        %v719 = vld [vmem:[#allocation8 + $0x58] sm:$0xff]
        %v720 = vld [vmem:[#allocation8 + $0x60] sm:$0xff]
        %v721 = vld [vmem:[#allocation8 + $0x68] sm:$0xff]
        %v722 = vld [vmem:[#allocation8 + $0x70] sm:$0xff]
        %v723 = vld [vmem:[#allocation8 + $0x78] sm:$0xff]
        %v724 = vld [vmem:[#allocation8 + $0x80] sm:$0xff]
        %v725 = vld [vmem:[#allocation8 + $0x88] sm:$0xff]
        %v726 = vld [vmem:[#allocation8 + $0x90] sm:$0xff]
        %v727 = vld [vmem:[#allocation8 + $0x98] sm:$0xff]
        %v728 = vld [vmem:[#allocation8 + $0xa0] sm:$0xff]
        %v729 = vld [vmem:[#allocation8 + $0xa8] sm:$0xff]
        %v730 = vld [vmem:[#allocation8 + $0xb0] sm:$0xff]
        %v731 = vld [vmem:[#allocation8 + $0xb8] sm:$0xff]
        %v732 = vld [vmem:[#allocation8 + $0xc0] sm:$0xff]
        %v733 = vld [vmem:[#allocation8 + $0xc8] sm:$0xff]
        %v734 = vld [vmem:[#allocation8 + $0xd0] sm:$0xff]
        %v735 = vld [vmem:[#allocation8 + $0xd8] sm:$0xff]
        %v736 = vld [vmem:[#allocation8 + $0xe0] sm:$0xff]
        %v737 = vld [vmem:[#allocation8 + $0xe8] sm:$0xff]
        %v738 = vld [vmem:[#allocation8 + $0xf0] sm:$0xff]
        %v739 = vld [vmem:[#allocation8 + $0xf8] sm:$0xff]
        %v740 = vld [vmem:[#allocation8 + $0x100] sm:$0xff]
        %v741 = vld [vmem:[#allocation8 + $0x108] sm:$0xff]
        %v742 = vld [vmem:[#allocation8 + $0x110] sm:$0xff]
        %v743 = vld [vmem:[#allocation8 + $0x118] sm:$0xff]
        %v744 = vld [vmem:[#allocation8 + $0x120] sm:$0xff]
        %v745 = vld [vmem:[#allocation8 + $0x128] sm:$0xff]
        %v746 = vld [vmem:[#allocation8 + $0x130] sm:$0xff]
        %v747 = vld [vmem:[#allocation8 + $0x138] sm:$0xff]
        %v748 = vld [vmem:[#allocation8 + $0x140] sm:$0xff]
        %v749 = vld [vmem:[#allocation8 + $0x148] sm:$0xff]
        %v750 = vld [vmem:[#allocation8 + $0x150] sm:$0xff]
        %v751 = vld [vmem:[#allocation8 + $0x158] sm:$0xff]
        %v752 = vld [vmem:[#allocation8 + $0x160] sm:$0xff]
        %v753 = vld [vmem:[#allocation8 + $0x168] sm:$0xff]
        %v754 = vld [vmem:[#allocation8 + $0x170] sm:$0xff]
        %v755 = vld [vmem:[#allocation8 + $0x178] sm:$0xff]
        %v756 = vld [vmem:[#allocation8 + $0x180] sm:$0xff]
        %v757 = vld [vmem:[#allocation8 + $0x188] sm:$0xff]
        %v758 = vld [vmem:[#allocation8 + $0x190] sm:$0xff]
        %v759 = vld [vmem:[#allocation8 + $0x198] sm:$0xff]
        %v760 = vld [vmem:[#allocation8 + $0x1a0] sm:$0xff]
        %v761 = vld [vmem:[#allocation8 + $0x1a8] sm:$0xff]
        %v762 = vld [vmem:[#allocation8 + $0x1b0] sm:$0xff]
        %v763 = vld [vmem:[#allocation8 + $0x1b8] sm:$0xff]
        %v764 = vld [vmem:[#allocation8 + $0x1c0] sm:$0xff]
        %v765 = vld [vmem:[#allocation8 + $0x1c8] sm:$0xff]
        %v766 = vld [vmem:[#allocation8 + $0x1d0] sm:$0xff]
        %v767 = vld [vmem:[#allocation8 + $0x1d8] sm:$0xff]
        %v768 = vld [vmem:[#allocation8 + $0x1e0] sm:$0xff]
        %v769 = vld [vmem:[#allocation8 + $0x1e8] sm:$0xff]
        %v770 = vld [vmem:[#allocation8 + $0x1f0] sm:$0xff]
        %v771 = vld [vmem:[#allocation8 + $0x1f8] sm:$0xff]
        %v772 = vld [vmem:[#allocation8 + $0x200] sm:$0xff]
        %v773 = vld [vmem:[#allocation8 + $0x208] sm:$0xff]
        %v774 = vld [vmem:[#allocation8 + $0x210] sm:$0xff]
        %v775 = vld [vmem:[#allocation8 + $0x218] sm:$0xff]
        %v776 = vld [vmem:[#allocation8 + $0x220] sm:$0xff]
        %v777 = vld [vmem:[#allocation8 + $0x228] sm:$0xff]
        %v778 = vld [vmem:[#allocation8 + $0x230] sm:$0xff]
        %v779 = vld [vmem:[#allocation8 + $0x238] sm:$0xff]
        %v780 = vld [vmem:[#allocation8 + $0x240] sm:$0xff]
        %v781 = vld [vmem:[#allocation8 + $0x248] sm:$0xff]
        %v782 = vld [vmem:[#allocation8 + $0x250] sm:$0xff]
        %v783 = vld [vmem:[#allocation8 + $0x258] sm:$0xff]
        %v784 = vld [vmem:[#allocation8 + $0x260] sm:$0xff]
        %v785 = vld [vmem:[#allocation8 + $0x268] sm:$0xff]
        %v786 = vld [vmem:[#allocation8 + $0x270] sm:$0xff]
        %v787 = vld [vmem:[#allocation8 + $0x278] sm:$0xff]
        %v788 = vld [vmem:[#allocation8 + $0x280] sm:$0xff]
        %v789 = vld [vmem:[#allocation8 + $0x288] sm:$0xff]
        %v790 = vld [vmem:[#allocation8 + $0x290] sm:$0xff]
        %v791 = vld [vmem:[#allocation8 + $0x298] sm:$0xff]
        %v792 = vld [vmem:[#allocation8 + $0x2a0] sm:$0xff]
        %v793 = vld [vmem:[#allocation8 + $0x2a8] sm:$0xff]
        %v794 = vld [vmem:[#allocation8 + $0x2b0] sm:$0xff]
        %v795 = vld [vmem:[#allocation8 + $0x2b8] sm:$0xff]
        %v796 = vld [vmem:[#allocation8 + $0x2c0] sm:$0xff]
        %v797 = vld [vmem:[#allocation8 + $0x2c8] sm:$0xff]
        %v798 = vld [vmem:[#allocation8 + $0x2d0] sm:$0xff]
        %v799 = vld [vmem:[#allocation8 + $0x2d8] sm:$0xff]
        %v800 = vld [vmem:[#allocation8 + $0x2e0] sm:$0xff]
        %v801 = vld [vmem:[#allocation8 + $0x2e8] sm:$0xff]
        %v802 = vld [vmem:[#allocation8 + $0x2f0] sm:$0xff]
        %v803 = vld [vmem:[#allocation8 + $0x2f8] sm:$0xff]
        %v804 = vld [vmem:[#allocation8 + $0x300] sm:$0xff]
        %v805 = vld [vmem:[#allocation8 + $0x308] sm:$0xff]
        %v806 = vld [vmem:[#allocation8 + $0x310] sm:$0xff]
        %v807 = vld [vmem:[#allocation8 + $0x318] sm:$0xff]
        %v808 = vld [vmem:[#allocation8 + $0x320] sm:$0xff]
        %v809 = vld [vmem:[#allocation8 + $0x328] sm:$0xff]
        %v810 = vld [vmem:[#allocation8 + $0x330] sm:$0xff]
        %v811 = vld [vmem:[#allocation8 + $0x338] sm:$0xff]
        %v812 = vld [vmem:[#allocation8 + $0x340] sm:$0xff]
        %v813 = vld [vmem:[#allocation8 + $0x348] sm:$0xff]
        %v814 = vld [vmem:[#allocation8 + $0x350] sm:$0xff]
        %v815 = vld [vmem:[#allocation8 + $0x358] sm:$0xff]
        %v816 = vld [vmem:[#allocation8 + $0x360] sm:$0xff]
        %v817 = vld [vmem:[#allocation8 + $0x368] sm:$0xff]
        %v818 = vld [vmem:[#allocation8 + $0x370] sm:$0xff]
        %v819 = vld [vmem:[#allocation8 + $0x378] sm:$0xff]
        %v820 = vld [vmem:[#allocation8 + $0x380] sm:$0xff]
        %v821 = vld [vmem:[#allocation8 + $0x388] sm:$0xff]
        %v822 = vld [vmem:[#allocation8 + $0x390] sm:$0xff]
        %v823 = vld [vmem:[#allocation8 + $0x398] sm:$0xff]
        %v824 = vld [vmem:[#allocation8 + $0x3a0] sm:$0xff]
        %v825 = vld [vmem:[#allocation8 + $0x3a8] sm:$0xff]
        %v826 = vld [vmem:[#allocation8 + $0x3b0] sm:$0xff]
        %v827 = vld [vmem:[#allocation8 + $0x3b8] sm:$0xff]
        %v828 = vld [vmem:[#allocation8 + $0x3c0] sm:$0xff]
        %v829 = vld [vmem:[#allocation8 + $0x3c8] sm:$0xff]
        %v830 = vld [vmem:[#allocation8 + $0x3d0] sm:$0xff]
        %v831 = vld [vmem:[#allocation8 + $0x3d8] sm:$0xff]
        %v832 = vld [vmem:[#allocation8 + $0x3e0] sm:$0xff]
        %v833 = vld [vmem:[#allocation8 + $0x3e8] sm:$0xff]
        %v834 = vld [vmem:[#allocation8 + $0x3f0] sm:$0xff]
        %v835 = vld [vmem:[#allocation8 + $0x3f8] sm:$0xff]
        %v836 = vld [vmem:[%s3] sm:$0xff]
        %v838 = vlaneseq
        %v839 = vshrl.u32 %v838, 7
        %v840 = vsub.s32 0, %v839
        %v841 = vrot.slane %v836, %v840
        %v842 = vlaneseq
        %v843 = vshrl.u32 %v842, 7
        %v844 = vsub.s32 1, %v843
        %v845 = vrot.slane %v836, %v844
        %v846 = vlaneseq
        %v847 = vshrl.u32 %v846, 7
        %v848 = vsub.s32 2, %v847
        %v849 = vrot.slane %v836, %v848
        %v850 = vlaneseq
        %v851 = vshrl.u32 %v850, 7
        %v852 = vsub.s32 3, %v851
        %v853 = vrot.slane %v836, %v852
        %v854 = vlaneseq
        %v855 = vshrl.u32 %v854, 7
        %v856 = vsub.s32 4, %v855
        %v857 = vrot.slane %v836, %v856
        %v858 = vlaneseq
        %v859 = vshrl.u32 %v858, 7
        %v860 = vsub.s32 5, %v859
        %v861 = vrot.slane %v836, %v860
        %v862 = vlaneseq
        %v863 = vshrl.u32 %v862, 7
        %v864 = vsub.s32 6, %v863
        %v865 = vrot.slane %v836, %v864
        %v866 = vlaneseq
        %v867 = vshrl.u32 %v866, 7
        %v868 = vsub.s32 7, %v867
        %v869 = vrot.slane %v836, %v868
        %v1006 = vunpack.c.l.b16 %v708
        %v1007 = vunpack.c.h.b16 %v708
        %v1008 = vunpack.c.l.b16 %v709
        %v1009 = vunpack.c.h.b16 %v709
        %v1010 = vunpack.c.l.b16 %v710
        %v1011 = vunpack.c.h.b16 %v710
        %v1012 = vunpack.c.l.b16 %v711
        %v1013 = vunpack.c.h.b16 %v711
        %v1014 = vunpack.c.l.b16 %v712
        %v1015 = vunpack.c.h.b16 %v712
        %v1016 = vunpack.c.l.b16 %v713
        %v1017 = vunpack.c.h.b16 %v713
        %v1018 = vunpack.c.l.b16 %v714
        %v1019 = vunpack.c.h.b16 %v714
        %v1020 = vunpack.c.l.b16 %v715
        %v1021 = vunpack.c.h.b16 %v715
        %v1022 = vunpack.c.l.b16 %v716
        %v1023 = vunpack.c.h.b16 %v716
        %v1024 = vunpack.c.l.b16 %v717
        %v1025 = vunpack.c.h.b16 %v717
        %v1026 = vunpack.c.l.b16 %v718
        %v1027 = vunpack.c.h.b16 %v718
        %v1028 = vunpack.c.l.b16 %v719
        %v1029 = vunpack.c.h.b16 %v719
        %v1030 = vunpack.c.l.b16 %v720
        %v1031 = vunpack.c.h.b16 %v720
        %v1032 = vunpack.c.l.b16 %v721
        %v1033 = vunpack.c.h.b16 %v721
        %v1034 = vunpack.c.l.b16 %v722
        %v1035 = vunpack.c.h.b16 %v722
        %v1036 = vunpack.c.l.b16 %v723
        %v1037 = vunpack.c.h.b16 %v723
        %v1038 = vunpack.c.l.b16 %v724
        %v1039 = vunpack.c.h.b16 %v724
        %v1040 = vunpack.c.l.b16 %v725
        %v1041 = vunpack.c.h.b16 %v725
        %v1042 = vunpack.c.l.b16 %v726
        %v1043 = vunpack.c.h.b16 %v726
        %v1044 = vunpack.c.l.b16 %v727
        %v1045 = vunpack.c.h.b16 %v727
        %v1046 = vunpack.c.l.b16 %v728
        %v1047 = vunpack.c.h.b16 %v728
        %v1048 = vunpack.c.l.b16 %v729
        %v1049 = vunpack.c.h.b16 %v729
        %v1050 = vunpack.c.l.b16 %v730
        %v1051 = vunpack.c.h.b16 %v730
        %v1052 = vunpack.c.l.b16 %v731
        %v1053 = vunpack.c.h.b16 %v731
        %v1054 = vunpack.c.l.b16 %v732
        %v1055 = vunpack.c.h.b16 %v732
        %v1056 = vunpack.c.l.b16 %v733
        %v1057 = vunpack.c.h.b16 %v733
        %v1058 = vunpack.c.l.b16 %v734
        %v1059 = vunpack.c.h.b16 %v734
        %v1060 = vunpack.c.l.b16 %v735
        %v1061 = vunpack.c.h.b16 %v735
        %v1062 = vunpack.c.l.b16 %v736
        %v1063 = vunpack.c.h.b16 %v736
        %v1064 = vunpack.c.l.b16 %v737
        %v1065 = vunpack.c.h.b16 %v737
        %v1066 = vunpack.c.l.b16 %v738
        %v1067 = vunpack.c.h.b16 %v738
        %v1068 = vunpack.c.l.b16 %v739
        %v1069 = vunpack.c.h.b16 %v739
        %v1070 = vunpack.c.l.b16 %v740
        %v1071 = vunpack.c.h.b16 %v740
        %v1072 = vunpack.c.l.b16 %v741
        %v1073 = vunpack.c.h.b16 %v741
        %v1074 = vunpack.c.l.b16 %v742
        %v1075 = vunpack.c.h.b16 %v742
        %v1076 = vunpack.c.l.b16 %v743
        %v1077 = vunpack.c.h.b16 %v743
        %v1078 = vunpack.c.l.b16 %v744
        %v1079 = vunpack.c.h.b16 %v744
        %v1080 = vunpack.c.l.b16 %v745
        %v1081 = vunpack.c.h.b16 %v745
        %v1082 = vunpack.c.l.b16 %v746
        %v1083 = vunpack.c.h.b16 %v746
        %v1084 = vunpack.c.l.b16 %v747
        %v1085 = vunpack.c.h.b16 %v747
        %v1086 = vunpack.c.l.b16 %v748
        %v1087 = vunpack.c.h.b16 %v748
        %v1088 = vunpack.c.l.b16 %v749
        %v1089 = vunpack.c.h.b16 %v749
        %v1090 = vunpack.c.l.b16 %v750
        %v1091 = vunpack.c.h.b16 %v750
        %v1092 = vunpack.c.l.b16 %v751
        %v1093 = vunpack.c.h.b16 %v751
        %v1094 = vunpack.c.l.b16 %v752
        %v1095 = vunpack.c.h.b16 %v752
        %v1096 = vunpack.c.l.b16 %v753
        %v1097 = vunpack.c.h.b16 %v753
        %v1098 = vunpack.c.l.b16 %v754
        %v1099 = vunpack.c.h.b16 %v754
        %v1100 = vunpack.c.l.b16 %v755
        %v1101 = vunpack.c.h.b16 %v755
        %v1102 = vunpack.c.l.b16 %v756
        %v1103 = vunpack.c.h.b16 %v756
        %v1104 = vunpack.c.l.b16 %v757
        %v1105 = vunpack.c.h.b16 %v757
        %v1106 = vunpack.c.l.b16 %v758
        %v1107 = vunpack.c.h.b16 %v758
        %v1108 = vunpack.c.l.b16 %v759
        %v1109 = vunpack.c.h.b16 %v759
        %v1110 = vunpack.c.l.b16 %v760
        %v1111 = vunpack.c.h.b16 %v760
        %v1112 = vunpack.c.l.b16 %v761
        %v1113 = vunpack.c.h.b16 %v761
        %v1114 = vunpack.c.l.b16 %v762
        %v1115 = vunpack.c.h.b16 %v762
        %v1116 = vunpack.c.l.b16 %v763
        %v1117 = vunpack.c.h.b16 %v763
        %v1118 = vunpack.c.l.b16 %v764
        %v1119 = vunpack.c.h.b16 %v764
        %v1120 = vunpack.c.l.b16 %v765
        %v1121 = vunpack.c.h.b16 %v765
        %v1122 = vunpack.c.l.b16 %v766
        %v1123 = vunpack.c.h.b16 %v766
        %v1124 = vunpack.c.l.b16 %v767
        %v1125 = vunpack.c.h.b16 %v767
        %v1126 = vunpack.c.l.b16 %v768
        %v1127 = vunpack.c.h.b16 %v768
        %v1128 = vunpack.c.l.b16 %v769
        %v1129 = vunpack.c.h.b16 %v769
        %v1130 = vunpack.c.l.b16 %v770
        %v1131 = vunpack.c.h.b16 %v770
        %v1132 = vunpack.c.l.b16 %v771
        %v1133 = vunpack.c.h.b16 %v771
        %v1134 = vunpack.c.l.b16 %v772
        %v1135 = vunpack.c.h.b16 %v772
        %v1136 = vunpack.c.l.b16 %v773
        %v1137 = vunpack.c.h.b16 %v773
        %v1138 = vunpack.c.l.b16 %v774
        %v1139 = vunpack.c.h.b16 %v774
        %v1140 = vunpack.c.l.b16 %v775
        %v1141 = vunpack.c.h.b16 %v775
        %v1142 = vunpack.c.l.b16 %v776
        %v1143 = vunpack.c.h.b16 %v776
        %v1144 = vunpack.c.l.b16 %v777
        %v1145 = vunpack.c.h.b16 %v777
        %v1146 = vunpack.c.l.b16 %v778
        %v1147 = vunpack.c.h.b16 %v778
        %v1148 = vunpack.c.l.b16 %v779
        %v1149 = vunpack.c.h.b16 %v779
        %v1150 = vunpack.c.l.b16 %v780
        %v1151 = vunpack.c.h.b16 %v780
        %v1152 = vunpack.c.l.b16 %v781
        %v1153 = vunpack.c.h.b16 %v781
        %v1154 = vunpack.c.l.b16 %v782
        %v1155 = vunpack.c.h.b16 %v782
        %v1156 = vunpack.c.l.b16 %v783
        %v1157 = vunpack.c.h.b16 %v783
        %v1158 = vunpack.c.l.b16 %v784
        %v1159 = vunpack.c.h.b16 %v784
        %v1160 = vunpack.c.l.b16 %v785
        %v1161 = vunpack.c.h.b16 %v785
        %v1162 = vunpack.c.l.b16 %v786
        %v1163 = vunpack.c.h.b16 %v786
        %v1164 = vunpack.c.l.b16 %v787
        %v1165 = vunpack.c.h.b16 %v787
        %v1166 = vunpack.c.l.b16 %v788
        %v1167 = vunpack.c.h.b16 %v788
        %v1168 = vunpack.c.l.b16 %v789
        %v1169 = vunpack.c.h.b16 %v789
        %v1170 = vunpack.c.l.b16 %v790
        %v1171 = vunpack.c.h.b16 %v790
        %v1172 = vunpack.c.l.b16 %v791
        %v1173 = vunpack.c.h.b16 %v791
        %v1174 = vunpack.c.l.b16 %v792
        %v1175 = vunpack.c.h.b16 %v792
        %v1176 = vunpack.c.l.b16 %v793
        %v1177 = vunpack.c.h.b16 %v793
        %v1178 = vunpack.c.l.b16 %v794
        %v1179 = vunpack.c.h.b16 %v794
        %v1180 = vunpack.c.l.b16 %v795
        %v1181 = vunpack.c.h.b16 %v795
        %v1182 = vunpack.c.l.b16 %v796
        %v1183 = vunpack.c.h.b16 %v796
        %v1184 = vunpack.c.l.b16 %v797
        %v1185 = vunpack.c.h.b16 %v797
        %v1186 = vunpack.c.l.b16 %v798
        %v1187 = vunpack.c.h.b16 %v798
        %v1188 = vunpack.c.l.b16 %v799
        %v1189 = vunpack.c.h.b16 %v799
        %v1190 = vunpack.c.l.b16 %v800
        %v1191 = vunpack.c.h.b16 %v800
        %v1192 = vunpack.c.l.b16 %v801
        %v1193 = vunpack.c.h.b16 %v801
        %v1194 = vunpack.c.l.b16 %v802
        %v1195 = vunpack.c.h.b16 %v802
        %v1196 = vunpack.c.l.b16 %v803
        %v1197 = vunpack.c.h.b16 %v803
        %v1198 = vunpack.c.l.b16 %v804
        %v1199 = vunpack.c.h.b16 %v804
        %v1200 = vunpack.c.l.b16 %v805
        %v1201 = vunpack.c.h.b16 %v805
        %v1202 = vunpack.c.l.b16 %v806
        %v1203 = vunpack.c.h.b16 %v806
        %v1204 = vunpack.c.l.b16 %v807
        %v1205 = vunpack.c.h.b16 %v807
        %v1206 = vunpack.c.l.b16 %v808
        %v1207 = vunpack.c.h.b16 %v808
        %v1208 = vunpack.c.l.b16 %v809
        %v1209 = vunpack.c.h.b16 %v809
        %v1210 = vunpack.c.l.b16 %v810
        %v1211 = vunpack.c.h.b16 %v810
        %v1212 = vunpack.c.l.b16 %v811
        %v1213 = vunpack.c.h.b16 %v811
        %v1214 = vunpack.c.l.b16 %v812
        %v1215 = vunpack.c.h.b16 %v812
        %v1216 = vunpack.c.l.b16 %v813
        %v1217 = vunpack.c.h.b16 %v813
        %v1218 = vunpack.c.l.b16 %v814
        %v1219 = vunpack.c.h.b16 %v814
        %v1220 = vunpack.c.l.b16 %v815
        %v1221 = vunpack.c.h.b16 %v815
        %v1222 = vunpack.c.l.b16 %v816
        %v1223 = vunpack.c.h.b16 %v816
        %v1224 = vunpack.c.l.b16 %v817
        %v1225 = vunpack.c.h.b16 %v817
        %v1226 = vunpack.c.l.b16 %v818
        %v1227 = vunpack.c.h.b16 %v818
        %v1228 = vunpack.c.l.b16 %v819
        %v1229 = vunpack.c.h.b16 %v819
        %v1230 = vunpack.c.l.b16 %v820
        %v1231 = vunpack.c.h.b16 %v820
        %v1232 = vunpack.c.l.b16 %v821
        %v1233 = vunpack.c.h.b16 %v821
        %v1234 = vunpack.c.l.b16 %v822
        %v1235 = vunpack.c.h.b16 %v822
        %v1236 = vunpack.c.l.b16 %v823
        %v1237 = vunpack.c.h.b16 %v823
        %v1238 = vunpack.c.l.b16 %v824
        %v1239 = vunpack.c.h.b16 %v824
        %v1240 = vunpack.c.l.b16 %v825
        %v1241 = vunpack.c.h.b16 %v825
        %v1242 = vunpack.c.l.b16 %v826
        %v1243 = vunpack.c.h.b16 %v826
        %v1244 = vunpack.c.l.b16 %v827
        %v1245 = vunpack.c.h.b16 %v827
        %v1246 = vunpack.c.l.b16 %v828
        %v1247 = vunpack.c.h.b16 %v828
        %v1248 = vunpack.c.l.b16 %v829
        %v1249 = vunpack.c.h.b16 %v829
        %v1250 = vunpack.c.l.b16 %v830
        %v1251 = vunpack.c.h.b16 %v830
        %v1252 = vunpack.c.l.b16 %v831
        %v1253 = vunpack.c.h.b16 %v831
        %v1254 = vunpack.c.l.b16 %v832
        %v1255 = vunpack.c.h.b16 %v832
        %v1256 = vunpack.c.l.b16 %v833
        %v1257 = vunpack.c.h.b16 %v833
        %v1258 = vunpack.c.l.b16 %v834
        %v1259 = vunpack.c.h.b16 %v834
        %v1260 = vunpack.c.l.b16 %v835
        %v1261 = vunpack.c.h.b16 %v835
        %v1262 = vpack.c.b16 %v1014, %v1006
        %v1263 = vpack.c.b16 %v1015, %v1007
        %v1264 = vpack.c.b16 %v1016, %v1008
        %v1265 = vpack.c.b16 %v1017, %v1009
        %v1266 = vpack.c.b16 %v1018, %v1010
        %v1267 = vpack.c.b16 %v1019, %v1011
        %v1268 = vpack.c.b16 %v1020, %v1012
        %v1269 = vpack.c.b16 %v1021, %v1013
        %v1270 = vpack.c.b16 %v1030, %v1022
        %v1271 = vpack.c.b16 %v1031, %v1023
        %v1272 = vpack.c.b16 %v1032, %v1024
        %v1273 = vpack.c.b16 %v1033, %v1025
        %v1274 = vpack.c.b16 %v1034, %v1026
        %v1275 = vpack.c.b16 %v1035, %v1027
        %v1276 = vpack.c.b16 %v1036, %v1028
        %v1277 = vpack.c.b16 %v1037, %v1029
        %v1278 = vpack.c.b16 %v1046, %v1038
        %v1279 = vpack.c.b16 %v1047, %v1039
        %v1280 = vpack.c.b16 %v1048, %v1040
        %v1281 = vpack.c.b16 %v1049, %v1041
        %v1282 = vpack.c.b16 %v1050, %v1042
        %v1283 = vpack.c.b16 %v1051, %v1043
        %v1284 = vpack.c.b16 %v1052, %v1044
        %v1285 = vpack.c.b16 %v1053, %v1045
        %v1286 = vpack.c.b16 %v1062, %v1054
        %v1287 = vpack.c.b16 %v1063, %v1055
        %v1288 = vpack.c.b16 %v1064, %v1056
        %v1289 = vpack.c.b16 %v1065, %v1057
        %v1290 = vpack.c.b16 %v1066, %v1058
        %v1291 = vpack.c.b16 %v1067, %v1059
        %v1292 = vpack.c.b16 %v1068, %v1060
        %v1293 = vpack.c.b16 %v1069, %v1061
        %v1294 = vpack.c.b16 %v1078, %v1070
        %v1295 = vpack.c.b16 %v1079, %v1071
        %v1296 = vpack.c.b16 %v1080, %v1072
        %v1297 = vpack.c.b16 %v1081, %v1073
        %v1298 = vpack.c.b16 %v1082, %v1074
        %v1299 = vpack.c.b16 %v1083, %v1075
        %v1300 = vpack.c.b16 %v1084, %v1076
        %v1301 = vpack.c.b16 %v1085, %v1077
        %v1302 = vpack.c.b16 %v1094, %v1086
        %v1303 = vpack.c.b16 %v1095, %v1087
        %v1304 = vpack.c.b16 %v1096, %v1088
        %v1305 = vpack.c.b16 %v1097, %v1089
        %v1306 = vpack.c.b16 %v1098, %v1090
        %v1307 = vpack.c.b16 %v1099, %v1091
        %v1308 = vpack.c.b16 %v1100, %v1092
        %v1309 = vpack.c.b16 %v1101, %v1093
        %v1310 = vpack.c.b16 %v1110, %v1102
        %v1311 = vpack.c.b16 %v1111, %v1103
        %v1312 = vpack.c.b16 %v1112, %v1104
        %v1313 = vpack.c.b16 %v1113, %v1105
        %v1314 = vpack.c.b16 %v1114, %v1106
        %v1315 = vpack.c.b16 %v1115, %v1107
        %v1316 = vpack.c.b16 %v1116, %v1108
        %v1317 = vpack.c.b16 %v1117, %v1109
        %v1318 = vpack.c.b16 %v1126, %v1118
        %v1319 = vpack.c.b16 %v1127, %v1119
        %v1320 = vpack.c.b16 %v1128, %v1120
        %v1321 = vpack.c.b16 %v1129, %v1121
        %v1322 = vpack.c.b16 %v1130, %v1122
        %v1323 = vpack.c.b16 %v1131, %v1123
        %v1324 = vpack.c.b16 %v1132, %v1124
        %v1325 = vpack.c.b16 %v1133, %v1125
        %v1326 = vpack.c.b16 %v1142, %v1134
        %v1327 = vpack.c.b16 %v1143, %v1135
        %v1328 = vpack.c.b16 %v1144, %v1136
        %v1329 = vpack.c.b16 %v1145, %v1137
        %v1330 = vpack.c.b16 %v1146, %v1138
        %v1331 = vpack.c.b16 %v1147, %v1139
        %v1332 = vpack.c.b16 %v1148, %v1140
        %v1333 = vpack.c.b16 %v1149, %v1141
        %v1334 = vpack.c.b16 %v1158, %v1150
        %v1335 = vpack.c.b16 %v1159, %v1151
        %v1336 = vpack.c.b16 %v1160, %v1152
        %v1337 = vpack.c.b16 %v1161, %v1153
        %v1338 = vpack.c.b16 %v1162, %v1154
        %v1339 = vpack.c.b16 %v1163, %v1155
        %v1340 = vpack.c.b16 %v1164, %v1156
        %v1341 = vpack.c.b16 %v1165, %v1157
        %v1342 = vpack.c.b16 %v1174, %v1166
        %v1343 = vpack.c.b16 %v1175, %v1167
        %v1344 = vpack.c.b16 %v1176, %v1168
        %v1345 = vpack.c.b16 %v1177, %v1169
        %v1346 = vpack.c.b16 %v1178, %v1170
        %v1347 = vpack.c.b16 %v1179, %v1171
        %v1348 = vpack.c.b16 %v1180, %v1172
        %v1349 = vpack.c.b16 %v1181, %v1173
        %v1350 = vpack.c.b16 %v1190, %v1182
        %v1351 = vpack.c.b16 %v1191, %v1183
        %v1352 = vpack.c.b16 %v1192, %v1184
        %v1353 = vpack.c.b16 %v1193, %v1185
        %v1354 = vpack.c.b16 %v1194, %v1186
        %v1355 = vpack.c.b16 %v1195, %v1187
        %v1356 = vpack.c.b16 %v1196, %v1188
        %v1357 = vpack.c.b16 %v1197, %v1189
        %v1358 = vpack.c.b16 %v1206, %v1198
        %v1359 = vpack.c.b16 %v1207, %v1199
        %v1360 = vpack.c.b16 %v1208, %v1200
        %v1361 = vpack.c.b16 %v1209, %v1201
        %v1362 = vpack.c.b16 %v1210, %v1202
        %v1363 = vpack.c.b16 %v1211, %v1203
        %v1364 = vpack.c.b16 %v1212, %v1204
        %v1365 = vpack.c.b16 %v1213, %v1205
        %v1366 = vpack.c.b16 %v1222, %v1214
        %v1367 = vpack.c.b16 %v1223, %v1215
        %v1368 = vpack.c.b16 %v1224, %v1216
        %v1369 = vpack.c.b16 %v1225, %v1217
        %v1370 = vpack.c.b16 %v1226, %v1218
        %v1371 = vpack.c.b16 %v1227, %v1219
        %v1372 = vpack.c.b16 %v1228, %v1220
        %v1373 = vpack.c.b16 %v1229, %v1221
        %v1374 = vpack.c.b16 %v1238, %v1230
        %v1375 = vpack.c.b16 %v1239, %v1231
        %v1376 = vpack.c.b16 %v1240, %v1232
        %v1377 = vpack.c.b16 %v1241, %v1233
        %v1378 = vpack.c.b16 %v1242, %v1234
        %v1379 = vpack.c.b16 %v1243, %v1235
        %v1380 = vpack.c.b16 %v1244, %v1236
        %v1381 = vpack.c.b16 %v1245, %v1237
        %v1382 = vpack.c.b16 %v1254, %v1246
        %v1383 = vpack.c.b16 %v1255, %v1247
        %v1384 = vpack.c.b16 %v1256, %v1248
        %v1385 = vpack.c.b16 %v1257, %v1249
        %v1386 = vpack.c.b16 %v1258, %v1250
        %v1387 = vpack.c.b16 %v1259, %v1251
        %v1388 = vpack.c.b16 %v1260, %v1252
        %v1389 = vpack.c.b16 %v1261, %v1253
        %1518 = vmatprep.subr.bf16.mxu0 %v1263
        %1519 = vmatpush1.bf16.msra.mxu0 %v1262
        %1520 = vmatprep.subr.bf16.mxu0 %v1271
        %1521 = vmatpush1.bf16.msra.mxu0 %v1270
        %1522 = vmatprep.subr.bf16.mxu0 %v1279
        %1523 = vmatpush1.bf16.msra.mxu0 %v1278
        %1524 = vmatprep.subr.bf16.mxu0 %v1287
        %1525 = vmatpush1.bf16.msra.mxu0 %v1286
        %1526 = vmatprep.subr.bf16.mxu0 %v1295
        %1527 = vmatpush1.bf16.msra.mxu0 %v1294
        %1528 = vmatprep.subr.bf16.mxu0 %v1303
        %1529 = vmatpush1.bf16.msra.mxu0 %v1302
        %1530 = vmatprep.subr.bf16.mxu0 %v1311
        %1531 = vmatpush1.bf16.msra.mxu0 %v1310
        %1532 = vmatprep.subr.bf16.mxu0 %v1319
        %1533 = vmatpush1.bf16.msra.mxu0 %v1318
        %1534 = vmatprep.subr.bf16.mxu0 %v1327
        %1535 = vmatpush1.bf16.msra.mxu0 %v1326
        %1536 = vmatprep.subr.bf16.mxu0 %v1335
        %1537 = vmatpush1.bf16.msra.mxu0 %v1334
        %1538 = vmatprep.subr.bf16.mxu0 %v1343
        %1539 = vmatpush1.bf16.msra.mxu0 %v1342
        %1540 = vmatprep.subr.bf16.mxu0 %v1351
        %1541 = vmatpush1.bf16.msra.mxu0 %v1350
        %1542 = vmatprep.subr.bf16.mxu0 %v1359
        %1543 = vmatpush1.bf16.msra.mxu0 %v1358
        %1544 = vmatprep.subr.bf16.mxu0 %v1367
        %1545 = vmatpush1.bf16.msra.mxu0 %v1366
        %1546 = vmatprep.subr.bf16.mxu0 %v1375
        %1547 = vmatpush1.bf16.msra.mxu0 %v1374
        %1548 = vmatprep.subr.bf16.mxu0 %v1383
        %1549 = vmatpush1.bf16.msra.mxu0 %v1382
        %1550 = vmatprep.mubr.bf16.mxu0 %v692
        %1551 = vmatmul.mubr.bf16.gmra.mrb[0].mxu0 %v644
        %v1552 = vpop.f32.mrb[0].mxu0
        %v1553 = vadd.f32 %v841, %v1552
        %v1554 = vpop.f32.mrb[0].mxu0
        %v1555 = vadd.f32 %v845, %v1554
        %v1556 = vpop.f32.mrb[0].mxu0
        %v1557 = vadd.f32 %v841, %v1556
        %v1558 = vpop.f32.mrb[0].mxu0
        %v1559 = vadd.f32 %v845, %v1558
        %1560 = vmatprep.mubr.bf16.mxu0 %v693
        %1561 = vmatmul.mubr.bf16.gmra.mrb[0].mxu0 %v645
        %v1562 = vpop.f32.mrb[0].mxu0
        %v1563 = vadd.f32 %v841, %v1562
        %v1564 = vpop.f32.mrb[0].mxu0
        %v1565 = vadd.f32 %v845, %v1564
        %v1566 = vpop.f32.mrb[0].mxu0
        %v1567 = vadd.f32 %v841, %v1566
        %v1568 = vpop.f32.mrb[0].mxu0
        %v1569 = vadd.f32 %v845, %v1568
        %1570 = vmatprep.mubr.bf16.mxu0 %v694
        %1571 = vmatmul.mubr.bf16.gmra.mrb[0].mxu0 %v646
        %v1572 = vpop.f32.mrb[0].mxu0
        %v1573 = vadd.f32 %v841, %v1572
        %v1574 = vpop.f32.mrb[0].mxu0
        %v1575 = vadd.f32 %v845, %v1574
        %v1576 = vpop.f32.mrb[0].mxu0
        %v1577 = vadd.f32 %v841, %v1576
        %v1578 = vpop.f32.mrb[0].mxu0
        %v1579 = vadd.f32 %v845, %v1578
        %1580 = vmatprep.mubr.bf16.mxu0 %v695
        %1581 = vmatmul.mubr.bf16.gmra.mrb[0].mxu0 %v647
        %v1582 = vpop.f32.mrb[0].mxu0
        %v1583 = vadd.f32 %v841, %v1582
        %v1584 = vpop.f32.mrb[0].mxu0
        %v1585 = vadd.f32 %v845, %v1584
        %v1586 = vpop.f32.mrb[0].mxu0
        %v1587 = vadd.f32 %v841, %v1586
        %v1588 = vpop.f32.mrb[0].mxu0
        %v1589 = vadd.f32 %v845, %v1588
        %1590 = vmatprep.mubr.bf16.mxu0 %v696
        %1591 = vmatmul.mubr.bf16.gmra.mrb[0].mxu0 %v648
        %v1592 = vpop.f32.mrb[0].mxu0
        %v1593 = vadd.f32 %v841, %v1592
        %v1594 = vpop.f32.mrb[0].mxu0
        %v1595 = vadd.f32 %v845, %v1594
        %v1596 = vpop.f32.mrb[0].mxu0
        %v1597 = vadd.f32 %v841, %v1596
        %v1598 = vpop.f32.mrb[0].mxu0
        %v1599 = vadd.f32 %v845, %v1598
        %1600 = vmatprep.mubr.bf16.mxu0 %v697
        %1601 = vmatmul.mubr.bf16.gmra.mrb[0].mxu0 %v649
        %v1602 = vpop.f32.mrb[0].mxu0
        %v1603 = vadd.f32 %v841, %v1602
        %v1604 = vpop.f32.mrb[0].mxu0
        %v1605 = vadd.f32 %v845, %v1604
        %v1606 = vpop.f32.mrb[0].mxu0
        %v1607 = vadd.f32 %v841, %v1606
        %v1608 = vpop.f32.mrb[0].mxu0
        %v1609 = vadd.f32 %v845, %v1608
        %1610 = vmatprep.mubr.bf16.mxu0 %v698
        %1611 = vmatmul.mubr.bf16.gmra.mrb[0].mxu0 %v650
        %v1612 = vpop.f32.mrb[0].mxu0
        %v1613 = vadd.f32 %v841, %v1612
        %v1614 = vpop.f32.mrb[0].mxu0
        %v1615 = vadd.f32 %v845, %v1614
        %v1616 = vpop.f32.mrb[0].mxu0
        %v1617 = vadd.f32 %v841, %v1616
        %v1618 = vpop.f32.mrb[0].mxu0
        %v1619 = vadd.f32 %v845, %v1618
        %1620 = vmatprep.mubr.bf16.mxu0 %v699
        %1621 = vmatmul.mubr.bf16.gmra.mrb[0].mxu0 %v651
        %v1622 = vpop.f32.mrb[0].mxu0
        %v1623 = vadd.f32 %v841, %v1622
        %v1624 = vpop.f32.mrb[0].mxu0
        %v1625 = vadd.f32 %v845, %v1624
        %v1626 = vpop.f32.mrb[0].mxu0
        %v1627 = vadd.f32 %v841, %v1626
        %v1628 = vpop.f32.mrb[0].mxu0
        %v1629 = vadd.f32 %v845, %v1628
        %1630 = vdwg.mxu0
        %1631 = vmatprep.subr.bf16.mxu0 %v1265
        %1632 = vmatpush1.bf16.msra.mxu0 %v1264
        %1633 = vmatprep.subr.bf16.mxu0 %v1273
        %1634 = vmatpush1.bf16.msra.mxu0 %v1272
        %1635 = vmatprep.subr.bf16.mxu0 %v1281
        %1636 = vmatpush1.bf16.msra.mxu0 %v1280
        %1637 = vmatprep.subr.bf16.mxu0 %v1289
        %1638 = vmatpush1.bf16.msra.mxu0 %v1288
        %1639 = vmatprep.subr.bf16.mxu0 %v1297
        %1640 = vmatpush1.bf16.msra.mxu0 %v1296
        %1641 = vmatprep.subr.bf16.mxu0 %v1305
        %1642 = vmatpush1.bf16.msra.mxu0 %v1304
        %1643 = vmatprep.subr.bf16.mxu0 %v1313
        %1644 = vmatpush1.bf16.msra.mxu0 %v1312
        %1645 = vmatprep.subr.bf16.mxu0 %v1321
        %1646 = vmatpush1.bf16.msra.mxu0 %v1320
        %1647 = vmatprep.subr.bf16.mxu0 %v1329
        %1648 = vmatpush1.bf16.msra.mxu0 %v1328
        %1649 = vmatprep.subr.bf16.mxu0 %v1337
        %1650 = vmatpush1.bf16.msra.mxu0 %v1336
        %1651 = vmatprep.subr.bf16.mxu0 %v1345
        %1652 = vmatpush1.bf16.msra.mxu0 %v1344
        %1653 = vmatprep.subr.bf16.mxu0 %v1353
        %1654 = vmatpush1.bf16.msra.mxu0 %v1352
        %1655 = vmatprep.subr.bf16.mxu0 %v1361
        %1656 = vmatpush1.bf16.msra.mxu0 %v1360
        %1657 = vmatprep.subr.bf16.mxu0 %v1369
        %1658 = vmatpush1.bf16.msra.mxu0 %v1368
        %1659 = vmatprep.subr.bf16.mxu0 %v1377
        %1660 = vmatpush1.bf16.msra.mxu0 %v1376
        %1661 = vmatprep.subr.bf16.mxu0 %v1385
        %1662 = vmatpush1.bf16.msra.mxu0 %v1384
        %1663 = vmatprep.mubr.bf16.mxu0 %v692
        %1664 = vmatmul.mubr.bf16.gmra.mrb[0].mxu0 %v644
        %v1665 = vpop.f32.mrb[0].mxu0
        %v1666 = vadd.f32 %v849, %v1665
        %v1667 = vpop.f32.mrb[0].mxu0
        %v1668 = vadd.f32 %v853, %v1667
        %v1669 = vpop.f32.mrb[0].mxu0
        %v1670 = vadd.f32 %v849, %v1669
        %v1671 = vpop.f32.mrb[0].mxu0
        %v1672 = vadd.f32 %v853, %v1671
        %1673 = vmatprep.mubr.bf16.mxu0 %v693
        %1674 = vmatmul.mubr.bf16.gmra.mrb[0].mxu0 %v645
        %v1675 = vpop.f32.mrb[0].mxu0
        %v1676 = vadd.f32 %v849, %v1675
        %v1677 = vpop.f32.mrb[0].mxu0
        %v1678 = vadd.f32 %v853, %v1677
        %v1679 = vpop.f32.mrb[0].mxu0
        %v1680 = vadd.f32 %v849, %v1679
        %v1681 = vpop.f32.mrb[0].mxu0
        %v1682 = vadd.f32 %v853, %v1681
        %1683 = vmatprep.mubr.bf16.mxu0 %v694
        %1684 = vmatmul.mubr.bf16.gmra.mrb[0].mxu0 %v646
        %v1685 = vpop.f32.mrb[0].mxu0
        %v1686 = vadd.f32 %v849, %v1685
        %v1687 = vpop.f32.mrb[0].mxu0
        %v1688 = vadd.f32 %v853, %v1687
        %v1689 = vpop.f32.mrb[0].mxu0
        %v1690 = vadd.f32 %v849, %v1689
        %v1691 = vpop.f32.mrb[0].mxu0
        %v1692 = vadd.f32 %v853, %v1691
        %1693 = vmatprep.mubr.bf16.mxu0 %v695
        %1694 = vmatmul.mubr.bf16.gmra.mrb[0].mxu0 %v647
        %v1695 = vpop.f32.mrb[0].mxu0
        %v1696 = vadd.f32 %v849, %v1695
        %v1697 = vpop.f32.mrb[0].mxu0
        %v1698 = vadd.f32 %v853, %v1697
        %v1699 = vpop.f32.mrb[0].mxu0
        %v1700 = vadd.f32 %v849, %v1699
        %v1701 = vpop.f32.mrb[0].mxu0
        %v1702 = vadd.f32 %v853, %v1701
        %1703 = vmatprep.mubr.bf16.mxu0 %v696
        %1704 = vmatmul.mubr.bf16.gmra.mrb[0].mxu0 %v648
        %v1705 = vpop.f32.mrb[0].mxu0
        %v1706 = vadd.f32 %v849, %v1705
        %v1707 = vpop.f32.mrb[0].mxu0
        %v1708 = vadd.f32 %v853, %v1707
        %v1709 = vpop.f32.mrb[0].mxu0
        %v1710 = vadd.f32 %v849, %v1709
        %v1711 = vpop.f32.mrb[0].mxu0
        %v1712 = vadd.f32 %v853, %v1711
        %1713 = vmatprep.mubr.bf16.mxu0 %v697
        %1714 = vmatmul.mubr.bf16.gmra.mrb[0].mxu0 %v649
        %v1715 = vpop.f32.mrb[0].mxu0
        %v1716 = vadd.f32 %v849, %v1715
        %v1717 = vpop.f32.mrb[0].mxu0
        %v1718 = vadd.f32 %v853, %v1717
        %v1719 = vpop.f32.mrb[0].mxu0
        %v1720 = vadd.f32 %v849, %v1719
        %v1721 = vpop.f32.mrb[0].mxu0
        %v1722 = vadd.f32 %v853, %v1721
        %1723 = vmatprep.mubr.bf16.mxu0 %v698
        %1724 = vmatmul.mubr.bf16.gmra.mrb[0].mxu0 %v650
        %v1725 = vpop.f32.mrb[0].mxu0
        %v1726 = vadd.f32 %v849, %v1725
        %v1727 = vpop.f32.mrb[0].mxu0
        %v1728 = vadd.f32 %v853, %v1727
        %v1729 = vpop.f32.mrb[0].mxu0
        %v1730 = vadd.f32 %v849, %v1729
        %v1731 = vpop.f32.mrb[0].mxu0
        %v1732 = vadd.f32 %v853, %v1731
        %1733 = vmatprep.mubr.bf16.mxu0 %v699
        %1734 = vmatmul.mubr.bf16.gmra.mrb[0].mxu0 %v651
        %v1735 = vpop.f32.mrb[0].mxu0
        %v1736 = vadd.f32 %v849, %v1735
        %v1737 = vpop.f32.mrb[0].mxu0
        %v1738 = vadd.f32 %v853, %v1737
        %v1739 = vpop.f32.mrb[0].mxu0
        %v1740 = vadd.f32 %v849, %v1739
        %v1741 = vpop.f32.mrb[0].mxu0
        %v1742 = vadd.f32 %v853, %v1741
        %1743 = vdwg.mxu0
        %1744 = vmatprep.subr.bf16.mxu0 %v1267
        %1745 = vmatpush1.bf16.msra.mxu0 %v1266
        %1746 = vmatprep.subr.bf16.mxu0 %v1275
        %1747 = vmatpush1.bf16.msra.mxu0 %v1274
        %1748 = vmatprep.subr.bf16.mxu0 %v1283
        %1749 = vmatpush1.bf16.msra.mxu0 %v1282
        %1750 = vmatprep.subr.bf16.mxu0 %v1291
        %1751 = vmatpush1.bf16.msra.mxu0 %v1290
        %1752 = vmatprep.subr.bf16.mxu0 %v1299
        %1753 = vmatpush1.bf16.msra.mxu0 %v1298
        %1754 = vmatprep.subr.bf16.mxu0 %v1307
        %1755 = vmatpush1.bf16.msra.mxu0 %v1306
        %1756 = vmatprep.subr.bf16.mxu0 %v1315
        %1757 = vmatpush1.bf16.msra.mxu0 %v1314
        %1758 = vmatprep.subr.bf16.mxu0 %v1323
        %1759 = vmatpush1.bf16.msra.mxu0 %v1322
        %1760 = vmatprep.subr.bf16.mxu0 %v1331
        %1761 = vmatpush1.bf16.msra.mxu0 %v1330
        %1762 = vmatprep.subr.bf16.mxu0 %v1339
        %1763 = vmatpush1.bf16.msra.mxu0 %v1338
        %1764 = vmatprep.subr.bf16.mxu0 %v1347
        %1765 = vmatpush1.bf16.msra.mxu0 %v1346
        %1766 = vmatprep.subr.bf16.mxu0 %v1355
        %1767 = vmatpush1.bf16.msra.mxu0 %v1354
        %1768 = vmatprep.subr.bf16.mxu0 %v1363
        %1769 = vmatpush1.bf16.msra.mxu0 %v1362
        %1770 = vmatprep.subr.bf16.mxu0 %v1371
        %1771 = vmatpush1.bf16.msra.mxu0 %v1370
        %1772 = vmatprep.subr.bf16.mxu0 %v1379
        %1773 = vmatpush1.bf16.msra.mxu0 %v1378
        %1774 = vmatprep.subr.bf16.mxu0 %v1387
        %1775 = vmatpush1.bf16.msra.mxu0 %v1386
        %1776 = vmatprep.mubr.bf16.mxu0 %v692
        %1777 = vmatmul.mubr.bf16.gmra.mrb[0].mxu0 %v644
        %v1778 = vpop.f32.mrb[0].mxu0
        %v1779 = vadd.f32 %v857, %v1778
        %v1780 = vpop.f32.mrb[0].mxu0
        %v1781 = vadd.f32 %v861, %v1780
        %v1782 = vpop.f32.mrb[0].mxu0
        %v1783 = vadd.f32 %v857, %v1782
        %v1784 = vpop.f32.mrb[0].mxu0
        %v1785 = vadd.f32 %v861, %v1784
        %1786 = vmatprep.mubr.bf16.mxu0 %v693
        %1787 = vmatmul.mubr.bf16.gmra.mrb[0].mxu0 %v645
        %v1788 = vpop.f32.mrb[0].mxu0
        %v1789 = vadd.f32 %v857, %v1788
        %v1790 = vpop.f32.mrb[0].mxu0
        %v1791 = vadd.f32 %v861, %v1790
        %v1792 = vpop.f32.mrb[0].mxu0
        %v1793 = vadd.f32 %v857, %v1792
        %v1794 = vpop.f32.mrb[0].mxu0
        %v1795 = vadd.f32 %v861, %v1794
        %1796 = vmatprep.mubr.bf16.mxu0 %v694
        %1797 = vmatmul.mubr.bf16.gmra.mrb[0].mxu0 %v646
        %v1798 = vpop.f32.mrb[0].mxu0
        %v1799 = vadd.f32 %v857, %v1798
        %v1800 = vpop.f32.mrb[0].mxu0
        %v1801 = vadd.f32 %v861, %v1800
        %v1802 = vpop.f32.mrb[0].mxu0
        %v1803 = vadd.f32 %v857, %v1802
        %v1804 = vpop.f32.mrb[0].mxu0
        %v1805 = vadd.f32 %v861, %v1804
        %1806 = vmatprep.mubr.bf16.mxu0 %v695
        %1807 = vmatmul.mubr.bf16.gmra.mrb[0].mxu0 %v647
        %v1808 = vpop.f32.mrb[0].mxu0
        %v1809 = vadd.f32 %v857, %v1808
        %v1810 = vpop.f32.mrb[0].mxu0
        %v1811 = vadd.f32 %v861, %v1810
        %v1812 = vpop.f32.mrb[0].mxu0
        %v1813 = vadd.f32 %v857, %v1812
        %v1814 = vpop.f32.mrb[0].mxu0
        %v1815 = vadd.f32 %v861, %v1814
        %1816 = vmatprep.mubr.bf16.mxu0 %v696
        %1817 = vmatmul.mubr.bf16.gmra.mrb[0].mxu0 %v648
        %v1818 = vpop.f32.mrb[0].mxu0
        %v1819 = vadd.f32 %v857, %v1818
        %v1820 = vpop.f32.mrb[0].mxu0
        %v1821 = vadd.f32 %v861, %v1820
        %v1822 = vpop.f32.mrb[0].mxu0
        %v1823 = vadd.f32 %v857, %v1822
        %v1824 = vpop.f32.mrb[0].mxu0
        %v1825 = vadd.f32 %v861, %v1824
        %1826 = vmatprep.mubr.bf16.mxu0 %v697
        %1827 = vmatmul.mubr.bf16.gmra.mrb[0].mxu0 %v649
        %v1828 = vpop.f32.mrb[0].mxu0
        %v1829 = vadd.f32 %v857, %v1828
        %v1830 = vpop.f32.mrb[0].mxu0
        %v1831 = vadd.f32 %v861, %v1830
        %v1832 = vpop.f32.mrb[0].mxu0
        %v1833 = vadd.f32 %v857, %v1832
        %v1834 = vpop.f32.mrb[0].mxu0
        %v1835 = vadd.f32 %v861, %v1834
        %1836 = vmatprep.mubr.bf16.mxu0 %v698
        %1837 = vmatmul.mubr.bf16.gmra.mrb[0].mxu0 %v650
        %v1838 = vpop.f32.mrb[0].mxu0
        %v1839 = vadd.f32 %v857, %v1838
        %v1840 = vpop.f32.mrb[0].mxu0
        %v1841 = vadd.f32 %v861, %v1840
        %v1842 = vpop.f32.mrb[0].mxu0
        %v1843 = vadd.f32 %v857, %v1842
        %v1844 = vpop.f32.mrb[0].mxu0
        %v1845 = vadd.f32 %v861, %v1844
        %1846 = vmatprep.mubr.bf16.mxu0 %v699
        %1847 = vmatmul.mubr.bf16.gmra.mrb[0].mxu0 %v651
        %v1848 = vpop.f32.mrb[0].mxu0
        %v1849 = vadd.f32 %v857, %v1848
        %v1850 = vpop.f32.mrb[0].mxu0
        %v1851 = vadd.f32 %v861, %v1850
        %v1852 = vpop.f32.mrb[0].mxu0
        %v1853 = vadd.f32 %v857, %v1852
        %v1854 = vpop.f32.mrb[0].mxu0
        %v1855 = vadd.f32 %v861, %v1854
        %1856 = vdwg.mxu0
        %1857 = vmatprep.subr.bf16.mxu0 %v1269
        %1858 = vmatpush1.bf16.msra.mxu0 %v1268
        %1859 = vmatprep.subr.bf16.mxu0 %v1277
        %1860 = vmatpush1.bf16.msra.mxu0 %v1276
        %1861 = vmatprep.subr.bf16.mxu0 %v1285
        %1862 = vmatpush1.bf16.msra.mxu0 %v1284
        %1863 = vmatprep.subr.bf16.mxu0 %v1293
        %1864 = vmatpush1.bf16.msra.mxu0 %v1292
        %1865 = vmatprep.subr.bf16.mxu0 %v1301
        %1866 = vmatpush1.bf16.msra.mxu0 %v1300
        %1867 = vmatprep.subr.bf16.mxu0 %v1309
        %1868 = vmatpush1.bf16.msra.mxu0 %v1308
        %1869 = vmatprep.subr.bf16.mxu0 %v1317
        %1870 = vmatpush1.bf16.msra.mxu0 %v1316
        %1871 = vmatprep.subr.bf16.mxu0 %v1325
        %1872 = vmatpush1.bf16.msra.mxu0 %v1324
        %1873 = vmatprep.subr.bf16.mxu0 %v1333
        %1874 = vmatpush1.bf16.msra.mxu0 %v1332
        %1875 = vmatprep.subr.bf16.mxu0 %v1341
        %1876 = vmatpush1.bf16.msra.mxu0 %v1340
        %1877 = vmatprep.subr.bf16.mxu0 %v1349
        %1878 = vmatpush1.bf16.msra.mxu0 %v1348
        %1879 = vmatprep.subr.bf16.mxu0 %v1357
        %1880 = vmatpush1.bf16.msra.mxu0 %v1356
        %1881 = vmatprep.subr.bf16.mxu0 %v1365
        %1882 = vmatpush1.bf16.msra.mxu0 %v1364
        %1883 = vmatprep.subr.bf16.mxu0 %v1373
        %1884 = vmatpush1.bf16.msra.mxu0 %v1372
        %1885 = vmatprep.subr.bf16.mxu0 %v1381
        %1886 = vmatpush1.bf16.msra.mxu0 %v1380
        %1887 = vmatprep.subr.bf16.mxu0 %v1389
        %1888 = vmatpush1.bf16.msra.mxu0 %v1388
        %1889 = vmatprep.mubr.bf16.mxu0 %v692
        %1890 = vmatmul.mubr.bf16.gmra.mrb[0].mxu0 %v644
        %v1891 = vpop.f32.mrb[0].mxu0
        %v1892 = vadd.f32 %v865, %v1891
        %v1893 = vpop.f32.mrb[0].mxu0
        %v1894 = vadd.f32 %v869, %v1893
        %v1895 = vpop.f32.mrb[0].mxu0
        %v1896 = vadd.f32 %v865, %v1895
        %v1897 = vpop.f32.mrb[0].mxu0
        %v1898 = vadd.f32 %v869, %v1897
        %1899 = vmatprep.mubr.bf16.mxu0 %v693
        %1900 = vmatmul.mubr.bf16.gmra.mrb[0].mxu0 %v645
        %v1901 = vpop.f32.mrb[0].mxu0
        %v1902 = vadd.f32 %v865, %v1901
        %v1903 = vpop.f32.mrb[0].mxu0
        %v1904 = vadd.f32 %v869, %v1903
        %v1905 = vpop.f32.mrb[0].mxu0
        %v1906 = vadd.f32 %v865, %v1905
        %v1907 = vpop.f32.mrb[0].mxu0
        %v1908 = vadd.f32 %v869, %v1907
        %1909 = vmatprep.mubr.bf16.mxu0 %v694
        %1910 = vmatmul.mubr.bf16.gmra.mrb[0].mxu0 %v646
        %v1911 = vpop.f32.mrb[0].mxu0
        %v1912 = vadd.f32 %v865, %v1911
        %v1913 = vpop.f32.mrb[0].mxu0
        %v1914 = vadd.f32 %v869, %v1913
        %v1915 = vpop.f32.mrb[0].mxu0
        %v1916 = vadd.f32 %v865, %v1915
        %v1917 = vpop.f32.mrb[0].mxu0
        %v1918 = vadd.f32 %v869, %v1917
        %1919 = vmatprep.mubr.bf16.mxu0 %v695
        %1920 = vmatmul.mubr.bf16.gmra.mrb[0].mxu0 %v647
        %v1921 = vpop.f32.mrb[0].mxu0
        %v1922 = vadd.f32 %v865, %v1921
        %v1923 = vpop.f32.mrb[0].mxu0
        %v1924 = vadd.f32 %v869, %v1923
        %v1925 = vpop.f32.mrb[0].mxu0
        %v1926 = vadd.f32 %v865, %v1925
        %v1927 = vpop.f32.mrb[0].mxu0
        %v1928 = vadd.f32 %v869, %v1927
        %1929 = vmatprep.mubr.bf16.mxu0 %v696
        %1930 = vmatmul.mubr.bf16.gmra.mrb[0].mxu0 %v648
        %v1931 = vpop.f32.mrb[0].mxu0
        %v1932 = vadd.f32 %v865, %v1931
        %v1933 = vpop.f32.mrb[0].mxu0
        %v1934 = vadd.f32 %v869, %v1933
        %v1935 = vpop.f32.mrb[0].mxu0
        %v1936 = vadd.f32 %v865, %v1935
        %v1937 = vpop.f32.mrb[0].mxu0
        %v1938 = vadd.f32 %v869, %v1937
        %1939 = vmatprep.mubr.bf16.mxu0 %v697
        %1940 = vmatmul.mubr.bf16.gmra.mrb[0].mxu0 %v649
        %v1941 = vpop.f32.mrb[0].mxu0
        %v1942 = vadd.f32 %v865, %v1941
        %v1943 = vpop.f32.mrb[0].mxu0
        %v1944 = vadd.f32 %v869, %v1943
        %v1945 = vpop.f32.mrb[0].mxu0
        %v1946 = vadd.f32 %v865, %v1945
        %v1947 = vpop.f32.mrb[0].mxu0
        %v1948 = vadd.f32 %v869, %v1947
        %1949 = vmatprep.mubr.bf16.mxu0 %v698
        %1950 = vmatmul.mubr.bf16.gmra.mrb[0].mxu0 %v650
        %v1951 = vpop.f32.mrb[0].mxu0
        %v1952 = vadd.f32 %v865, %v1951
        %v1953 = vpop.f32.mrb[0].mxu0
        %v1954 = vadd.f32 %v869, %v1953
        %v1955 = vpop.f32.mrb[0].mxu0
        %v1956 = vadd.f32 %v865, %v1955
        %v1957 = vpop.f32.mrb[0].mxu0
        %v1958 = vadd.f32 %v869, %v1957
        %1959 = vmatprep.mubr.bf16.mxu0 %v699
        %1960 = vmatmul.mubr.bf16.gmra.mrb[0].mxu0 %v651
        %v1961 = vpop.f32.mrb[0].mxu0
        %v1962 = vadd.f32 %v865, %v1961
        %v1963 = vpop.f32.mrb[0].mxu0
        %v1964 = vadd.f32 %v869, %v1963
        %v1965 = vpop.f32.mrb[0].mxu0
        %v1966 = vadd.f32 %v865, %v1965
        %v1967 = vpop.f32.mrb[0].mxu0
        %v1968 = vadd.f32 %v869, %v1967
        %1969 = vdwg.mxu0
        %v1970 = vmul.f32 %v1553, 0.5
        %v1971 = vmul.f32 %v1555, 0.5
        %v1972 = vmul.f32 %v1666, 0.5
        %v1973 = vmul.f32 %v1668, 0.5
        %v1974 = vmul.f32 %v1557, 0.5
        %v1975 = vmul.f32 %v1559, 0.5
        %v1976 = vmul.f32 %v1670, 0.5
        %v1977 = vmul.f32 %v1672, 0.5
        %v1978 = vmul.f32 %v1563, 0.5
        %v1979 = vmul.f32 %v1565, 0.5
        %v1980 = vmul.f32 %v1676, 0.5
        %v1981 = vmul.f32 %v1678, 0.5
        %v1982 = vmul.f32 %v1567, 0.5
        %v1983 = vmul.f32 %v1569, 0.5
        %v1984 = vmul.f32 %v1680, 0.5
        %v1985 = vmul.f32 %v1682, 0.5
        %v1986 = vmul.f32 %v1573, 0.5
        %v1987 = vmul.f32 %v1575, 0.5
        %v1988 = vmul.f32 %v1686, 0.5
        %v1989 = vmul.f32 %v1688, 0.5
        %v1990 = vmul.f32 %v1577, 0.5
        %v1991 = vmul.f32 %v1579, 0.5
        %v1992 = vmul.f32 %v1690, 0.5
        %v1993 = vmul.f32 %v1692, 0.5
        %v1994 = vmul.f32 %v1583, 0.5
        %v1995 = vmul.f32 %v1585, 0.5
        %v1996 = vmul.f32 %v1696, 0.5
        %v1997 = vmul.f32 %v1698, 0.5
        %v1998 = vmul.f32 %v1587, 0.5
        %v1999 = vmul.f32 %v1589, 0.5
        %v2000 = vmul.f32 %v1700, 0.5
        %v2001 = vmul.f32 %v1702, 0.5
        %v2002 = vmul.f32 %v1593, 0.5
        %v2003 = vmul.f32 %v1595, 0.5
        %v2004 = vmul.f32 %v1706, 0.5
        %v2005 = vmul.f32 %v1708, 0.5
        %v2006 = vmul.f32 %v1597, 0.5
        %v2007 = vmul.f32 %v1599, 0.5
        %v2008 = vmul.f32 %v1710, 0.5
        %v2009 = vmul.f32 %v1712, 0.5
        %v2010 = vmul.f32 %v1603, 0.5
        %v2011 = vmul.f32 %v1605, 0.5
        %v2012 = vmul.f32 %v1716, 0.5
        %v2013 = vmul.f32 %v1718, 0.5
        %v2014 = vmul.f32 %v1607, 0.5
        %v2015 = vmul.f32 %v1609, 0.5
        %v2016 = vmul.f32 %v1720, 0.5
        %v2017 = vmul.f32 %v1722, 0.5
        %v2018 = vmul.f32 %v1613, 0.5
        %v2019 = vmul.f32 %v1615, 0.5
        %v2020 = vmul.f32 %v1726, 0.5
        %v2021 = vmul.f32 %v1728, 0.5
        %v2022 = vmul.f32 %v1617, 0.5
        %v2023 = vmul.f32 %v1619, 0.5
        %v2024 = vmul.f32 %v1730, 0.5
        %v2025 = vmul.f32 %v1732, 0.5
        %v2026 = vmul.f32 %v1623, 0.5
        %v2027 = vmul.f32 %v1625, 0.5
        %v2028 = vmul.f32 %v1736, 0.5
        %v2029 = vmul.f32 %v1738, 0.5
        %v2030 = vmul.f32 %v1627, 0.5
        %v2031 = vmul.f32 %v1629, 0.5
        %v2032 = vmul.f32 %v1740, 0.5
        %v2033 = vmul.f32 %v1742, 0.5
        %v2034 = vmul.f32 %v1553, 0.044715
        %v2035 = vmul.f32 %v1555, 0.044715
        %v2036 = vmul.f32 %v1666, 0.044715
        %v2037 = vmul.f32 %v1668, 0.044715
        %v2038 = vmul.f32 %v1557, 0.044715
        %v2039 = vmul.f32 %v1559, 0.044715
        %v2040 = vmul.f32 %v1670, 0.044715
        %v2041 = vmul.f32 %v1672, 0.044715
        %v2042 = vmul.f32 %v1563, 0.044715
        %v2043 = vmul.f32 %v1565, 0.044715
        %v2044 = vmul.f32 %v1676, 0.044715
        %v2045 = vmul.f32 %v1678, 0.044715
        %v2046 = vmul.f32 %v1567, 0.044715
        %v2047 = vmul.f32 %v1569, 0.044715
        %v2048 = vmul.f32 %v1680, 0.044715
        %v2049 = vmul.f32 %v1682, 0.044715
        %v2050 = vmul.f32 %v1573, 0.044715
        %v2051 = vmul.f32 %v1575, 0.044715
        %v2052 = vmul.f32 %v1686, 0.044715
        %v2053 = vmul.f32 %v1688, 0.044715
        %v2054 = vmul.f32 %v1577, 0.044715
        %v2055 = vmul.f32 %v1579, 0.044715
        %v2056 = vmul.f32 %v1690, 0.044715
        %v2057 = vmul.f32 %v1692, 0.044715
        %v2058 = vmul.f32 %v1583, 0.044715
        %v2059 = vmul.f32 %v1585, 0.044715
        %v2060 = vmul.f32 %v1696, 0.044715
        %v2061 = vmul.f32 %v1698, 0.044715
        %v2062 = vmul.f32 %v1587, 0.044715
        %v2063 = vmul.f32 %v1589, 0.044715
        %v2064 = vmul.f32 %v1700, 0.044715
        %v2065 = vmul.f32 %v1702, 0.044715
        %v2066 = vmul.f32 %v1593, 0.044715
        %v2067 = vmul.f32 %v1595, 0.044715
        %v2068 = vmul.f32 %v1706, 0.044715
        %v2069 = vmul.f32 %v1708, 0.044715
        %v2070 = vmul.f32 %v1597, 0.044715
        %v2071 = vmul.f32 %v1599, 0.044715
        %v2072 = vmul.f32 %v1710, 0.044715
        %v2073 = vmul.f32 %v1712, 0.044715
        %v2074 = vmul.f32 %v1603, 0.044715
        %v2075 = vmul.f32 %v1605, 0.044715
        %v2076 = vmul.f32 %v1716, 0.044715
        %v2077 = vmul.f32 %v1718, 0.044715
        %v2078 = vmul.f32 %v1607, 0.044715
        %v2079 = vmul.f32 %v1609, 0.044715
        %v2080 = vmul.f32 %v1720, 0.044715
        %v2081 = vmul.f32 %v1722, 0.044715
        %v2082 = vmul.f32 %v1613, 0.044715
        %v2083 = vmul.f32 %v1615, 0.044715
        %v2084 = vmul.f32 %v1726, 0.044715
        %v2085 = vmul.f32 %v1728, 0.044715
        %v2086 = vmul.f32 %v1617, 0.044715
        %v2087 = vmul.f32 %v1619, 0.044715
        %v2088 = vmul.f32 %v1730, 0.044715
        %v2089 = vmul.f32 %v1732, 0.044715
        %v2090 = vmul.f32 %v1623, 0.044715
        %v2091 = vmul.f32 %v1625, 0.044715
        %v2092 = vmul.f32 %v1736, 0.044715
        %v2093 = vmul.f32 %v1738, 0.044715
        %v2094 = vmul.f32 %v1627, 0.044715
        %v2095 = vmul.f32 %v1629, 0.044715
        %v2096 = vmul.f32 %v1740, 0.044715
        %v2097 = vmul.f32 %v1742, 0.044715
        %v2098 = vmul.f32 %v2034, %v1553
        %v2099 = vmul.f32 %v2035, %v1555
        %v2100 = vmul.f32 %v2036, %v1666
        %v2101 = vmul.f32 %v2037, %v1668
        %v2102 = vmul.f32 %v2038, %v1557
        %v2103 = vmul.f32 %v2039, %v1559
        %v2104 = vmul.f32 %v2040, %v1670
        %v2105 = vmul.f32 %v2041, %v1672
        %v2106 = vmul.f32 %v2042, %v1563
        %v2107 = vmul.f32 %v2043, %v1565
        %v2108 = vmul.f32 %v2044, %v1676
        %v2109 = vmul.f32 %v2045, %v1678
        %v2110 = vmul.f32 %v2046, %v1567
        %v2111 = vmul.f32 %v2047, %v1569
        %v2112 = vmul.f32 %v2048, %v1680
        %v2113 = vmul.f32 %v2049, %v1682
        %v2114 = vmul.f32 %v2050, %v1573
        %v2115 = vmul.f32 %v2051, %v1575
        %v2116 = vmul.f32 %v2052, %v1686
        %v2117 = vmul.f32 %v2053, %v1688
        %v2118 = vmul.f32 %v2054, %v1577
        %v2119 = vmul.f32 %v2055, %v1579
        %v2120 = vmul.f32 %v2056, %v1690
        %v2121 = vmul.f32 %v2057, %v1692
        %v2122 = vmul.f32 %v2058, %v1583
        %v2123 = vmul.f32 %v2059, %v1585
        %v2124 = vmul.f32 %v2060, %v1696
        %v2125 = vmul.f32 %v2061, %v1698
        %v2126 = vmul.f32 %v2062, %v1587
        %v2127 = vmul.f32 %v2063, %v1589
        %v2128 = vmul.f32 %v2064, %v1700
        %v2129 = vmul.f32 %v2065, %v1702
        %v2130 = vmul.f32 %v2066, %v1593
        %v2131 = vmul.f32 %v2067, %v1595
        %v2132 = vmul.f32 %v2068, %v1706
        %v2133 = vmul.f32 %v2069, %v1708
        %v2134 = vmul.f32 %v2070, %v1597
        %v2135 = vmul.f32 %v2071, %v1599
        %v2136 = vmul.f32 %v2072, %v1710
        %v2137 = vmul.f32 %v2073, %v1712
        %v2138 = vmul.f32 %v2074, %v1603
        %v2139 = vmul.f32 %v2075, %v1605
        %v2140 = vmul.f32 %v2076, %v1716
        %v2141 = vmul.f32 %v2077, %v1718
        %v2142 = vmul.f32 %v2078, %v1607
        %v2143 = vmul.f32 %v2079, %v1609
        %v2144 = vmul.f32 %v2080, %v1720
        %v2145 = vmul.f32 %v2081, %v1722
        %v2146 = vmul.f32 %v2082, %v1613
        %v2147 = vmul.f32 %v2083, %v1615
        %v2148 = vmul.f32 %v2084, %v1726
        %v2149 = vmul.f32 %v2085, %v1728
        %v2150 = vmul.f32 %v2086, %v1617
        %v2151 = vmul.f32 %v2087, %v1619
        %v2152 = vmul.f32 %v2088, %v1730
        %v2153 = vmul.f32 %v2089, %v1732
        %v2154 = vmul.f32 %v2090, %v1623
        %v2155 = vmul.f32 %v2091, %v1625
        %v2156 = vmul.f32 %v2092, %v1736
        %v2157 = vmul.f32 %v2093, %v1738
        %v2158 = vmul.f32 %v2094, %v1627
        %v2159 = vmul.f32 %v2095, %v1629
        %v2160 = vmul.f32 %v2096, %v1740
        %v2161 = vmul.f32 %v2097, %v1742
        %v2162 = vmul.f32 %v2098, %v1553
        %v2163 = vmul.f32 %v2099, %v1555
        %v2164 = vmul.f32 %v2100, %v1666
        %v2165 = vmul.f32 %v2101, %v1668
        %v2166 = vmul.f32 %v2102, %v1557
        %v2167 = vmul.f32 %v2103, %v1559
        %v2168 = vmul.f32 %v2104, %v1670
        %v2169 = vmul.f32 %v2105, %v1672
        %v2170 = vmul.f32 %v2106, %v1563
        %v2171 = vmul.f32 %v2107, %v1565
        %v2172 = vmul.f32 %v2108, %v1676
        %v2173 = vmul.f32 %v2109, %v1678
        %v2174 = vmul.f32 %v2110, %v1567
        %v2175 = vmul.f32 %v2111, %v1569
        %v2176 = vmul.f32 %v2112, %v1680
        %v2177 = vmul.f32 %v2113, %v1682
        %v2178 = vmul.f32 %v2114, %v1573
        %v2179 = vmul.f32 %v2115, %v1575
        %v2180 = vmul.f32 %v2116, %v1686
        %v2181 = vmul.f32 %v2117, %v1688
        %v2182 = vmul.f32 %v2118, %v1577
        %v2183 = vmul.f32 %v2119, %v1579
        %v2184 = vmul.f32 %v2120, %v1690
        %v2185 = vmul.f32 %v2121, %v1692
        %v2186 = vmul.f32 %v2122, %v1583
        %v2187 = vmul.f32 %v2123, %v1585
        %v2188 = vmul.f32 %v2124, %v1696
        %v2189 = vmul.f32 %v2125, %v1698
        %v2190 = vmul.f32 %v2126, %v1587
        %v2191 = vmul.f32 %v2127, %v1589
        %v2192 = vmul.f32 %v2128, %v1700
        %v2193 = vmul.f32 %v2129, %v1702
        %v2194 = vmul.f32 %v2130, %v1593
        %v2195 = vmul.f32 %v2131, %v1595
        %v2196 = vmul.f32 %v2132, %v1706
        %v2197 = vmul.f32 %v2133, %v1708
        %v2198 = vmul.f32 %v2134, %v1597
        %v2199 = vmul.f32 %v2135, %v1599
        %v2200 = vmul.f32 %v2136, %v1710
        %v2201 = vmul.f32 %v2137, %v1712
        %v2202 = vmul.f32 %v2138, %v1603
        %v2203 = vmul.f32 %v2139, %v1605
        %v2204 = vmul.f32 %v2140, %v1716
        %v2205 = vmul.f32 %v2141, %v1718
        %v2206 = vmul.f32 %v2142, %v1607
        %v2207 = vmul.f32 %v2143, %v1609
        %v2208 = vmul.f32 %v2144, %v1720
        %v2209 = vmul.f32 %v2145, %v1722
        %v2210 = vmul.f32 %v2146, %v1613
        %v2211 = vmul.f32 %v2147, %v1615
        %v2212 = vmul.f32 %v2148, %v1726
        %v2213 = vmul.f32 %v2149, %v1728
        %v2214 = vmul.f32 %v2150, %v1617
        %v2215 = vmul.f32 %v2151, %v1619
        %v2216 = vmul.f32 %v2152, %v1730
        %v2217 = vmul.f32 %v2153, %v1732
        %v2218 = vmul.f32 %v2154, %v1623
        %v2219 = vmul.f32 %v2155, %v1625
        %v2220 = vmul.f32 %v2156, %v1736
        %v2221 = vmul.f32 %v2157, %v1738
        %v2222 = vmul.f32 %v2158, %v1627
        %v2223 = vmul.f32 %v2159, %v1629
        %v2224 = vmul.f32 %v2160, %v1740
        %v2225 = vmul.f32 %v2161, %v1742
        %v2226 = vadd.f32 %v1553, %v2162
        %v2227 = vadd.f32 %v1555, %v2163
        %v2228 = vadd.f32 %v1666, %v2164
        %v2229 = vadd.f32 %v1668, %v2165
        %v2230 = vadd.f32 %v1557, %v2166
        %v2231 = vadd.f32 %v1559, %v2167
        %v2232 = vadd.f32 %v1670, %v2168
        %v2233 = vadd.f32 %v1672, %v2169
        %v2234 = vadd.f32 %v1563, %v2170
        %v2235 = vadd.f32 %v1565, %v2171
        %v2236 = vadd.f32 %v1676, %v2172
        %v2237 = vadd.f32 %v1678, %v2173
        %v2238 = vadd.f32 %v1567, %v2174
        %v2239 = vadd.f32 %v1569, %v2175
        %v2240 = vadd.f32 %v1680, %v2176
        %v2241 = vadd.f32 %v1682, %v2177
        %v2242 = vadd.f32 %v1573, %v2178
        %v2243 = vadd.f32 %v1575, %v2179
        %v2244 = vadd.f32 %v1686, %v2180
        %v2245 = vadd.f32 %v1688, %v2181
        %v2246 = vadd.f32 %v1577, %v2182
        %v2247 = vadd.f32 %v1579, %v2183
        %v2248 = vadd.f32 %v1690, %v2184
        %v2249 = vadd.f32 %v1692, %v2185
        %v2250 = vadd.f32 %v1583, %v2186
        %v2251 = vadd.f32 %v1585, %v2187
        %v2252 = vadd.f32 %v1696, %v2188
        %v2253 = vadd.f32 %v1698, %v2189
        %v2254 = vadd.f32 %v1587, %v2190
        %v2255 = vadd.f32 %v1589, %v2191
        %v2256 = vadd.f32 %v1700, %v2192
        %v2257 = vadd.f32 %v1702, %v2193
        %v2258 = vadd.f32 %v1593, %v2194
        %v2259 = vadd.f32 %v1595, %v2195
        %v2260 = vadd.f32 %v1706, %v2196
        %v2261 = vadd.f32 %v1708, %v2197
        %v2262 = vadd.f32 %v1597, %v2198
        %v2263 = vadd.f32 %v1599, %v2199
        %v2264 = vadd.f32 %v1710, %v2200
        %v2265 = vadd.f32 %v1712, %v2201
        %v2266 = vadd.f32 %v1603, %v2202
        %v2267 = vadd.f32 %v1605, %v2203
        %v2268 = vadd.f32 %v1716, %v2204
        %v2269 = vadd.f32 %v1718, %v2205
        %v2270 = vadd.f32 %v1607, %v2206
        %v2271 = vadd.f32 %v1609, %v2207
        %v2272 = vadd.f32 %v1720, %v2208
        %v2273 = vadd.f32 %v1722, %v2209
        %v2274 = vadd.f32 %v1613, %v2210
        %v2275 = vadd.f32 %v1615, %v2211
        %v2276 = vadd.f32 %v1726, %v2212
        %v2277 = vadd.f32 %v1728, %v2213
        %v2278 = vadd.f32 %v1617, %v2214
        %v2279 = vadd.f32 %v1619, %v2215
        %v2280 = vadd.f32 %v1730, %v2216
        %v2281 = vadd.f32 %v1732, %v2217
        %v2282 = vadd.f32 %v1623, %v2218
        %v2283 = vadd.f32 %v1625, %v2219
        %v2284 = vadd.f32 %v1736, %v2220
        %v2285 = vadd.f32 %v1738, %v2221
        %v2286 = vadd.f32 %v1627, %v2222
        %v2287 = vadd.f32 %v1629, %v2223
        %v2288 = vadd.f32 %v1740, %v2224
        %v2289 = vadd.f32 %v1742, %v2225
        %v2290 = vmul.f32 %v2226, 0.7978846
        %v2291 = vmul.f32 %v2227, 0.7978846
        %v2292 = vmul.f32 %v2228, 0.7978846
        %v2293 = vmul.f32 %v2229, 0.7978846
        %v2294 = vmul.f32 %v2230, 0.7978846
        %v2295 = vmul.f32 %v2231, 0.7978846
        %v2296 = vmul.f32 %v2232, 0.7978846
        %v2297 = vmul.f32 %v2233, 0.7978846
        %v2298 = vmul.f32 %v2234, 0.7978846
        %v2299 = vmul.f32 %v2235, 0.7978846
        %v2300 = vmul.f32 %v2236, 0.7978846
        %v2301 = vmul.f32 %v2237, 0.7978846
        %v2302 = vmul.f32 %v2238, 0.7978846
        %v2303 = vmul.f32 %v2239, 0.7978846
        %v2304 = vmul.f32 %v2240, 0.7978846
        %v2305 = vmul.f32 %v2241, 0.7978846
        %v2306 = vmul.f32 %v2242, 0.7978846
        %v2307 = vmul.f32 %v2243, 0.7978846
        %v2308 = vmul.f32 %v2244, 0.7978846
        %v2309 = vmul.f32 %v2245, 0.7978846
        %v2310 = vmul.f32 %v2246, 0.7978846
        %v2311 = vmul.f32 %v2247, 0.7978846
        %v2312 = vmul.f32 %v2248, 0.7978846
        %v2313 = vmul.f32 %v2249, 0.7978846
        %v2314 = vmul.f32 %v2250, 0.7978846
        %v2315 = vmul.f32 %v2251, 0.7978846
        %v2316 = vmul.f32 %v2252, 0.7978846
        %v2317 = vmul.f32 %v2253, 0.7978846
        %v2318 = vmul.f32 %v2254, 0.7978846
        %v2319 = vmul.f32 %v2255, 0.7978846
        %v2320 = vmul.f32 %v2256, 0.7978846
        %v2321 = vmul.f32 %v2257, 0.7978846
        %v2322 = vmul.f32 %v2258, 0.7978846
        %v2323 = vmul.f32 %v2259, 0.7978846
        %v2324 = vmul.f32 %v2260, 0.7978846
        %v2325 = vmul.f32 %v2261, 0.7978846
        %v2326 = vmul.f32 %v2262, 0.7978846
        %v2327 = vmul.f32 %v2263, 0.7978846
        %v2328 = vmul.f32 %v2264, 0.7978846
        %v2329 = vmul.f32 %v2265, 0.7978846
        %v2330 = vmul.f32 %v2266, 0.7978846
        %v2331 = vmul.f32 %v2267, 0.7978846
        %v2332 = vmul.f32 %v2268, 0.7978846
        %v2333 = vmul.f32 %v2269, 0.7978846
        %v2334 = vmul.f32 %v2270, 0.7978846
        %v2335 = vmul.f32 %v2271, 0.7978846
        %v2336 = vmul.f32 %v2272, 0.7978846
        %v2337 = vmul.f32 %v2273, 0.7978846
        %v2338 = vmul.f32 %v2274, 0.7978846
        %v2339 = vmul.f32 %v2275, 0.7978846
        %v2340 = vmul.f32 %v2276, 0.7978846
        %v2341 = vmul.f32 %v2277, 0.7978846
        %v2342 = vmul.f32 %v2278, 0.7978846
        %v2343 = vmul.f32 %v2279, 0.7978846
        %v2344 = vmul.f32 %v2280, 0.7978846
        %v2345 = vmul.f32 %v2281, 0.7978846
        %v2346 = vmul.f32 %v2282, 0.7978846
        %v2347 = vmul.f32 %v2283, 0.7978846
        %v2348 = vmul.f32 %v2284, 0.7978846
        %v2349 = vmul.f32 %v2285, 0.7978846
        %v2350 = vmul.f32 %v2286, 0.7978846
        %v2351 = vmul.f32 %v2287, 0.7978846
        %v2352 = vmul.f32 %v2288, 0.7978846
        %v2353 = vmul.f32 %v2289, 0.7978846
        %v2354 = vtanh.pop %v2290
        %v2355 = vtanh.pop %v2291
        %v2356 = vtanh.pop %v2292
        %v2357 = vtanh.pop %v2293
        %v2358 = vtanh.pop %v2294
        %v2359 = vtanh.pop %v2295
        %v2360 = vtanh.pop %v2296
        %v2361 = vtanh.pop %v2297
        %v2362 = vtanh.pop %v2298
        %v2363 = vtanh.pop %v2299
        %v2364 = vtanh.pop %v2300
        %v2365 = vtanh.pop %v2301
        %v2366 = vtanh.pop %v2302
        %v2367 = vtanh.pop %v2303
        %v2368 = vtanh.pop %v2304
        %v2369 = vtanh.pop %v2305
        %v2370 = vtanh.pop %v2306
        %v2371 = vtanh.pop %v2307
        %v2372 = vtanh.pop %v2308
        %v2373 = vtanh.pop %v2309
        %v2374 = vtanh.pop %v2310
        %v2375 = vtanh.pop %v2311
        %v2376 = vtanh.pop %v2312
        %v2377 = vtanh.pop %v2313
        %v2378 = vtanh.pop %v2314
        %v2379 = vtanh.pop %v2315
        %v2380 = vtanh.pop %v2316
        %v2381 = vtanh.pop %v2317
        %v2382 = vtanh.pop %v2318
        %v2383 = vtanh.pop %v2319
        %v2384 = vtanh.pop %v2320
        %v2385 = vtanh.pop %v2321
        %v2386 = vtanh.pop %v2322
        %v2387 = vtanh.pop %v2323
        %v2388 = vtanh.pop %v2324
        %v2389 = vtanh.pop %v2325
        %v2390 = vtanh.pop %v2326
        %v2391 = vtanh.pop %v2327
        %v2392 = vtanh.pop %v2328
        %v2393 = vtanh.pop %v2329
        %v2394 = vtanh.pop %v2330
        %v2395 = vtanh.pop %v2331
        %v2396 = vtanh.pop %v2332
        %v2397 = vtanh.pop %v2333
        %v2398 = vtanh.pop %v2334
        %v2399 = vtanh.pop %v2335
        %v2400 = vtanh.pop %v2336
        %v2401 = vtanh.pop %v2337
        %v2402 = vtanh.pop %v2338
        %v2403 = vtanh.pop %v2339
        %v2404 = vtanh.pop %v2340
        %v2405 = vtanh.pop %v2341
        %v2406 = vtanh.pop %v2342
        %v2407 = vtanh.pop %v2343
        %v2408 = vtanh.pop %v2344
        %v2409 = vtanh.pop %v2345
        %v2410 = vtanh.pop %v2346
        %v2411 = vtanh.pop %v2347
        %v2412 = vtanh.pop %v2348
        %v2413 = vtanh.pop %v2349
        %v2414 = vtanh.pop %v2350
        %v2415 = vtanh.pop %v2351
        %v2416 = vtanh.pop %v2352
        %v2417 = vtanh.pop %v2353
        %v2418 = vadd.f32 %v2354, 1.0
        %v2419 = vadd.f32 %v2355, 1.0
        %v2420 = vadd.f32 %v2356, 1.0
        %v2421 = vadd.f32 %v2357, 1.0
        %v2422 = vadd.f32 %v2358, 1.0
        %v2423 = vadd.f32 %v2359, 1.0
        %v2424 = vadd.f32 %v2360, 1.0
        %v2425 = vadd.f32 %v2361, 1.0
        %v2426 = vadd.f32 %v2362, 1.0
        %v2427 = vadd.f32 %v2363, 1.0
        %v2428 = vadd.f32 %v2364, 1.0
        %v2429 = vadd.f32 %v2365, 1.0
        %v2430 = vadd.f32 %v2366, 1.0
        %v2431 = vadd.f32 %v2367, 1.0
        %v2432 = vadd.f32 %v2368, 1.0
        %v2433 = vadd.f32 %v2369, 1.0
        %v2434 = vadd.f32 %v2370, 1.0
        %v2435 = vadd.f32 %v2371, 1.0
        %v2436 = vadd.f32 %v2372, 1.0
        %v2437 = vadd.f32 %v2373, 1.0
        %v2438 = vadd.f32 %v2374, 1.0
        %v2439 = vadd.f32 %v2375, 1.0
        %v2440 = vadd.f32 %v2376, 1.0
        %v2441 = vadd.f32 %v2377, 1.0
        %v2442 = vadd.f32 %v2378, 1.0
        %v2443 = vadd.f32 %v2379, 1.0
        %v2444 = vadd.f32 %v2380, 1.0
        %v2445 = vadd.f32 %v2381, 1.0
        %v2446 = vadd.f32 %v2382, 1.0
        %v2447 = vadd.f32 %v2383, 1.0
        %v2448 = vadd.f32 %v2384, 1.0
        %v2449 = vadd.f32 %v2385, 1.0
        %v2450 = vadd.f32 %v2386, 1.0
        %v2451 = vadd.f32 %v2387, 1.0
        %v2452 = vadd.f32 %v2388, 1.0
        %v2453 = vadd.f32 %v2389, 1.0
        %v2454 = vadd.f32 %v2390, 1.0
        %v2455 = vadd.f32 %v2391, 1.0
        %v2456 = vadd.f32 %v2392, 1.0
        %v2457 = vadd.f32 %v2393, 1.0
        %v2458 = vadd.f32 %v2394, 1.0
        %v2459 = vadd.f32 %v2395, 1.0
        %v2460 = vadd.f32 %v2396, 1.0
        %v2461 = vadd.f32 %v2397, 1.0
        %v2462 = vadd.f32 %v2398, 1.0
        %v2463 = vadd.f32 %v2399, 1.0
        %v2464 = vadd.f32 %v2400, 1.0
        %v2465 = vadd.f32 %v2401, 1.0
        %v2466 = vadd.f32 %v2402, 1.0
        %v2467 = vadd.f32 %v2403, 1.0
        %v2468 = vadd.f32 %v2404, 1.0
        %v2469 = vadd.f32 %v2405, 1.0
        %v2470 = vadd.f32 %v2406, 1.0
        %v2471 = vadd.f32 %v2407, 1.0
        %v2472 = vadd.f32 %v2408, 1.0
        %v2473 = vadd.f32 %v2409, 1.0
        %v2474 = vadd.f32 %v2410, 1.0
        %v2475 = vadd.f32 %v2411, 1.0
        %v2476 = vadd.f32 %v2412, 1.0
        %v2477 = vadd.f32 %v2413, 1.0
        %v2478 = vadd.f32 %v2414, 1.0
        %v2479 = vadd.f32 %v2415, 1.0
        %v2480 = vadd.f32 %v2416, 1.0
        %v2481 = vadd.f32 %v2417, 1.0
        %v2482 = vmul.f32 %v1970, %v2418
        %v2483 = vmul.f32 %v1971, %v2419
        %v2484 = vmul.f32 %v1972, %v2420
        %v2485 = vmul.f32 %v1973, %v2421
        %v2486 = vmul.f32 %v1974, %v2422
        %v2487 = vmul.f32 %v1975, %v2423
        %v2488 = vmul.f32 %v1976, %v2424
        %v2489 = vmul.f32 %v1977, %v2425
        %v2490 = vmul.f32 %v1978, %v2426
        %v2491 = vmul.f32 %v1979, %v2427
        %v2492 = vmul.f32 %v1980, %v2428
        %v2493 = vmul.f32 %v1981, %v2429
        %v2494 = vmul.f32 %v1982, %v2430
        %v2495 = vmul.f32 %v1983, %v2431
        %v2496 = vmul.f32 %v1984, %v2432
        %v2497 = vmul.f32 %v1985, %v2433
        %v2498 = vmul.f32 %v1986, %v2434
        %v2499 = vmul.f32 %v1987, %v2435
        %v2500 = vmul.f32 %v1988, %v2436
        %v2501 = vmul.f32 %v1989, %v2437
        %v2502 = vmul.f32 %v1990, %v2438
        %v2503 = vmul.f32 %v1991, %v2439
        %v2504 = vmul.f32 %v1992, %v2440
        %v2505 = vmul.f32 %v1993, %v2441
        %v2506 = vmul.f32 %v1994, %v2442
        %v2507 = vmul.f32 %v1995, %v2443
        %v2508 = vmul.f32 %v1996, %v2444
        %v2509 = vmul.f32 %v1997, %v2445
        %v2510 = vmul.f32 %v1998, %v2446
        %v2511 = vmul.f32 %v1999, %v2447
        %v2512 = vmul.f32 %v2000, %v2448
        %v2513 = vmul.f32 %v2001, %v2449
        %v2514 = vmul.f32 %v2002, %v2450
        %v2515 = vmul.f32 %v2003, %v2451
        %v2516 = vmul.f32 %v2004, %v2452
        %v2517 = vmul.f32 %v2005, %v2453
        %v2518 = vmul.f32 %v2006, %v2454
        %v2519 = vmul.f32 %v2007, %v2455
        %v2520 = vmul.f32 %v2008, %v2456
        %v2521 = vmul.f32 %v2009, %v2457
        %v2522 = vmul.f32 %v2010, %v2458
        %v2523 = vmul.f32 %v2011, %v2459
        %v2524 = vmul.f32 %v2012, %v2460
        %v2525 = vmul.f32 %v2013, %v2461
        %v2526 = vmul.f32 %v2014, %v2462
        %v2527 = vmul.f32 %v2015, %v2463
        %v2528 = vmul.f32 %v2016, %v2464
        %v2529 = vmul.f32 %v2017, %v2465
        %v2530 = vmul.f32 %v2018, %v2466
        %v2531 = vmul.f32 %v2019, %v2467
        %v2532 = vmul.f32 %v2020, %v2468
        %v2533 = vmul.f32 %v2021, %v2469
        %v2534 = vmul.f32 %v2022, %v2470
        %v2535 = vmul.f32 %v2023, %v2471
        %v2536 = vmul.f32 %v2024, %v2472
        %v2537 = vmul.f32 %v2025, %v2473
        %v2538 = vmul.f32 %v2026, %v2474
        %v2539 = vmul.f32 %v2027, %v2475
        %v2540 = vmul.f32 %v2028, %v2476
        %v2541 = vmul.f32 %v2029, %v2477
        %v2542 = vmul.f32 %v2030, %v2478
        %v2543 = vmul.f32 %v2031, %v2479
        %v2544 = vmul.f32 %v2032, %v2480
        %v2545 = vmul.f32 %v2033, %v2481
        %v2546 = vmul.f32 %v1779, 0.5
        %v2547 = vmul.f32 %v1781, 0.5
        %v2548 = vmul.f32 %v1892, 0.5
        %v2549 = vmul.f32 %v1894, 0.5
        %v2550 = vmul.f32 %v1783, 0.5
        %v2551 = vmul.f32 %v1785, 0.5
        %v2552 = vmul.f32 %v1896, 0.5
        %v2553 = vmul.f32 %v1898, 0.5
        %v2554 = vmul.f32 %v1789, 0.5
        %v2555 = vmul.f32 %v1791, 0.5
        %v2556 = vmul.f32 %v1902, 0.5
        %v2557 = vmul.f32 %v1904, 0.5
        %v2558 = vmul.f32 %v1793, 0.5
        %v2559 = vmul.f32 %v1795, 0.5
        %v2560 = vmul.f32 %v1906, 0.5
        %v2561 = vmul.f32 %v1908, 0.5
        %v2562 = vmul.f32 %v1799, 0.5
        %v2563 = vmul.f32 %v1801, 0.5
        %v2564 = vmul.f32 %v1912, 0.5
        %v2565 = vmul.f32 %v1914, 0.5
        %v2566 = vmul.f32 %v1803, 0.5
        %v2567 = vmul.f32 %v1805, 0.5
        %v2568 = vmul.f32 %v1916, 0.5
        %v2569 = vmul.f32 %v1918, 0.5
        %v2570 = vmul.f32 %v1809, 0.5
        %v2571 = vmul.f32 %v1811, 0.5
        %v2572 = vmul.f32 %v1922, 0.5
        %v2573 = vmul.f32 %v1924, 0.5
        %v2574 = vmul.f32 %v1813, 0.5
        %v2575 = vmul.f32 %v1815, 0.5
        %v2576 = vmul.f32 %v1926, 0.5
        %v2577 = vmul.f32 %v1928, 0.5
        %v2578 = vmul.f32 %v1819, 0.5
        %v2579 = vmul.f32 %v1821, 0.5
        %v2580 = vmul.f32 %v1932, 0.5
        %v2581 = vmul.f32 %v1934, 0.5
        %v2582 = vmul.f32 %v1823, 0.5
        %v2583 = vmul.f32 %v1825, 0.5
        %v2584 = vmul.f32 %v1936, 0.5
        %v2585 = vmul.f32 %v1938, 0.5
        %v2586 = vmul.f32 %v1829, 0.5
        %v2587 = vmul.f32 %v1831, 0.5
        %v2588 = vmul.f32 %v1942, 0.5
        %v2589 = vmul.f32 %v1944, 0.5
        %v2590 = vmul.f32 %v1833, 0.5
        %v2591 = vmul.f32 %v1835, 0.5
        %v2592 = vmul.f32 %v1946, 0.5
        %v2593 = vmul.f32 %v1948, 0.5
        %v2594 = vmul.f32 %v1839, 0.5
        %v2595 = vmul.f32 %v1841, 0.5
        %v2596 = vmul.f32 %v1952, 0.5
        %v2597 = vmul.f32 %v1954, 0.5
        %v2598 = vmul.f32 %v1843, 0.5
        %v2599 = vmul.f32 %v1845, 0.5
        %v2600 = vmul.f32 %v1956, 0.5
        %v2601 = vmul.f32 %v1958, 0.5
        %v2602 = vmul.f32 %v1849, 0.5
        %v2603 = vmul.f32 %v1851, 0.5
        %v2604 = vmul.f32 %v1962, 0.5
        %v2605 = vmul.f32 %v1964, 0.5
        %v2606 = vmul.f32 %v1853, 0.5
        %v2607 = vmul.f32 %v1855, 0.5
        %v2608 = vmul.f32 %v1966, 0.5
        %v2609 = vmul.f32 %v1968, 0.5
        %v2610 = vmul.f32 %v1779, 0.044715
        %v2611 = vmul.f32 %v1781, 0.044715
        %v2612 = vmul.f32 %v1892, 0.044715
        %v2613 = vmul.f32 %v1894, 0.044715
        %v2614 = vmul.f32 %v1783, 0.044715
        %v2615 = vmul.f32 %v1785, 0.044715
        %v2616 = vmul.f32 %v1896, 0.044715
        %v2617 = vmul.f32 %v1898, 0.044715
        %v2618 = vmul.f32 %v1789, 0.044715
        %v2619 = vmul.f32 %v1791, 0.044715
        %v2620 = vmul.f32 %v1902, 0.044715
        %v2621 = vmul.f32 %v1904, 0.044715
        %v2622 = vmul.f32 %v1793, 0.044715
        %v2623 = vmul.f32 %v1795, 0.044715
        %v2624 = vmul.f32 %v1906, 0.044715
        %v2625 = vmul.f32 %v1908, 0.044715
        %v2626 = vmul.f32 %v1799, 0.044715
        %v2627 = vmul.f32 %v1801, 0.044715
        %v2628 = vmul.f32 %v1912, 0.044715
        %v2629 = vmul.f32 %v1914, 0.044715
        %v2630 = vmul.f32 %v1803, 0.044715
        %v2631 = vmul.f32 %v1805, 0.044715
        %v2632 = vmul.f32 %v1916, 0.044715
        %v2633 = vmul.f32 %v1918, 0.044715
        %v2634 = vmul.f32 %v1809, 0.044715
        %v2635 = vmul.f32 %v1811, 0.044715
        %v2636 = vmul.f32 %v1922, 0.044715
        %v2637 = vmul.f32 %v1924, 0.044715
        %v2638 = vmul.f32 %v1813, 0.044715
        %v2639 = vmul.f32 %v1815, 0.044715
        %v2640 = vmul.f32 %v1926, 0.044715
        %v2641 = vmul.f32 %v1928, 0.044715
        %v2642 = vmul.f32 %v1819, 0.044715
        %v2643 = vmul.f32 %v1821, 0.044715
        %v2644 = vmul.f32 %v1932, 0.044715
        %v2645 = vmul.f32 %v1934, 0.044715
        %v2646 = vmul.f32 %v1823, 0.044715
        %v2647 = vmul.f32 %v1825, 0.044715
        %v2648 = vmul.f32 %v1936, 0.044715
        %v2649 = vmul.f32 %v1938, 0.044715
        %v2650 = vmul.f32 %v1829, 0.044715
        %v2651 = vmul.f32 %v1831, 0.044715
        %v2652 = vmul.f32 %v1942, 0.044715
        %v2653 = vmul.f32 %v1944, 0.044715
        %v2654 = vmul.f32 %v1833, 0.044715
        %v2655 = vmul.f32 %v1835, 0.044715
        %v2656 = vmul.f32 %v1946, 0.044715
        %v2657 = vmul.f32 %v1948, 0.044715
        %v2658 = vmul.f32 %v1839, 0.044715
        %v2659 = vmul.f32 %v1841, 0.044715
        %v2660 = vmul.f32 %v1952, 0.044715
        %v2661 = vmul.f32 %v1954, 0.044715
        %v2662 = vmul.f32 %v1843, 0.044715
        %v2663 = vmul.f32 %v1845, 0.044715
        %v2664 = vmul.f32 %v1956, 0.044715
        %v2665 = vmul.f32 %v1958, 0.044715
        %v2666 = vmul.f32 %v1849, 0.044715
        %v2667 = vmul.f32 %v1851, 0.044715
        %v2668 = vmul.f32 %v1962, 0.044715
        %v2669 = vmul.f32 %v1964, 0.044715
        %v2670 = vmul.f32 %v1853, 0.044715
        %v2671 = vmul.f32 %v1855, 0.044715
        %v2672 = vmul.f32 %v1966, 0.044715
        %v2673 = vmul.f32 %v1968, 0.044715
        %v2674 = vmul.f32 %v2610, %v1779
        %v2675 = vmul.f32 %v2611, %v1781
        %v2676 = vmul.f32 %v2612, %v1892
        %v2677 = vmul.f32 %v2613, %v1894
        %v2678 = vmul.f32 %v2614, %v1783
        %v2679 = vmul.f32 %v2615, %v1785
        %v2680 = vmul.f32 %v2616, %v1896
        %v2681 = vmul.f32 %v2617, %v1898
        %v2682 = vmul.f32 %v2618, %v1789
        %v2683 = vmul.f32 %v2619, %v1791
        %v2684 = vmul.f32 %v2620, %v1902
        %v2685 = vmul.f32 %v2621, %v1904
        %v2686 = vmul.f32 %v2622, %v1793
        %v2687 = vmul.f32 %v2623, %v1795
        %v2688 = vmul.f32 %v2624, %v1906
        %v2689 = vmul.f32 %v2625, %v1908
        %v2690 = vmul.f32 %v2626, %v1799
        %v2691 = vmul.f32 %v2627, %v1801
        %v2692 = vmul.f32 %v2628, %v1912
        %v2693 = vmul.f32 %v2629, %v1914
        %v2694 = vmul.f32 %v2630, %v1803
        %v2695 = vmul.f32 %v2631, %v1805
        %v2696 = vmul.f32 %v2632, %v1916
        %v2697 = vmul.f32 %v2633, %v1918
        %v2698 = vmul.f32 %v2634, %v1809
        %v2699 = vmul.f32 %v2635, %v1811
        %v2700 = vmul.f32 %v2636, %v1922
        %v2701 = vmul.f32 %v2637, %v1924
        %v2702 = vmul.f32 %v2638, %v1813
        %v2703 = vmul.f32 %v2639, %v1815
        %v2704 = vmul.f32 %v2640, %v1926
        %v2705 = vmul.f32 %v2641, %v1928
        %v2706 = vmul.f32 %v2642, %v1819
        %v2707 = vmul.f32 %v2643, %v1821
        %v2708 = vmul.f32 %v2644, %v1932
        %v2709 = vmul.f32 %v2645, %v1934
        %v2710 = vmul.f32 %v2646, %v1823
        %v2711 = vmul.f32 %v2647, %v1825
        %v2712 = vmul.f32 %v2648, %v1936
        %v2713 = vmul.f32 %v2649, %v1938
        %v2714 = vmul.f32 %v2650, %v1829
        %v2715 = vmul.f32 %v2651, %v1831
        %v2716 = vmul.f32 %v2652, %v1942
        %v2717 = vmul.f32 %v2653, %v1944
        %v2718 = vmul.f32 %v2654, %v1833
        %v2719 = vmul.f32 %v2655, %v1835
        %v2720 = vmul.f32 %v2656, %v1946
        %v2721 = vmul.f32 %v2657, %v1948
        %v2722 = vmul.f32 %v2658, %v1839
        %v2723 = vmul.f32 %v2659, %v1841
        %v2724 = vmul.f32 %v2660, %v1952
        %v2725 = vmul.f32 %v2661, %v1954
        %v2726 = vmul.f32 %v2662, %v1843
        %v2727 = vmul.f32 %v2663, %v1845
        %v2728 = vmul.f32 %v2664, %v1956
        %v2729 = vmul.f32 %v2665, %v1958
        %v2730 = vmul.f32 %v2666, %v1849
        %v2731 = vmul.f32 %v2667, %v1851
        %v2732 = vmul.f32 %v2668, %v1962
        %v2733 = vmul.f32 %v2669, %v1964
        %v2734 = vmul.f32 %v2670, %v1853
        %v2735 = vmul.f32 %v2671, %v1855
        %v2736 = vmul.f32 %v2672, %v1966
        %v2737 = vmul.f32 %v2673, %v1968
        %v2738 = vmul.f32 %v2674, %v1779
        %v2739 = vmul.f32 %v2675, %v1781
        %v2740 = vmul.f32 %v2676, %v1892
        %v2741 = vmul.f32 %v2677, %v1894
        %v2742 = vmul.f32 %v2678, %v1783
        %v2743 = vmul.f32 %v2679, %v1785
        %v2744 = vmul.f32 %v2680, %v1896
        %v2745 = vmul.f32 %v2681, %v1898
        %v2746 = vmul.f32 %v2682, %v1789
        %v2747 = vmul.f32 %v2683, %v1791
        %v2748 = vmul.f32 %v2684, %v1902
        %v2749 = vmul.f32 %v2685, %v1904
        %v2750 = vmul.f32 %v2686, %v1793
        %v2751 = vmul.f32 %v2687, %v1795
        %v2752 = vmul.f32 %v2688, %v1906
        %v2753 = vmul.f32 %v2689, %v1908
        %v2754 = vmul.f32 %v2690, %v1799
        %v2755 = vmul.f32 %v2691, %v1801
        %v2756 = vmul.f32 %v2692, %v1912
        %v2757 = vmul.f32 %v2693, %v1914
        %v2758 = vmul.f32 %v2694, %v1803
        %v2759 = vmul.f32 %v2695, %v1805
        %v2760 = vmul.f32 %v2696, %v1916
        %v2761 = vmul.f32 %v2697, %v1918
        %v2762 = vmul.f32 %v2698, %v1809
        %v2763 = vmul.f32 %v2699, %v1811
        %v2764 = vmul.f32 %v2700, %v1922
        %v2765 = vmul.f32 %v2701, %v1924
        %v2766 = vmul.f32 %v2702, %v1813
        %v2767 = vmul.f32 %v2703, %v1815
        %v2768 = vmul.f32 %v2704, %v1926
        %v2769 = vmul.f32 %v2705, %v1928
        %v2770 = vmul.f32 %v2706, %v1819
        %v2771 = vmul.f32 %v2707, %v1821
        %v2772 = vmul.f32 %v2708, %v1932
        %v2773 = vmul.f32 %v2709, %v1934
        %v2774 = vmul.f32 %v2710, %v1823
        %v2775 = vmul.f32 %v2711, %v1825
        %v2776 = vmul.f32 %v2712, %v1936
        %v2777 = vmul.f32 %v2713, %v1938
        %v2778 = vmul.f32 %v2714, %v1829
        %v2779 = vmul.f32 %v2715, %v1831
        %v2780 = vmul.f32 %v2716, %v1942
        %v2781 = vmul.f32 %v2717, %v1944
        %v2782 = vmul.f32 %v2718, %v1833
        %v2783 = vmul.f32 %v2719, %v1835
        %v2784 = vmul.f32 %v2720, %v1946
        %v2785 = vmul.f32 %v2721, %v1948
        %v2786 = vmul.f32 %v2722, %v1839
        %v2787 = vmul.f32 %v2723, %v1841
        %v2788 = vmul.f32 %v2724, %v1952
        %v2789 = vmul.f32 %v2725, %v1954
        %v2790 = vmul.f32 %v2726, %v1843
        %v2791 = vmul.f32 %v2727, %v1845
        %v2792 = vmul.f32 %v2728, %v1956
        %v2793 = vmul.f32 %v2729, %v1958
        %v2794 = vmul.f32 %v2730, %v1849
        %v2795 = vmul.f32 %v2731, %v1851
        %v2796 = vmul.f32 %v2732, %v1962
        %v2797 = vmul.f32 %v2733, %v1964
        %v2798 = vmul.f32 %v2734, %v1853
        %v2799 = vmul.f32 %v2735, %v1855
        %v2800 = vmul.f32 %v2736, %v1966
        %v2801 = vmul.f32 %v2737, %v1968
        %v2802 = vadd.f32 %v1779, %v2738
        %v2803 = vadd.f32 %v1781, %v2739
        %v2804 = vadd.f32 %v1892, %v2740
        %v2805 = vadd.f32 %v1894, %v2741
        %v2806 = vadd.f32 %v1783, %v2742
        %v2807 = vadd.f32 %v1785, %v2743
        %v2808 = vadd.f32 %v1896, %v2744
        %v2809 = vadd.f32 %v1898, %v2745
        %v2810 = vadd.f32 %v1789, %v2746
        %v2811 = vadd.f32 %v1791, %v2747
        %v2812 = vadd.f32 %v1902, %v2748
        %v2813 = vadd.f32 %v1904, %v2749
        %v2814 = vadd.f32 %v1793, %v2750
        %v2815 = vadd.f32 %v1795, %v2751
        %v2816 = vadd.f32 %v1906, %v2752
        %v2817 = vadd.f32 %v1908, %v2753
        %v2818 = vadd.f32 %v1799, %v2754
        %v2819 = vadd.f32 %v1801, %v2755
        %v2820 = vadd.f32 %v1912, %v2756
        %v2821 = vadd.f32 %v1914, %v2757
        %v2822 = vadd.f32 %v1803, %v2758
        %v2823 = vadd.f32 %v1805, %v2759
        %v2824 = vadd.f32 %v1916, %v2760
        %v2825 = vadd.f32 %v1918, %v2761
        %v2826 = vadd.f32 %v1809, %v2762
        %v2827 = vadd.f32 %v1811, %v2763
        %v2828 = vadd.f32 %v1922, %v2764
        %v2829 = vadd.f32 %v1924, %v2765
        %v2830 = vadd.f32 %v1813, %v2766
        %v2831 = vadd.f32 %v1815, %v2767
        %v2832 = vadd.f32 %v1926, %v2768
        %v2833 = vadd.f32 %v1928, %v2769
        %v2834 = vadd.f32 %v1819, %v2770
        %v2835 = vadd.f32 %v1821, %v2771
        %v2836 = vadd.f32 %v1932, %v2772
        %v2837 = vadd.f32 %v1934, %v2773
        %v2838 = vadd.f32 %v1823, %v2774
        %v2839 = vadd.f32 %v1825, %v2775
        %v2840 = vadd.f32 %v1936, %v2776
        %v2841 = vadd.f32 %v1938, %v2777
        %v2842 = vadd.f32 %v1829, %v2778
        %v2843 = vadd.f32 %v1831, %v2779
        %v2844 = vadd.f32 %v1942, %v2780
        %v2845 = vadd.f32 %v1944, %v2781
        %v2846 = vadd.f32 %v1833, %v2782
        %v2847 = vadd.f32 %v1835, %v2783
        %v2848 = vadd.f32 %v1946, %v2784
        %v2849 = vadd.f32 %v1948, %v2785
        %v2850 = vadd.f32 %v1839, %v2786
        %v2851 = vadd.f32 %v1841, %v2787
        %v2852 = vadd.f32 %v1952, %v2788
        %v2853 = vadd.f32 %v1954, %v2789
        %v2854 = vadd.f32 %v1843, %v2790
        %v2855 = vadd.f32 %v1845, %v2791
        %v2856 = vadd.f32 %v1956, %v2792
        %v2857 = vadd.f32 %v1958, %v2793
        %v2858 = vadd.f32 %v1849, %v2794
        %v2859 = vadd.f32 %v1851, %v2795
        %v2860 = vadd.f32 %v1962, %v2796
        %v2861 = vadd.f32 %v1964, %v2797
        %v2862 = vadd.f32 %v1853, %v2798
        %v2863 = vadd.f32 %v1855, %v2799
        %v2864 = vadd.f32 %v1966, %v2800
        %v2865 = vadd.f32 %v1968, %v2801
        %v2866 = vmul.f32 %v2802, 0.7978846
        %v2867 = vmul.f32 %v2803, 0.7978846
        %v2868 = vmul.f32 %v2804, 0.7978846
        %v2869 = vmul.f32 %v2805, 0.7978846
        %v2870 = vmul.f32 %v2806, 0.7978846
        %v2871 = vmul.f32 %v2807, 0.7978846
        %v2872 = vmul.f32 %v2808, 0.7978846
        %v2873 = vmul.f32 %v2809, 0.7978846
        %v2874 = vmul.f32 %v2810, 0.7978846
        %v2875 = vmul.f32 %v2811, 0.7978846
        %v2876 = vmul.f32 %v2812, 0.7978846
        %v2877 = vmul.f32 %v2813, 0.7978846
        %v2878 = vmul.f32 %v2814, 0.7978846
        %v2879 = vmul.f32 %v2815, 0.7978846
        %v2880 = vmul.f32 %v2816, 0.7978846
        %v2881 = vmul.f32 %v2817, 0.7978846
        %v2882 = vmul.f32 %v2818, 0.7978846
        %v2883 = vmul.f32 %v2819, 0.7978846
        %v2884 = vmul.f32 %v2820, 0.7978846
        %v2885 = vmul.f32 %v2821, 0.7978846
        %v2886 = vmul.f32 %v2822, 0.7978846
        %v2887 = vmul.f32 %v2823, 0.7978846
        %v2888 = vmul.f32 %v2824, 0.7978846
        %v2889 = vmul.f32 %v2825, 0.7978846
        %v2890 = vmul.f32 %v2826, 0.7978846
        %v2891 = vmul.f32 %v2827, 0.7978846
        %v2892 = vmul.f32 %v2828, 0.7978846
        %v2893 = vmul.f32 %v2829, 0.7978846
        %v2894 = vmul.f32 %v2830, 0.7978846
        %v2895 = vmul.f32 %v2831, 0.7978846
        %v2896 = vmul.f32 %v2832, 0.7978846
        %v2897 = vmul.f32 %v2833, 0.7978846
        %v2898 = vmul.f32 %v2834, 0.7978846
        %v2899 = vmul.f32 %v2835, 0.7978846
        %v2900 = vmul.f32 %v2836, 0.7978846
        %v2901 = vmul.f32 %v2837, 0.7978846
        %v2902 = vmul.f32 %v2838, 0.7978846
        %v2903 = vmul.f32 %v2839, 0.7978846
        %v2904 = vmul.f32 %v2840, 0.7978846
        %v2905 = vmul.f32 %v2841, 0.7978846
        %v2906 = vmul.f32 %v2842, 0.7978846
        %v2907 = vmul.f32 %v2843, 0.7978846
        %v2908 = vmul.f32 %v2844, 0.7978846
        %v2909 = vmul.f32 %v2845, 0.7978846
        %v2910 = vmul.f32 %v2846, 0.7978846
        %v2911 = vmul.f32 %v2847, 0.7978846
        %v2912 = vmul.f32 %v2848, 0.7978846
        %v2913 = vmul.f32 %v2849, 0.7978846
        %v2914 = vmul.f32 %v2850, 0.7978846
        %v2915 = vmul.f32 %v2851, 0.7978846
        %v2916 = vmul.f32 %v2852, 0.7978846
        %v2917 = vmul.f32 %v2853, 0.7978846
        %v2918 = vmul.f32 %v2854, 0.7978846
        %v2919 = vmul.f32 %v2855, 0.7978846
        %v2920 = vmul.f32 %v2856, 0.7978846
        %v2921 = vmul.f32 %v2857, 0.7978846
        %v2922 = vmul.f32 %v2858, 0.7978846
        %v2923 = vmul.f32 %v2859, 0.7978846
        %v2924 = vmul.f32 %v2860, 0.7978846
        %v2925 = vmul.f32 %v2861, 0.7978846
        %v2926 = vmul.f32 %v2862, 0.7978846
        %v2927 = vmul.f32 %v2863, 0.7978846
        %v2928 = vmul.f32 %v2864, 0.7978846
        %v2929 = vmul.f32 %v2865, 0.7978846
        %v2930 = vtanh.pop %v2866
        %v2931 = vtanh.pop %v2867
        %v2932 = vtanh.pop %v2868
        %v2933 = vtanh.pop %v2869
        %v2934 = vtanh.pop %v2870
        %v2935 = vtanh.pop %v2871
        %v2936 = vtanh.pop %v2872
        %v2937 = vtanh.pop %v2873
        %v2938 = vtanh.pop %v2874
        %v2939 = vtanh.pop %v2875
        %v2940 = vtanh.pop %v2876
        %v2941 = vtanh.pop %v2877
        %v2942 = vtanh.pop %v2878
        %v2943 = vtanh.pop %v2879
        %v2944 = vtanh.pop %v2880
        %v2945 = vtanh.pop %v2881
        %v2946 = vtanh.pop %v2882
        %v2947 = vtanh.pop %v2883
        %v2948 = vtanh.pop %v2884
        %v2949 = vtanh.pop %v2885
        %v2950 = vtanh.pop %v2886
        %v2951 = vtanh.pop %v2887
        %v2952 = vtanh.pop %v2888
        %v2953 = vtanh.pop %v2889
        %v2954 = vtanh.pop %v2890
        %v2955 = vtanh.pop %v2891
        %v2956 = vtanh.pop %v2892
        %v2957 = vtanh.pop %v2893
        %v2958 = vtanh.pop %v2894
        %v2959 = vtanh.pop %v2895
        %v2960 = vtanh.pop %v2896
        %v2961 = vtanh.pop %v2897
        %v2962 = vtanh.pop %v2898
        %v2963 = vtanh.pop %v2899
        %v2964 = vtanh.pop %v2900
        %v2965 = vtanh.pop %v2901
        %v2966 = vtanh.pop %v2902
        %v2967 = vtanh.pop %v2903
        %v2968 = vtanh.pop %v2904
        %v2969 = vtanh.pop %v2905
        %v2970 = vtanh.pop %v2906
        %v2971 = vtanh.pop %v2907
        %v2972 = vtanh.pop %v2908
        %v2973 = vtanh.pop %v2909
        %v2974 = vtanh.pop %v2910
        %v2975 = vtanh.pop %v2911
        %v2976 = vtanh.pop %v2912
        %v2977 = vtanh.pop %v2913
        %v2978 = vtanh.pop %v2914
        %v2979 = vtanh.pop %v2915
        %v2980 = vtanh.pop %v2916
        %v2981 = vtanh.pop %v2917
        %v2982 = vtanh.pop %v2918
        %v2983 = vtanh.pop %v2919
        %v2984 = vtanh.pop %v2920
        %v2985 = vtanh.pop %v2921
        %v2986 = vtanh.pop %v2922
        %v2987 = vtanh.pop %v2923
        %v2988 = vtanh.pop %v2924
        %v2989 = vtanh.pop %v2925
        %v2990 = vtanh.pop %v2926
        %v2991 = vtanh.pop %v2927
        %v2992 = vtanh.pop %v2928
        %v2993 = vtanh.pop %v2929
        %v2994 = vadd.f32 %v2930, 1.0
        %v2995 = vadd.f32 %v2931, 1.0
        %v2996 = vadd.f32 %v2932, 1.0
        %v2997 = vadd.f32 %v2933, 1.0
        %v2998 = vadd.f32 %v2934, 1.0
        %v2999 = vadd.f32 %v2935, 1.0
        %v3000 = vadd.f32 %v2936, 1.0
        %v3001 = vadd.f32 %v2937, 1.0
        %v3002 = vadd.f32 %v2938, 1.0
        %v3003 = vadd.f32 %v2939, 1.0
        %v3004 = vadd.f32 %v2940, 1.0
        %v3005 = vadd.f32 %v2941, 1.0
        %v3006 = vadd.f32 %v2942, 1.0
        %v3007 = vadd.f32 %v2943, 1.0
        %v3008 = vadd.f32 %v2944, 1.0
        %v3009 = vadd.f32 %v2945, 1.0
        %v3010 = vadd.f32 %v2946, 1.0
        %v3011 = vadd.f32 %v2947, 1.0
        %v3012 = vadd.f32 %v2948, 1.0
        %v3013 = vadd.f32 %v2949, 1.0
        %v3014 = vadd.f32 %v2950, 1.0
        %v3015 = vadd.f32 %v2951, 1.0
        %v3016 = vadd.f32 %v2952, 1.0
        %v3017 = vadd.f32 %v2953, 1.0
        %v3018 = vadd.f32 %v2954, 1.0
        %v3019 = vadd.f32 %v2955, 1.0
        %v3020 = vadd.f32 %v2956, 1.0
        %v3021 = vadd.f32 %v2957, 1.0
        %v3022 = vadd.f32 %v2958, 1.0
        %v3023 = vadd.f32 %v2959, 1.0
        %v3024 = vadd.f32 %v2960, 1.0
        %v3025 = vadd.f32 %v2961, 1.0
        %v3026 = vadd.f32 %v2962, 1.0
        %v3027 = vadd.f32 %v2963, 1.0
        %v3028 = vadd.f32 %v2964, 1.0
        %v3029 = vadd.f32 %v2965, 1.0
        %v3030 = vadd.f32 %v2966, 1.0
        %v3031 = vadd.f32 %v2967, 1.0
        %v3032 = vadd.f32 %v2968, 1.0
        %v3033 = vadd.f32 %v2969, 1.0
        %v3034 = vadd.f32 %v2970, 1.0
        %v3035 = vadd.f32 %v2971, 1.0
        %v3036 = vadd.f32 %v2972, 1.0
        %v3037 = vadd.f32 %v2973, 1.0
        %v3038 = vadd.f32 %v2974, 1.0
        %v3039 = vadd.f32 %v2975, 1.0
        %v3040 = vadd.f32 %v2976, 1.0
        %v3041 = vadd.f32 %v2977, 1.0
        %v3042 = vadd.f32 %v2978, 1.0
        %v3043 = vadd.f32 %v2979, 1.0
        %v3044 = vadd.f32 %v2980, 1.0
        %v3045 = vadd.f32 %v2981, 1.0
        %v3046 = vadd.f32 %v2982, 1.0
        %v3047 = vadd.f32 %v2983, 1.0
        %v3048 = vadd.f32 %v2984, 1.0
        %v3049 = vadd.f32 %v2985, 1.0
        %v3050 = vadd.f32 %v2986, 1.0
        %v3051 = vadd.f32 %v2987, 1.0
        %v3052 = vadd.f32 %v2988, 1.0
        %v3053 = vadd.f32 %v2989, 1.0
        %v3054 = vadd.f32 %v2990, 1.0
        %v3055 = vadd.f32 %v2991, 1.0
        %v3056 = vadd.f32 %v2992, 1.0
        %v3057 = vadd.f32 %v2993, 1.0
        %v3058 = vmul.f32 %v2546, %v2994
        %v3059 = vmul.f32 %v2547, %v2995
        %v3060 = vmul.f32 %v2548, %v2996
        %v3061 = vmul.f32 %v2549, %v2997
        %v3062 = vmul.f32 %v2550, %v2998
        %v3063 = vmul.f32 %v2551, %v2999
        %v3064 = vmul.f32 %v2552, %v3000
        %v3065 = vmul.f32 %v2553, %v3001
        %v3066 = vmul.f32 %v2554, %v3002
        %v3067 = vmul.f32 %v2555, %v3003
        %v3068 = vmul.f32 %v2556, %v3004
        %v3069 = vmul.f32 %v2557, %v3005
        %v3070 = vmul.f32 %v2558, %v3006
        %v3071 = vmul.f32 %v2559, %v3007
        %v3072 = vmul.f32 %v2560, %v3008
        %v3073 = vmul.f32 %v2561, %v3009
        %v3074 = vmul.f32 %v2562, %v3010
        %v3075 = vmul.f32 %v2563, %v3011
        %v3076 = vmul.f32 %v2564, %v3012
        %v3077 = vmul.f32 %v2565, %v3013
        %v3078 = vmul.f32 %v2566, %v3014
        %v3079 = vmul.f32 %v2567, %v3015
        %v3080 = vmul.f32 %v2568, %v3016
        %v3081 = vmul.f32 %v2569, %v3017
        %v3082 = vmul.f32 %v2570, %v3018
        %v3083 = vmul.f32 %v2571, %v3019
        %v3084 = vmul.f32 %v2572, %v3020
        %v3085 = vmul.f32 %v2573, %v3021
        %v3086 = vmul.f32 %v2574, %v3022
        %v3087 = vmul.f32 %v2575, %v3023
        %v3088 = vmul.f32 %v2576, %v3024
        %v3089 = vmul.f32 %v2577, %v3025
        %v3090 = vmul.f32 %v2578, %v3026
        %v3091 = vmul.f32 %v2579, %v3027
        %v3092 = vmul.f32 %v2580, %v3028
        %v3093 = vmul.f32 %v2581, %v3029
        %v3094 = vmul.f32 %v2582, %v3030
        %v3095 = vmul.f32 %v2583, %v3031
        %v3096 = vmul.f32 %v2584, %v3032
        %v3097 = vmul.f32 %v2585, %v3033
        %v3098 = vmul.f32 %v2586, %v3034
        %v3099 = vmul.f32 %v2587, %v3035
        %v3100 = vmul.f32 %v2588, %v3036
        %v3101 = vmul.f32 %v2589, %v3037
        %v3102 = vmul.f32 %v2590, %v3038
        %v3103 = vmul.f32 %v2591, %v3039
        %v3104 = vmul.f32 %v2592, %v3040
        %v3105 = vmul.f32 %v2593, %v3041
        %v3106 = vmul.f32 %v2594, %v3042
        %v3107 = vmul.f32 %v2595, %v3043
        %v3108 = vmul.f32 %v2596, %v3044
        %v3109 = vmul.f32 %v2597, %v3045
        %v3110 = vmul.f32 %v2598, %v3046
        %v3111 = vmul.f32 %v2599, %v3047
        %v3112 = vmul.f32 %v2600, %v3048
        %v3113 = vmul.f32 %v2601, %v3049
        %v3114 = vmul.f32 %v2602, %v3050
        %v3115 = vmul.f32 %v2603, %v3051
        %v3116 = vmul.f32 %v2604, %v3052
        %v3117 = vmul.f32 %v2605, %v3053
        %v3118 = vmul.f32 %v2606, %v3054
        %v3119 = vmul.f32 %v2607, %v3055
        %v3120 = vmul.f32 %v2608, %v3056
        %v3121 = vmul.f32 %v2609, %v3057
        %v3122 = vpack.c.bf16 %v2486, %v2482
        %v3123 = vpack.c.bf16 %v2487, %v2483
        %v3124 = vpack.c.bf16 %v2488, %v2484
        %v3125 = vpack.c.bf16 %v2489, %v2485
        %v3126 = vpack.c.bf16 %v2494, %v2490
        %v3127 = vpack.c.bf16 %v2495, %v2491
        %v3128 = vpack.c.bf16 %v2496, %v2492
        %v3129 = vpack.c.bf16 %v2497, %v2493
        %v3130 = vpack.c.bf16 %v2502, %v2498
        %v3131 = vpack.c.bf16 %v2503, %v2499
        %v3132 = vpack.c.bf16 %v2504, %v2500
        %v3133 = vpack.c.bf16 %v2505, %v2501
        %v3134 = vpack.c.bf16 %v2510, %v2506
        %v3135 = vpack.c.bf16 %v2511, %v2507
        %v3136 = vpack.c.bf16 %v2512, %v2508
        %v3137 = vpack.c.bf16 %v2513, %v2509
        %v3138 = vpack.c.bf16 %v2518, %v2514
        %v3139 = vpack.c.bf16 %v2519, %v2515
        %v3140 = vpack.c.bf16 %v2520, %v2516
        %v3141 = vpack.c.bf16 %v2521, %v2517
        %v3142 = vpack.c.bf16 %v2526, %v2522
        %v3143 = vpack.c.bf16 %v2527, %v2523
        %v3144 = vpack.c.bf16 %v2528, %v2524
        %v3145 = vpack.c.bf16 %v2529, %v2525
        %v3146 = vpack.c.bf16 %v2534, %v2530
        %v3147 = vpack.c.bf16 %v2535, %v2531
        %v3148 = vpack.c.bf16 %v2536, %v2532
        %v3149 = vpack.c.bf16 %v2537, %v2533
        %v3150 = vpack.c.bf16 %v2542, %v2538
        %v3151 = vpack.c.bf16 %v2543, %v2539
        %v3152 = vpack.c.bf16 %v2544, %v2540
        %v3153 = vpack.c.bf16 %v2545, %v2541
        %v3154 = vld [vmem:[#allocation9] sm:$0xf]
        %v3155 = vld [vmem:[#allocation9 + $0x4] sm:$0xf]
        %v3156 = vld [vmem:[#allocation9 + $0x8] sm:$0xf]
        %v3157 = vld [vmem:[#allocation9 + $0xc] sm:$0xf]
        %v3158 = vld [vmem:[#allocation9 + $0x10] sm:$0xf]
        %v3159 = vld [vmem:[#allocation9 + $0x14] sm:$0xf]
        %v3160 = vld [vmem:[#allocation9 + $0x18] sm:$0xf]
        %v3161 = vld [vmem:[#allocation9 + $0x1c] sm:$0xf]
        %v3162 = vld [vmem:[#allocation9 + $0x20] sm:$0xf]
        %v3163 = vld [vmem:[#allocation9 + $0x24] sm:$0xf]
        %v3164 = vld [vmem:[#allocation9 + $0x28] sm:$0xf]
        %v3165 = vld [vmem:[#allocation9 + $0x2c] sm:$0xf]
        %v3166 = vld [vmem:[#allocation9 + $0x30] sm:$0xf]
        %v3167 = vld [vmem:[#allocation9 + $0x34] sm:$0xf]
        %v3168 = vld [vmem:[#allocation9 + $0x38] sm:$0xf]
        %v3169 = vld [vmem:[#allocation9 + $0x3c] sm:$0xf]
        %v3170 = vld [vmem:[#allocation9 + $0x40] sm:$0xf]
        %v3171 = vld [vmem:[#allocation9 + $0x44] sm:$0xf]
        %v3172 = vld [vmem:[#allocation9 + $0x48] sm:$0xf]
        %v3173 = vld [vmem:[#allocation9 + $0x4c] sm:$0xf]
        %v3174 = vld [vmem:[#allocation9 + $0x50] sm:$0xf]
        %v3175 = vld [vmem:[#allocation9 + $0x54] sm:$0xf]
        %v3176 = vld [vmem:[#allocation9 + $0x58] sm:$0xf]
        %v3177 = vld [vmem:[#allocation9 + $0x5c] sm:$0xf]
        %v3178 = vld [vmem:[#allocation9 + $0x60] sm:$0xf]
        %v3179 = vld [vmem:[#allocation9 + $0x64] sm:$0xf]
        %v3180 = vld [vmem:[#allocation9 + $0x68] sm:$0xf]
        %v3181 = vld [vmem:[#allocation9 + $0x6c] sm:$0xf]
        %v3182 = vld [vmem:[#allocation9 + $0x70] sm:$0xf]
        %v3183 = vld [vmem:[#allocation9 + $0x74] sm:$0xf]
        %v3184 = vld [vmem:[#allocation9 + $0x78] sm:$0xf]
        %v3185 = vld [vmem:[#allocation9 + $0x7c] sm:$0xf]
        %v3186 = vld [vmem:[#allocation9 + $0x80] sm:$0xf]
        %v3187 = vld [vmem:[#allocation9 + $0x84] sm:$0xf]
        %v3188 = vld [vmem:[#allocation9 + $0x88] sm:$0xf]
        %v3189 = vld [vmem:[#allocation9 + $0x8c] sm:$0xf]
        %v3190 = vld [vmem:[#allocation9 + $0x90] sm:$0xf]
        %v3191 = vld [vmem:[#allocation9 + $0x94] sm:$0xf]
        %v3192 = vld [vmem:[#allocation9 + $0x98] sm:$0xf]
        %v3193 = vld [vmem:[#allocation9 + $0x9c] sm:$0xf]
        %v3194 = vld [vmem:[#allocation9 + $0xa0] sm:$0xf]
        %v3195 = vld [vmem:[#allocation9 + $0xa4] sm:$0xf]
        %v3196 = vld [vmem:[#allocation9 + $0xa8] sm:$0xf]
        %v3197 = vld [vmem:[#allocation9 + $0xac] sm:$0xf]
        %v3198 = vld [vmem:[#allocation9 + $0xb0] sm:$0xf]
        %v3199 = vld [vmem:[#allocation9 + $0xb4] sm:$0xf]
        %v3200 = vld [vmem:[#allocation9 + $0xb8] sm:$0xf]
        %v3201 = vld [vmem:[#allocation9 + $0xbc] sm:$0xf]
        %v3202 = vld [vmem:[#allocation9 + $0xc0] sm:$0xf]
        %v3203 = vld [vmem:[#allocation9 + $0xc4] sm:$0xf]
        %v3204 = vld [vmem:[#allocation9 + $0xc8] sm:$0xf]
        %v3205 = vld [vmem:[#allocation9 + $0xcc] sm:$0xf]
        %v3206 = vld [vmem:[#allocation9 + $0xd0] sm:$0xf]
        %v3207 = vld [vmem:[#allocation9 + $0xd4] sm:$0xf]
        %v3208 = vld [vmem:[#allocation9 + $0xd8] sm:$0xf]
        %v3209 = vld [vmem:[#allocation9 + $0xdc] sm:$0xf]
        %v3210 = vld [vmem:[#allocation9 + $0xe0] sm:$0xf]
        %v3211 = vld [vmem:[#allocation9 + $0xe4] sm:$0xf]
        %v3212 = vld [vmem:[#allocation9 + $0xe8] sm:$0xf]
        %v3213 = vld [vmem:[#allocation9 + $0xec] sm:$0xf]
        %v3214 = vld [vmem:[#allocation9 + $0xf0] sm:$0xf]
        %v3215 = vld [vmem:[#allocation9 + $0xf4] sm:$0xf]
        %v3216 = vld [vmem:[#allocation9 + $0xf8] sm:$0xf]
        %v3217 = vld [vmem:[#allocation9 + $0xfc] sm:$0xf]
        %v3218 = vld [vmem:[%s5] sm:$0x1]
        %v3220 = vlaneseq
        %v3221 = vshrl.u32 %v3220, 7
        %v3222 = vsub.s32 0, %v3221
        %v3223 = vrot.slane %v3218, %v3222
        %v3289 = vunpack.c.l.b16 %v3154
        %v3290 = vunpack.c.l.b16 %v3155
        %v3291 = vunpack.c.l.b16 %v3156
        %v3292 = vunpack.c.l.b16 %v3157
        %v3293 = vunpack.c.l.b16 %v3158
        %v3294 = vunpack.c.l.b16 %v3159
        %v3295 = vunpack.c.l.b16 %v3160
        %v3296 = vunpack.c.l.b16 %v3161
        %v3297 = vunpack.c.l.b16 %v3162
        %v3298 = vunpack.c.l.b16 %v3163
        %v3299 = vunpack.c.l.b16 %v3164
        %v3300 = vunpack.c.l.b16 %v3165
        %v3301 = vunpack.c.l.b16 %v3166
        %v3302 = vunpack.c.l.b16 %v3167
        %v3303 = vunpack.c.l.b16 %v3168
        %v3304 = vunpack.c.l.b16 %v3169
        %v3305 = vunpack.c.l.b16 %v3170
        %v3306 = vunpack.c.l.b16 %v3171
        %v3307 = vunpack.c.l.b16 %v3172
        %v3308 = vunpack.c.l.b16 %v3173
        %v3309 = vunpack.c.l.b16 %v3174
        %v3310 = vunpack.c.l.b16 %v3175
        %v3311 = vunpack.c.l.b16 %v3176
        %v3312 = vunpack.c.l.b16 %v3177
        %v3313 = vunpack.c.l.b16 %v3178
        %v3314 = vunpack.c.l.b16 %v3179
        %v3315 = vunpack.c.l.b16 %v3180
        %v3316 = vunpack.c.l.b16 %v3181
        %v3317 = vunpack.c.l.b16 %v3182
        %v3318 = vunpack.c.l.b16 %v3183
        %v3319 = vunpack.c.l.b16 %v3184
        %v3320 = vunpack.c.l.b16 %v3185
        %v3321 = vunpack.c.l.b16 %v3186
        %v3322 = vunpack.c.l.b16 %v3187
        %v3323 = vunpack.c.l.b16 %v3188
        %v3324 = vunpack.c.l.b16 %v3189
        %v3325 = vunpack.c.l.b16 %v3190
        %v3326 = vunpack.c.l.b16 %v3191
        %v3327 = vunpack.c.l.b16 %v3192
        %v3328 = vunpack.c.l.b16 %v3193
        %v3329 = vunpack.c.l.b16 %v3194
        %v3330 = vunpack.c.l.b16 %v3195
        %v3331 = vunpack.c.l.b16 %v3196
        %v3332 = vunpack.c.l.b16 %v3197
        %v3333 = vunpack.c.l.b16 %v3198
        %v3334 = vunpack.c.l.b16 %v3199
        %v3335 = vunpack.c.l.b16 %v3200
        %v3336 = vunpack.c.l.b16 %v3201
        %v3337 = vunpack.c.l.b16 %v3202
        %v3338 = vunpack.c.l.b16 %v3203
        %v3339 = vunpack.c.l.b16 %v3204
        %v3340 = vunpack.c.l.b16 %v3205
        %v3341 = vunpack.c.l.b16 %v3206
        %v3342 = vunpack.c.l.b16 %v3207
        %v3343 = vunpack.c.l.b16 %v3208
        %v3344 = vunpack.c.l.b16 %v3209
        %v3345 = vunpack.c.l.b16 %v3210
        %v3346 = vunpack.c.l.b16 %v3211
        %v3347 = vunpack.c.l.b16 %v3212
        %v3348 = vunpack.c.l.b16 %v3213
        %v3349 = vunpack.c.l.b16 %v3214
        %v3350 = vunpack.c.l.b16 %v3215
        %v3351 = vunpack.c.l.b16 %v3216
        %v3352 = vunpack.c.l.b16 %v3217
        %v3353 = vpack.c.b16 %v3290, %v3289
        %v3354 = vpack.c.b16 %v3292, %v3291
        %v3355 = vpack.c.b16 %v3294, %v3293
        %v3356 = vpack.c.b16 %v3296, %v3295
        %v3357 = vpack.c.b16 %v3298, %v3297
        %v3358 = vpack.c.b16 %v3300, %v3299
        %v3359 = vpack.c.b16 %v3302, %v3301
        %v3360 = vpack.c.b16 %v3304, %v3303
        %v3361 = vpack.c.b16 %v3306, %v3305
        %v3362 = vpack.c.b16 %v3308, %v3307
        %v3363 = vpack.c.b16 %v3310, %v3309
        %v3364 = vpack.c.b16 %v3312, %v3311
        %v3365 = vpack.c.b16 %v3314, %v3313
        %v3366 = vpack.c.b16 %v3316, %v3315
        %v3367 = vpack.c.b16 %v3318, %v3317
        %v3368 = vpack.c.b16 %v3320, %v3319
        %v3369 = vpack.c.b16 %v3322, %v3321
        %v3370 = vpack.c.b16 %v3324, %v3323
        %v3371 = vpack.c.b16 %v3326, %v3325
        %v3372 = vpack.c.b16 %v3328, %v3327
        %v3373 = vpack.c.b16 %v3330, %v3329
        %v3374 = vpack.c.b16 %v3332, %v3331
        %v3375 = vpack.c.b16 %v3334, %v3333
        %v3376 = vpack.c.b16 %v3336, %v3335
        %v3377 = vpack.c.b16 %v3338, %v3337
        %v3378 = vpack.c.b16 %v3340, %v3339
        %v3379 = vpack.c.b16 %v3342, %v3341
        %v3380 = vpack.c.b16 %v3344, %v3343
        %v3381 = vpack.c.b16 %v3346, %v3345
        %v3382 = vpack.c.b16 %v3348, %v3347
        %v3383 = vpack.c.b16 %v3350, %v3349
        %v3384 = vpack.c.b16 %v3352, %v3351
        %3417 = vmatprep.subr.bf16.mxu0 0
        %3418 = vmatpush1.bf16.msra.mxu0 %v3353
        %3419 = vmatprep.subr.bf16.mxu0 0
        %3420 = vmatpush1.bf16.msra.mxu0 %v3354
        %3421 = vmatprep.subr.bf16.mxu0 0
        %3422 = vmatpush1.bf16.msra.mxu0 %v3355
        %3423 = vmatprep.subr.bf16.mxu0 0
        %3424 = vmatpush1.bf16.msra.mxu0 %v3356
        %3425 = vmatprep.subr.bf16.mxu0 0
        %3426 = vmatpush1.bf16.msra.mxu0 %v3357
        %3427 = vmatprep.subr.bf16.mxu0 0
        %3428 = vmatpush1.bf16.msra.mxu0 %v3358
        %3429 = vmatprep.subr.bf16.mxu0 0
        %3430 = vmatpush1.bf16.msra.mxu0 %v3359
        %3431 = vmatprep.subr.bf16.mxu0 0
        %3432 = vmatpush1.bf16.msra.mxu0 %v3360
        %3433 = vmatprep.subr.bf16.mxu0 0
        %3434 = vmatpush1.bf16.msra.mxu0 %v3361
        %3435 = vmatprep.subr.bf16.mxu0 0
        %3436 = vmatpush1.bf16.msra.mxu0 %v3362
        %3437 = vmatprep.subr.bf16.mxu0 0
        %3438 = vmatpush1.bf16.msra.mxu0 %v3363
        %3439 = vmatprep.subr.bf16.mxu0 0
        %3440 = vmatpush1.bf16.msra.mxu0 %v3364
        %3441 = vmatprep.subr.bf16.mxu0 0
        %3442 = vmatpush1.bf16.msra.mxu0 %v3365
        %3443 = vmatprep.subr.bf16.mxu0 0
        %3444 = vmatpush1.bf16.msra.mxu0 %v3366
        %3445 = vmatprep.subr.bf16.mxu0 0
        %3446 = vmatpush1.bf16.msra.mxu0 %v3367
        %3447 = vmatprep.subr.bf16.mxu0 0
        %3448 = vmatpush1.bf16.msra.mxu0 %v3368
        %3449 = vmatprep.mubr.bf16.mxu0 %v3123
        %3450 = vmatmul.mubr.bf16.gmra.mrb[0].mxu0 %v3122
        %v3451 = vpop.f32.mrb[0].mxu0
        %v3452 = vadd.f32 %v3223, %v3451
        %v3453 = vpop.f32.mrb[0].mxu0
        %v3454 = vpop.f32.mrb[0].mxu0
        %v3455 = vadd.f32 %v3223, %v3454
        %v3456 = vpop.f32.mrb[0].mxu0
        %3457 = vmatprep.mubr.bf16.mxu0 %v3127
        %3458 = vmatmul.mubr.bf16.gmra.mrb[0].mxu0 %v3126
        %v3459 = vpop.f32.mrb[0].mxu0
        %v3460 = vadd.f32 %v3223, %v3459
        %v3461 = vpop.f32.mrb[0].mxu0
        %v3462 = vpop.f32.mrb[0].mxu0
        %v3463 = vadd.f32 %v3223, %v3462
        %v3464 = vpop.f32.mrb[0].mxu0
        %3465 = vmatprep.mubr.bf16.mxu0 %v3131
        %3466 = vmatmul.mubr.bf16.gmra.mrb[0].mxu0 %v3130
        %v3467 = vpop.f32.mrb[0].mxu0
        %v3468 = vadd.f32 %v3223, %v3467
        %v3469 = vpop.f32.mrb[0].mxu0
        %v3470 = vpop.f32.mrb[0].mxu0
        %v3471 = vadd.f32 %v3223, %v3470
        %v3472 = vpop.f32.mrb[0].mxu0
        %3473 = vmatprep.mubr.bf16.mxu0 %v3135
        %3474 = vmatmul.mubr.bf16.gmra.mrb[0].mxu0 %v3134
        %v3475 = vpop.f32.mrb[0].mxu0
        %v3476 = vadd.f32 %v3223, %v3475
        %v3477 = vpop.f32.mrb[0].mxu0
        %v3478 = vpop.f32.mrb[0].mxu0
        %v3479 = vadd.f32 %v3223, %v3478
        %v3480 = vpop.f32.mrb[0].mxu0
        %3481 = vmatprep.mubr.bf16.mxu0 %v3139
        %3482 = vmatmul.mubr.bf16.gmra.mrb[0].mxu0 %v3138
        %v3483 = vpop.f32.mrb[0].mxu0
        %v3484 = vadd.f32 %v3223, %v3483
        %v3485 = vpop.f32.mrb[0].mxu0
        %v3486 = vpop.f32.mrb[0].mxu0
        %v3487 = vadd.f32 %v3223, %v3486
        %v3488 = vpop.f32.mrb[0].mxu0
        %3489 = vmatprep.mubr.bf16.mxu0 %v3143
        %3490 = vmatmul.mubr.bf16.gmra.mrb[0].mxu0 %v3142
        %v3491 = vpop.f32.mrb[0].mxu0
        %v3492 = vadd.f32 %v3223, %v3491
        %v3493 = vpop.f32.mrb[0].mxu0
        %v3494 = vpop.f32.mrb[0].mxu0
        %v3495 = vadd.f32 %v3223, %v3494
        %v3496 = vpop.f32.mrb[0].mxu0
        %3497 = vmatprep.mubr.bf16.mxu0 %v3147
        %3498 = vmatmul.mubr.bf16.gmra.mrb[0].mxu0 %v3146
        %v3499 = vpop.f32.mrb[0].mxu0
        %v3500 = vadd.f32 %v3223, %v3499
        %v3501 = vpop.f32.mrb[0].mxu0
        %v3502 = vpop.f32.mrb[0].mxu0
        %v3503 = vadd.f32 %v3223, %v3502
        %v3504 = vpop.f32.mrb[0].mxu0
        %3505 = vmatprep.mubr.bf16.mxu0 %v3151
        %3506 = vmatmul.mubr.bf16.gmra.mrb[0].mxu0 %v3150
        %v3507 = vpop.f32.mrb[0].mxu0
        %v3508 = vadd.f32 %v3223, %v3507
        %v3509 = vpop.f32.mrb[0].mxu0
        %v3510 = vpop.f32.mrb[0].mxu0
        %v3511 = vadd.f32 %v3223, %v3510
        %v3512 = vpop.f32.mrb[0].mxu0
        %3513 = vdwg.mxu0
        %3514 = vmatprep.subr.bf16.mxu0 0
        %3515 = vmatpush1.bf16.msra.mxu0 %v3369
        %3516 = vmatprep.subr.bf16.mxu0 0
        %3517 = vmatpush1.bf16.msra.mxu0 %v3370
        %3518 = vmatprep.subr.bf16.mxu0 0
        %3519 = vmatpush1.bf16.msra.mxu0 %v3371
        %3520 = vmatprep.subr.bf16.mxu0 0
        %3521 = vmatpush1.bf16.msra.mxu0 %v3372
        %3522 = vmatprep.subr.bf16.mxu0 0
        %3523 = vmatpush1.bf16.msra.mxu0 %v3373
        %3524 = vmatprep.subr.bf16.mxu0 0
        %3525 = vmatpush1.bf16.msra.mxu0 %v3374
        %3526 = vmatprep.subr.bf16.mxu0 0
        %3527 = vmatpush1.bf16.msra.mxu0 %v3375
        %3528 = vmatprep.subr.bf16.mxu0 0
        %3529 = vmatpush1.bf16.msra.mxu0 %v3376
        %3530 = vmatprep.subr.bf16.mxu0 0
        %3531 = vmatpush1.bf16.msra.mxu0 %v3377
        %3532 = vmatprep.subr.bf16.mxu0 0
        %3533 = vmatpush1.bf16.msra.mxu0 %v3378
        %3534 = vmatprep.subr.bf16.mxu0 0
        %3535 = vmatpush1.bf16.msra.mxu0 %v3379
        %3536 = vmatprep.subr.bf16.mxu0 0
        %3537 = vmatpush1.bf16.msra.mxu0 %v3380
        %3538 = vmatprep.subr.bf16.mxu0 0
        %3539 = vmatpush1.bf16.msra.mxu0 %v3381
        %3540 = vmatprep.subr.bf16.mxu0 0
        %3541 = vmatpush1.bf16.msra.mxu0 %v3382
        %3542 = vmatprep.subr.bf16.mxu0 0
        %3543 = vmatpush1.bf16.msra.mxu0 %v3383
        %3544 = vmatprep.subr.bf16.mxu0 0
        %3545 = vmatpush1.bf16.msra.mxu0 %v3384
        %3546 = vmatprep.mubr.bf16.mxu0 %v3125
        %3547 = vmatmul.mubr.bf16.gmra.mrb[0].mxu0 %v3124
        %v3548 = vpop.f32.mrb[0].mxu0
        %v3549 = vadd.f32 %v3452, %v3548
        %v3550 = vpop.f32.mrb[0].mxu0
        %v3551 = vpop.f32.mrb[0].mxu0
        %v3552 = vadd.f32 %v3455, %v3551
        %v3553 = vpop.f32.mrb[0].mxu0
        %3554 = vmatprep.mubr.bf16.mxu0 %v3129
        %3555 = vmatmul.mubr.bf16.gmra.mrb[0].mxu0 %v3128
        %v3556 = vpop.f32.mrb[0].mxu0
        %v3557 = vadd.f32 %v3460, %v3556
        %v3558 = vpop.f32.mrb[0].mxu0
        %v3559 = vpop.f32.mrb[0].mxu0
        %v3560 = vadd.f32 %v3463, %v3559
        %v3561 = vpop.f32.mrb[0].mxu0
        %3562 = vmatprep.mubr.bf16.mxu0 %v3133
        %3563 = vmatmul.mubr.bf16.gmra.mrb[0].mxu0 %v3132
        %v3564 = vpop.f32.mrb[0].mxu0
        %v3565 = vadd.f32 %v3468, %v3564
        %v3566 = vpop.f32.mrb[0].mxu0
        %v3567 = vpop.f32.mrb[0].mxu0
        %v3568 = vadd.f32 %v3471, %v3567
        %v3569 = vpop.f32.mrb[0].mxu0
        %3570 = vmatprep.mubr.bf16.mxu0 %v3137
        %3571 = vmatmul.mubr.bf16.gmra.mrb[0].mxu0 %v3136
        %v3572 = vpop.f32.mrb[0].mxu0
        %v3573 = vadd.f32 %v3476, %v3572
        %v3574 = vpop.f32.mrb[0].mxu0
        %v3575 = vpop.f32.mrb[0].mxu0
        %v3576 = vadd.f32 %v3479, %v3575
        %v3577 = vpop.f32.mrb[0].mxu0
        %3578 = vmatprep.mubr.bf16.mxu0 %v3141
        %3579 = vmatmul.mubr.bf16.gmra.mrb[0].mxu0 %v3140
        %v3580 = vpop.f32.mrb[0].mxu0
        %v3581 = vadd.f32 %v3484, %v3580
        %v3582 = vpop.f32.mrb[0].mxu0
        %v3583 = vpop.f32.mrb[0].mxu0
        %v3584 = vadd.f32 %v3487, %v3583
        %v3585 = vpop.f32.mrb[0].mxu0
        %3586 = vmatprep.mubr.bf16.mxu0 %v3145
        %3587 = vmatmul.mubr.bf16.gmra.mrb[0].mxu0 %v3144
        %v3588 = vpop.f32.mrb[0].mxu0
        %v3589 = vadd.f32 %v3492, %v3588
        %v3590 = vpop.f32.mrb[0].mxu0
        %v3591 = vpop.f32.mrb[0].mxu0
        %v3592 = vadd.f32 %v3495, %v3591
        %v3593 = vpop.f32.mrb[0].mxu0
        %3594 = vmatprep.mubr.bf16.mxu0 %v3149
        %3595 = vmatmul.mubr.bf16.gmra.mrb[0].mxu0 %v3148
        %v3596 = vpop.f32.mrb[0].mxu0
        %v3597 = vadd.f32 %v3500, %v3596
        %v3598 = vpop.f32.mrb[0].mxu0
        %v3599 = vpop.f32.mrb[0].mxu0
        %v3600 = vadd.f32 %v3503, %v3599
        %v3601 = vpop.f32.mrb[0].mxu0
        %3602 = vmatprep.mubr.bf16.mxu0 %v3153
        %3603 = vmatmul.mubr.bf16.gmra.mrb[0].mxu0 %v3152
        %v3604 = vpop.f32.mrb[0].mxu0
        %v3605 = vadd.f32 %v3508, %v3604
        %v3606 = vpop.f32.mrb[0].mxu0
        %v3607 = vpop.f32.mrb[0].mxu0
        %v3608 = vadd.f32 %v3511, %v3607
        %v3609 = vpop.f32.mrb[0].mxu0
        %3610 = vdwg.mxu0
        %v3611 = vpack.c.bf16 %v3062, %v3058
        %v3612 = vpack.c.bf16 %v3063, %v3059
        %v3613 = vpack.c.bf16 %v3064, %v3060
        %v3614 = vpack.c.bf16 %v3065, %v3061
        %v3615 = vpack.c.bf16 %v3070, %v3066
        %v3616 = vpack.c.bf16 %v3071, %v3067
        %v3617 = vpack.c.bf16 %v3072, %v3068
        %v3618 = vpack.c.bf16 %v3073, %v3069
        %v3619 = vpack.c.bf16 %v3078, %v3074
        %v3620 = vpack.c.bf16 %v3079, %v3075
        %v3621 = vpack.c.bf16 %v3080, %v3076
        %v3622 = vpack.c.bf16 %v3081, %v3077
        %v3623 = vpack.c.bf16 %v3086, %v3082
        %v3624 = vpack.c.bf16 %v3087, %v3083
        %v3625 = vpack.c.bf16 %v3088, %v3084
        %v3626 = vpack.c.bf16 %v3089, %v3085
        %v3627 = vpack.c.bf16 %v3094, %v3090
        %v3628 = vpack.c.bf16 %v3095, %v3091
        %v3629 = vpack.c.bf16 %v3096, %v3092
        %v3630 = vpack.c.bf16 %v3097, %v3093
        %v3631 = vpack.c.bf16 %v3102, %v3098
        %v3632 = vpack.c.bf16 %v3103, %v3099
        %v3633 = vpack.c.bf16 %v3104, %v3100
        %v3634 = vpack.c.bf16 %v3105, %v3101
        %v3635 = vpack.c.bf16 %v3110, %v3106
        %v3636 = vpack.c.bf16 %v3111, %v3107
        %v3637 = vpack.c.bf16 %v3112, %v3108
        %v3638 = vpack.c.bf16 %v3113, %v3109
        %v3639 = vpack.c.bf16 %v3118, %v3114
        %v3640 = vpack.c.bf16 %v3119, %v3115
        %v3641 = vpack.c.bf16 %v3120, %v3116
        %v3642 = vpack.c.bf16 %v3121, %v3117
        %v3643 = vld [vmem:[#allocation11] sm:$0xf]
        %v3644 = vld [vmem:[#allocation11 + $0x4] sm:$0xf]
        %v3645 = vld [vmem:[#allocation11 + $0x8] sm:$0xf]
        %v3646 = vld [vmem:[#allocation11 + $0xc] sm:$0xf]
        %v3647 = vld [vmem:[#allocation11 + $0x10] sm:$0xf]
        %v3648 = vld [vmem:[#allocation11 + $0x14] sm:$0xf]
        %v3649 = vld [vmem:[#allocation11 + $0x18] sm:$0xf]
        %v3650 = vld [vmem:[#allocation11 + $0x1c] sm:$0xf]
        %v3651 = vld [vmem:[#allocation11 + $0x20] sm:$0xf]
        %v3652 = vld [vmem:[#allocation11 + $0x24] sm:$0xf]
        %v3653 = vld [vmem:[#allocation11 + $0x28] sm:$0xf]
        %v3654 = vld [vmem:[#allocation11 + $0x2c] sm:$0xf]
        %v3655 = vld [vmem:[#allocation11 + $0x30] sm:$0xf]
        %v3656 = vld [vmem:[#allocation11 + $0x34] sm:$0xf]
        %v3657 = vld [vmem:[#allocation11 + $0x38] sm:$0xf]
        %v3658 = vld [vmem:[#allocation11 + $0x3c] sm:$0xf]
        %v3659 = vld [vmem:[#allocation11 + $0x40] sm:$0xf]
        %v3660 = vld [vmem:[#allocation11 + $0x44] sm:$0xf]
        %v3661 = vld [vmem:[#allocation11 + $0x48] sm:$0xf]
        %v3662 = vld [vmem:[#allocation11 + $0x4c] sm:$0xf]
        %v3663 = vld [vmem:[#allocation11 + $0x50] sm:$0xf]
        %v3664 = vld [vmem:[#allocation11 + $0x54] sm:$0xf]
        %v3665 = vld [vmem:[#allocation11 + $0x58] sm:$0xf]
        %v3666 = vld [vmem:[#allocation11 + $0x5c] sm:$0xf]
        %v3667 = vld [vmem:[#allocation11 + $0x60] sm:$0xf]
        %v3668 = vld [vmem:[#allocation11 + $0x64] sm:$0xf]
        %v3669 = vld [vmem:[#allocation11 + $0x68] sm:$0xf]
        %v3670 = vld [vmem:[#allocation11 + $0x6c] sm:$0xf]
        %v3671 = vld [vmem:[#allocation11 + $0x70] sm:$0xf]
        %v3672 = vld [vmem:[#allocation11 + $0x74] sm:$0xf]
        %v3673 = vld [vmem:[#allocation11 + $0x78] sm:$0xf]
        %v3674 = vld [vmem:[#allocation11 + $0x7c] sm:$0xf]
        %v3675 = vld [vmem:[#allocation11 + $0x80] sm:$0xf]
        %v3676 = vld [vmem:[#allocation11 + $0x84] sm:$0xf]
        %v3677 = vld [vmem:[#allocation11 + $0x88] sm:$0xf]
        %v3678 = vld [vmem:[#allocation11 + $0x8c] sm:$0xf]
        %v3679 = vld [vmem:[#allocation11 + $0x90] sm:$0xf]
        %v3680 = vld [vmem:[#allocation11 + $0x94] sm:$0xf]
        %v3681 = vld [vmem:[#allocation11 + $0x98] sm:$0xf]
        %v3682 = vld [vmem:[#allocation11 + $0x9c] sm:$0xf]
        %v3683 = vld [vmem:[#allocation11 + $0xa0] sm:$0xf]
        %v3684 = vld [vmem:[#allocation11 + $0xa4] sm:$0xf]
        %v3685 = vld [vmem:[#allocation11 + $0xa8] sm:$0xf]
        %v3686 = vld [vmem:[#allocation11 + $0xac] sm:$0xf]
        %v3687 = vld [vmem:[#allocation11 + $0xb0] sm:$0xf]
        %v3688 = vld [vmem:[#allocation11 + $0xb4] sm:$0xf]
        %v3689 = vld [vmem:[#allocation11 + $0xb8] sm:$0xf]
        %v3690 = vld [vmem:[#allocation11 + $0xbc] sm:$0xf]
        %v3691 = vld [vmem:[#allocation11 + $0xc0] sm:$0xf]
        %v3692 = vld [vmem:[#allocation11 + $0xc4] sm:$0xf]
        %v3693 = vld [vmem:[#allocation11 + $0xc8] sm:$0xf]
        %v3694 = vld [vmem:[#allocation11 + $0xcc] sm:$0xf]
        %v3695 = vld [vmem:[#allocation11 + $0xd0] sm:$0xf]
        %v3696 = vld [vmem:[#allocation11 + $0xd4] sm:$0xf]
        %v3697 = vld [vmem:[#allocation11 + $0xd8] sm:$0xf]
        %v3698 = vld [vmem:[#allocation11 + $0xdc] sm:$0xf]
        %v3699 = vld [vmem:[#allocation11 + $0xe0] sm:$0xf]
        %v3700 = vld [vmem:[#allocation11 + $0xe4] sm:$0xf]
        %v3701 = vld [vmem:[#allocation11 + $0xe8] sm:$0xf]
        %v3702 = vld [vmem:[#allocation11 + $0xec] sm:$0xf]
        %v3703 = vld [vmem:[#allocation11 + $0xf0] sm:$0xf]
        %v3704 = vld [vmem:[#allocation11 + $0xf4] sm:$0xf]
        %v3705 = vld [vmem:[#allocation11 + $0xf8] sm:$0xf]
        %v3706 = vld [vmem:[#allocation11 + $0xfc] sm:$0xf]
        %v3707 = vld [vmem:[%s7] sm:$0x1]
        %v3709 = vlaneseq
        %v3710 = vshrl.u32 %v3709, 7
        %v3711 = vsub.s32 0, %v3710
        %v3712 = vrot.slane %v3707, %v3711
        %v3778 = vunpack.c.l.b16 %v3643
        %v3779 = vunpack.c.l.b16 %v3644
        %v3780 = vunpack.c.l.b16 %v3645
        %v3781 = vunpack.c.l.b16 %v3646
        %v3782 = vunpack.c.l.b16 %v3647
        %v3783 = vunpack.c.l.b16 %v3648
        %v3784 = vunpack.c.l.b16 %v3649
        %v3785 = vunpack.c.l.b16 %v3650
        %v3786 = vunpack.c.l.b16 %v3651
        %v3787 = vunpack.c.l.b16 %v3652
        %v3788 = vunpack.c.l.b16 %v3653
        %v3789 = vunpack.c.l.b16 %v3654
        %v3790 = vunpack.c.l.b16 %v3655
        %v3791 = vunpack.c.l.b16 %v3656
        %v3792 = vunpack.c.l.b16 %v3657
        %v3793 = vunpack.c.l.b16 %v3658
        %v3794 = vunpack.c.l.b16 %v3659
        %v3795 = vunpack.c.l.b16 %v3660
        %v3796 = vunpack.c.l.b16 %v3661
        %v3797 = vunpack.c.l.b16 %v3662
        %v3798 = vunpack.c.l.b16 %v3663
        %v3799 = vunpack.c.l.b16 %v3664
        %v3800 = vunpack.c.l.b16 %v3665
        %v3801 = vunpack.c.l.b16 %v3666
        %v3802 = vunpack.c.l.b16 %v3667
        %v3803 = vunpack.c.l.b16 %v3668
        %v3804 = vunpack.c.l.b16 %v3669
        %v3805 = vunpack.c.l.b16 %v3670
        %v3806 = vunpack.c.l.b16 %v3671
        %v3807 = vunpack.c.l.b16 %v3672
        %v3808 = vunpack.c.l.b16 %v3673
        %v3809 = vunpack.c.l.b16 %v3674
        %v3810 = vunpack.c.l.b16 %v3675
        %v3811 = vunpack.c.l.b16 %v3676
        %v3812 = vunpack.c.l.b16 %v3677
        %v3813 = vunpack.c.l.b16 %v3678
        %v3814 = vunpack.c.l.b16 %v3679
        %v3815 = vunpack.c.l.b16 %v3680
        %v3816 = vunpack.c.l.b16 %v3681
        %v3817 = vunpack.c.l.b16 %v3682
        %v3818 = vunpack.c.l.b16 %v3683
        %v3819 = vunpack.c.l.b16 %v3684
        %v3820 = vunpack.c.l.b16 %v3685
        %v3821 = vunpack.c.l.b16 %v3686
        %v3822 = vunpack.c.l.b16 %v3687
        %v3823 = vunpack.c.l.b16 %v3688
        %v3824 = vunpack.c.l.b16 %v3689
        %v3825 = vunpack.c.l.b16 %v3690
        %v3826 = vunpack.c.l.b16 %v3691
        %v3827 = vunpack.c.l.b16 %v3692
        %v3828 = vunpack.c.l.b16 %v3693
        %v3829 = vunpack.c.l.b16 %v3694
        %v3830 = vunpack.c.l.b16 %v3695
        %v3831 = vunpack.c.l.b16 %v3696
        %v3832 = vunpack.c.l.b16 %v3697
        %v3833 = vunpack.c.l.b16 %v3698
        %v3834 = vunpack.c.l.b16 %v3699
        %v3835 = vunpack.c.l.b16 %v3700
        %v3836 = vunpack.c.l.b16 %v3701
        %v3837 = vunpack.c.l.b16 %v3702
        %v3838 = vunpack.c.l.b16 %v3703
        %v3839 = vunpack.c.l.b16 %v3704
        %v3840 = vunpack.c.l.b16 %v3705
        %v3841 = vunpack.c.l.b16 %v3706
        %v3842 = vpack.c.b16 %v3779, %v3778
        %v3843 = vpack.c.b16 %v3781, %v3780
        %v3844 = vpack.c.b16 %v3783, %v3782
        %v3845 = vpack.c.b16 %v3785, %v3784
        %v3846 = vpack.c.b16 %v3787, %v3786
        %v3847 = vpack.c.b16 %v3789, %v3788
        %v3848 = vpack.c.b16 %v3791, %v3790
        %v3849 = vpack.c.b16 %v3793, %v3792
        %v3850 = vpack.c.b16 %v3795, %v3794
        %v3851 = vpack.c.b16 %v3797, %v3796
        %v3852 = vpack.c.b16 %v3799, %v3798
        %v3853 = vpack.c.b16 %v3801, %v3800
        %v3854 = vpack.c.b16 %v3803, %v3802
        %v3855 = vpack.c.b16 %v3805, %v3804
        %v3856 = vpack.c.b16 %v3807, %v3806
        %v3857 = vpack.c.b16 %v3809, %v3808
        %v3858 = vpack.c.b16 %v3811, %v3810
        %v3859 = vpack.c.b16 %v3813, %v3812
        %v3860 = vpack.c.b16 %v3815, %v3814
        %v3861 = vpack.c.b16 %v3817, %v3816
        %v3862 = vpack.c.b16 %v3819, %v3818
        %v3863 = vpack.c.b16 %v3821, %v3820
        %v3864 = vpack.c.b16 %v3823, %v3822
        %v3865 = vpack.c.b16 %v3825, %v3824
        %v3866 = vpack.c.b16 %v3827, %v3826
        %v3867 = vpack.c.b16 %v3829, %v3828
        %v3868 = vpack.c.b16 %v3831, %v3830
        %v3869 = vpack.c.b16 %v3833, %v3832
        %v3870 = vpack.c.b16 %v3835, %v3834
        %v3871 = vpack.c.b16 %v3837, %v3836
        %v3872 = vpack.c.b16 %v3839, %v3838
        %v3873 = vpack.c.b16 %v3841, %v3840
        %3906 = vmatprep.subr.bf16.mxu0 0
        %3907 = vmatpush1.bf16.msra.mxu0 %v3842
        %3908 = vmatprep.subr.bf16.mxu0 0
        %3909 = vmatpush1.bf16.msra.mxu0 %v3843
        %3910 = vmatprep.subr.bf16.mxu0 0
        %3911 = vmatpush1.bf16.msra.mxu0 %v3844
        %3912 = vmatprep.subr.bf16.mxu0 0
        %3913 = vmatpush1.bf16.msra.mxu0 %v3845
        %3914 = vmatprep.subr.bf16.mxu0 0
        %3915 = vmatpush1.bf16.msra.mxu0 %v3846
        %3916 = vmatprep.subr.bf16.mxu0 0
        %3917 = vmatpush1.bf16.msra.mxu0 %v3847
        %3918 = vmatprep.subr.bf16.mxu0 0
        %3919 = vmatpush1.bf16.msra.mxu0 %v3848
        %3920 = vmatprep.subr.bf16.mxu0 0
        %3921 = vmatpush1.bf16.msra.mxu0 %v3849
        %3922 = vmatprep.subr.bf16.mxu0 0
        %3923 = vmatpush1.bf16.msra.mxu0 %v3850
        %3924 = vmatprep.subr.bf16.mxu0 0
        %3925 = vmatpush1.bf16.msra.mxu0 %v3851
        %3926 = vmatprep.subr.bf16.mxu0 0
        %3927 = vmatpush1.bf16.msra.mxu0 %v3852
        %3928 = vmatprep.subr.bf16.mxu0 0
        %3929 = vmatpush1.bf16.msra.mxu0 %v3853
        %3930 = vmatprep.subr.bf16.mxu0 0
        %3931 = vmatpush1.bf16.msra.mxu0 %v3854
        %3932 = vmatprep.subr.bf16.mxu0 0
        %3933 = vmatpush1.bf16.msra.mxu0 %v3855
        %3934 = vmatprep.subr.bf16.mxu0 0
        %3935 = vmatpush1.bf16.msra.mxu0 %v3856
        %3936 = vmatprep.subr.bf16.mxu0 0
        %3937 = vmatpush1.bf16.msra.mxu0 %v3857
        %3938 = vmatprep.mubr.bf16.mxu0 %v3612
        %3939 = vmatmul.mubr.bf16.gmra.mrb[0].mxu0 %v3611
        %v3940 = vpop.f32.mrb[0].mxu0
        %v3941 = vadd.f32 %v3712, %v3940
        %v3942 = vpop.f32.mrb[0].mxu0
        %v3943 = vpop.f32.mrb[0].mxu0
        %v3944 = vadd.f32 %v3712, %v3943
        %v3945 = vpop.f32.mrb[0].mxu0
        %3946 = vmatprep.mubr.bf16.mxu0 %v3616
        %3947 = vmatmul.mubr.bf16.gmra.mrb[0].mxu0 %v3615
        %v3948 = vpop.f32.mrb[0].mxu0
        %v3949 = vadd.f32 %v3712, %v3948
        %v3950 = vpop.f32.mrb[0].mxu0
        %v3951 = vpop.f32.mrb[0].mxu0
        %v3952 = vadd.f32 %v3712, %v3951
        %v3953 = vpop.f32.mrb[0].mxu0
        %3954 = vmatprep.mubr.bf16.mxu0 %v3620
        %3955 = vmatmul.mubr.bf16.gmra.mrb[0].mxu0 %v3619
        %v3956 = vpop.f32.mrb[0].mxu0
        %v3957 = vadd.f32 %v3712, %v3956
        %v3958 = vpop.f32.mrb[0].mxu0
        %v3959 = vpop.f32.mrb[0].mxu0
        %v3960 = vadd.f32 %v3712, %v3959
        %v3961 = vpop.f32.mrb[0].mxu0
        %3962 = vmatprep.mubr.bf16.mxu0 %v3624
        %3963 = vmatmul.mubr.bf16.gmra.mrb[0].mxu0 %v3623
        %v3964 = vpop.f32.mrb[0].mxu0
        %v3965 = vadd.f32 %v3712, %v3964
        %v3966 = vpop.f32.mrb[0].mxu0
        %v3967 = vpop.f32.mrb[0].mxu0
        %v3968 = vadd.f32 %v3712, %v3967
        %v3969 = vpop.f32.mrb[0].mxu0
        %3970 = vmatprep.mubr.bf16.mxu0 %v3628
        %3971 = vmatmul.mubr.bf16.gmra.mrb[0].mxu0 %v3627
        %v3972 = vpop.f32.mrb[0].mxu0
        %v3973 = vadd.f32 %v3712, %v3972
        %v3974 = vpop.f32.mrb[0].mxu0
        %v3975 = vpop.f32.mrb[0].mxu0
        %v3976 = vadd.f32 %v3712, %v3975
        %v3977 = vpop.f32.mrb[0].mxu0
        %3978 = vmatprep.mubr.bf16.mxu0 %v3632
        %3979 = vmatmul.mubr.bf16.gmra.mrb[0].mxu0 %v3631
        %v3980 = vpop.f32.mrb[0].mxu0
        %v3981 = vadd.f32 %v3712, %v3980
        %v3982 = vpop.f32.mrb[0].mxu0
        %v3983 = vpop.f32.mrb[0].mxu0
        %v3984 = vadd.f32 %v3712, %v3983
        %v3985 = vpop.f32.mrb[0].mxu0
        %3986 = vmatprep.mubr.bf16.mxu0 %v3636
        %3987 = vmatmul.mubr.bf16.gmra.mrb[0].mxu0 %v3635
        %v3988 = vpop.f32.mrb[0].mxu0
        %v3989 = vadd.f32 %v3712, %v3988
        %v3990 = vpop.f32.mrb[0].mxu0
        %v3991 = vpop.f32.mrb[0].mxu0
        %v3992 = vadd.f32 %v3712, %v3991
        %v3993 = vpop.f32.mrb[0].mxu0
        %3994 = vmatprep.mubr.bf16.mxu0 %v3640
        %3995 = vmatmul.mubr.bf16.gmra.mrb[0].mxu0 %v3639
        %v3996 = vpop.f32.mrb[0].mxu0
        %v3997 = vadd.f32 %v3712, %v3996
        %v3998 = vpop.f32.mrb[0].mxu0
        %v3999 = vpop.f32.mrb[0].mxu0
        %v4000 = vadd.f32 %v3712, %v3999
        %v4001 = vpop.f32.mrb[0].mxu0
        %4002 = vdwg.mxu0
        %4003 = vmatprep.subr.bf16.mxu0 0
        %4004 = vmatpush1.bf16.msra.mxu0 %v3858
        %4005 = vmatprep.subr.bf16.mxu0 0
        %4006 = vmatpush1.bf16.msra.mxu0 %v3859
        %4007 = vmatprep.subr.bf16.mxu0 0
        %4008 = vmatpush1.bf16.msra.mxu0 %v3860
        %4009 = vmatprep.subr.bf16.mxu0 0
        %4010 = vmatpush1.bf16.msra.mxu0 %v3861
        %4011 = vmatprep.subr.bf16.mxu0 0
        %4012 = vmatpush1.bf16.msra.mxu0 %v3862
        %4013 = vmatprep.subr.bf16.mxu0 0
        %4014 = vmatpush1.bf16.msra.mxu0 %v3863
        %4015 = vmatprep.subr.bf16.mxu0 0
        %4016 = vmatpush1.bf16.msra.mxu0 %v3864
        %4017 = vmatprep.subr.bf16.mxu0 0
        %4018 = vmatpush1.bf16.msra.mxu0 %v3865
        %4019 = vmatprep.subr.bf16.mxu0 0
        %4020 = vmatpush1.bf16.msra.mxu0 %v3866
        %4021 = vmatprep.subr.bf16.mxu0 0
        %4022 = vmatpush1.bf16.msra.mxu0 %v3867
        %4023 = vmatprep.subr.bf16.mxu0 0
        %4024 = vmatpush1.bf16.msra.mxu0 %v3868
        %4025 = vmatprep.subr.bf16.mxu0 0
        %4026 = vmatpush1.bf16.msra.mxu0 %v3869
        %4027 = vmatprep.subr.bf16.mxu0 0
        %4028 = vmatpush1.bf16.msra.mxu0 %v3870
        %4029 = vmatprep.subr.bf16.mxu0 0
        %4030 = vmatpush1.bf16.msra.mxu0 %v3871
        %4031 = vmatprep.subr.bf16.mxu0 0
        %4032 = vmatpush1.bf16.msra.mxu0 %v3872
        %4033 = vmatprep.subr.bf16.mxu0 0
        %4034 = vmatpush1.bf16.msra.mxu0 %v3873
        %4035 = vmatprep.mubr.bf16.mxu0 %v3614
        %4036 = vmatmul.mubr.bf16.gmra.mrb[0].mxu0 %v3613
        %v4037 = vpop.f32.mrb[0].mxu0
        %v4038 = vadd.f32 %v3941, %v4037
        %v4039 = vpop.f32.mrb[0].mxu0
        %v4040 = vpop.f32.mrb[0].mxu0
        %v4041 = vadd.f32 %v3944, %v4040
        %v4042 = vpop.f32.mrb[0].mxu0
        %4043 = vmatprep.mubr.bf16.mxu0 %v3618
        %4044 = vmatmul.mubr.bf16.gmra.mrb[0].mxu0 %v3617
        %v4045 = vpop.f32.mrb[0].mxu0
        %v4046 = vadd.f32 %v3949, %v4045
        %v4047 = vpop.f32.mrb[0].mxu0
        %v4048 = vpop.f32.mrb[0].mxu0
        %v4049 = vadd.f32 %v3952, %v4048
        %v4050 = vpop.f32.mrb[0].mxu0
        %4051 = vmatprep.mubr.bf16.mxu0 %v3622
        %4052 = vmatmul.mubr.bf16.gmra.mrb[0].mxu0 %v3621
        %v4053 = vpop.f32.mrb[0].mxu0
        %v4054 = vadd.f32 %v3957, %v4053
        %v4055 = vpop.f32.mrb[0].mxu0
        %v4056 = vpop.f32.mrb[0].mxu0
        %v4057 = vadd.f32 %v3960, %v4056
        %v4058 = vpop.f32.mrb[0].mxu0
        %4059 = vmatprep.mubr.bf16.mxu0 %v3626
        %4060 = vmatmul.mubr.bf16.gmra.mrb[0].mxu0 %v3625
        %v4061 = vpop.f32.mrb[0].mxu0
        %v4062 = vadd.f32 %v3965, %v4061
        %v4063 = vpop.f32.mrb[0].mxu0
        %v4064 = vpop.f32.mrb[0].mxu0
        %v4065 = vadd.f32 %v3968, %v4064
        %v4066 = vpop.f32.mrb[0].mxu0
        %4067 = vmatprep.mubr.bf16.mxu0 %v3630
        %4068 = vmatmul.mubr.bf16.gmra.mrb[0].mxu0 %v3629
        %v4069 = vpop.f32.mrb[0].mxu0
        %v4070 = vadd.f32 %v3973, %v4069
        %v4071 = vpop.f32.mrb[0].mxu0
        %v4072 = vpop.f32.mrb[0].mxu0
        %v4073 = vadd.f32 %v3976, %v4072
        %v4074 = vpop.f32.mrb[0].mxu0
        %4075 = vmatprep.mubr.bf16.mxu0 %v3634
        %4076 = vmatmul.mubr.bf16.gmra.mrb[0].mxu0 %v3633
        %v4077 = vpop.f32.mrb[0].mxu0
        %v4078 = vadd.f32 %v3981, %v4077
        %v4079 = vpop.f32.mrb[0].mxu0
        %v4080 = vpop.f32.mrb[0].mxu0
        %v4081 = vadd.f32 %v3984, %v4080
        %v4082 = vpop.f32.mrb[0].mxu0
        %4083 = vmatprep.mubr.bf16.mxu0 %v3638
        %4084 = vmatmul.mubr.bf16.gmra.mrb[0].mxu0 %v3637
        %v4085 = vpop.f32.mrb[0].mxu0
        %v4086 = vadd.f32 %v3989, %v4085
        %v4087 = vpop.f32.mrb[0].mxu0
        %v4088 = vpop.f32.mrb[0].mxu0
        %v4089 = vadd.f32 %v3992, %v4088
        %v4090 = vpop.f32.mrb[0].mxu0
        %4091 = vmatprep.mubr.bf16.mxu0 %v3642
        %4092 = vmatmul.mubr.bf16.gmra.mrb[0].mxu0 %v3641
        %v4093 = vpop.f32.mrb[0].mxu0
        %v4094 = vadd.f32 %v3997, %v4093
        %v4095 = vpop.f32.mrb[0].mxu0
        %v4096 = vpop.f32.mrb[0].mxu0
        %v4097 = vadd.f32 %v4000, %v4096
        %v4098 = vpop.f32.mrb[0].mxu0
        %4099 = vdwg.mxu0
        %v4100 = vmul.f32 %v4038, %v4038
        %v4101 = vmul.f32 %v4041, %v4041
        %v4102 = vmul.f32 %v4046, %v4046
        %v4103 = vmul.f32 %v4049, %v4049
        %v4104 = vmul.f32 %v4054, %v4054
        %v4105 = vmul.f32 %v4057, %v4057
        %v4106 = vmul.f32 %v4062, %v4062
        %v4107 = vmul.f32 %v4065, %v4065
        %v4108 = vmul.f32 %v4070, %v4070
        %v4109 = vmul.f32 %v4073, %v4073
        %v4110 = vmul.f32 %v4078, %v4078
        %v4111 = vmul.f32 %v4081, %v4081
        %v4112 = vmul.f32 %v4086, %v4086
        %v4113 = vmul.f32 %v4089, %v4089
        %v4114 = vmul.f32 %v4094, %v4094
        %v4115 = vmul.f32 %v4097, %v4097
        %4116 = vadd.xlane.f32.xlu0 %v4100
        %v4117 = vpop.xlane.xlu0 %4116
        %4118 = vadd.xlane.f32.xlu0 %v4101
        %v4119 = vpop.xlane.xlu0 %4118
        %4120 = vadd.xlane.f32.xlu0 %v4102
        %v4121 = vpop.xlane.xlu0 %4120
        %4122 = vadd.xlane.f32.xlu0 %v4103
        %v4123 = vpop.xlane.xlu0 %4122
        %4124 = vadd.xlane.f32.xlu0 %v4104
        %v4125 = vpop.xlane.xlu0 %4124
        %4126 = vadd.xlane.f32.xlu0 %v4105
        %v4127 = vpop.xlane.xlu0 %4126
        %4128 = vadd.xlane.f32.xlu0 %v4106
        %v4129 = vpop.xlane.xlu0 %4128
        %4130 = vadd.xlane.f32.xlu0 %v4107
        %v4131 = vpop.xlane.xlu0 %4130
        %4132 = vadd.xlane.f32.xlu0 %v4108
        %v4133 = vpop.xlane.xlu0 %4132
        %4134 = vadd.xlane.f32.xlu0 %v4109
        %v4135 = vpop.xlane.xlu0 %4134
        %4136 = vadd.xlane.f32.xlu0 %v4110
        %v4137 = vpop.xlane.xlu0 %4136
        %4138 = vadd.xlane.f32.xlu0 %v4111
        %v4139 = vpop.xlane.xlu0 %4138
        %4140 = vadd.xlane.f32.xlu0 %v4112
        %v4141 = vpop.xlane.xlu0 %4140
        %4142 = vadd.xlane.f32.xlu0 %v4113
        %v4143 = vpop.xlane.xlu0 %4142
        %4144 = vadd.xlane.f32.xlu0 %v4114
        %v4145 = vpop.xlane.xlu0 %4144
        %4146 = vadd.xlane.f32.xlu0 %v4115
        %v4147 = vpop.xlane.xlu0 %4146
        %v4148 = vmax.f32 %v4117, 1e-30
        %v4149 = vmax.f32 %v4119, 1e-30
        %v4150 = vmax.f32 %v4121, 1e-30
        %v4151 = vmax.f32 %v4123, 1e-30
        %v4152 = vmax.f32 %v4125, 1e-30
        %v4153 = vmax.f32 %v4127, 1e-30
        %v4154 = vmax.f32 %v4129, 1e-30
        %v4155 = vmax.f32 %v4131, 1e-30
        %v4156 = vmax.f32 %v4133, 1e-30
        %v4157 = vmax.f32 %v4135, 1e-30
        %v4158 = vmax.f32 %v4137, 1e-30
        %v4159 = vmax.f32 %v4139, 1e-30
        %v4160 = vmax.f32 %v4141, 1e-30
        %v4161 = vmax.f32 %v4143, 1e-30
        %v4162 = vmax.f32 %v4145, 1e-30
        %v4163 = vmax.f32 %v4147, 1e-30
        %v4164 = vrsqrt.pop %v4148
        %v4165 = vrsqrt.pop %v4149
        %v4166 = vrsqrt.pop %v4150
        %v4167 = vrsqrt.pop %v4151
        %v4168 = vrsqrt.pop %v4152
        %v4169 = vrsqrt.pop %v4153
        %v4170 = vrsqrt.pop %v4154
        %v4171 = vrsqrt.pop %v4155
        %v4172 = vrsqrt.pop %v4156
        %v4173 = vrsqrt.pop %v4157
        %v4174 = vrsqrt.pop %v4158
        %v4175 = vrsqrt.pop %v4159
        %v4176 = vrsqrt.pop %v4160
        %v4177 = vrsqrt.pop %v4161
        %v4178 = vrsqrt.pop %v4162
        %v4179 = vrsqrt.pop %v4163
        %v4180 = vmul.f32 %v4148, 0.83666
        %v4181 = vmul.f32 %v4149, 0.83666
        %v4182 = vmul.f32 %v4150, 0.83666
        %v4183 = vmul.f32 %v4151, 0.83666
        %v4184 = vmul.f32 %v4152, 0.83666
        %v4185 = vmul.f32 %v4153, 0.83666
        %v4186 = vmul.f32 %v4154, 0.83666
        %v4187 = vmul.f32 %v4155, 0.83666
        %v4188 = vmul.f32 %v4156, 0.83666
        %v4189 = vmul.f32 %v4157, 0.83666
        %v4190 = vmul.f32 %v4158, 0.83666
        %v4191 = vmul.f32 %v4159, 0.83666
        %v4192 = vmul.f32 %v4160, 0.83666
        %v4193 = vmul.f32 %v4161, 0.83666
        %v4194 = vmul.f32 %v4162, 0.83666
        %v4195 = vmul.f32 %v4163, 0.83666
        %v4196 = vmul.f32 %v4180, %v4164
        %v4197 = vmul.f32 %v4181, %v4165
        %v4198 = vmul.f32 %v4182, %v4166
        %v4199 = vmul.f32 %v4183, %v4167
        %v4200 = vmul.f32 %v4184, %v4168
        %v4201 = vmul.f32 %v4185, %v4169
        %v4202 = vmul.f32 %v4186, %v4170
        %v4203 = vmul.f32 %v4187, %v4171
        %v4204 = vmul.f32 %v4188, %v4172
        %v4205 = vmul.f32 %v4189, %v4173
        %v4206 = vmul.f32 %v4190, %v4174
        %v4207 = vmul.f32 %v4191, %v4175
        %v4208 = vmul.f32 %v4192, %v4176
        %v4209 = vmul.f32 %v4193, %v4177
        %v4210 = vmul.f32 %v4194, %v4178
        %v4211 = vmul.f32 %v4195, %v4179
        %v4212 = vtanh.pop %v4196
        %v4213 = vtanh.pop %v4197
        %v4214 = vtanh.pop %v4198
        %v4215 = vtanh.pop %v4199
        %v4216 = vtanh.pop %v4200
        %v4217 = vtanh.pop %v4201
        %v4218 = vtanh.pop %v4202
        %v4219 = vtanh.pop %v4203
        %v4220 = vtanh.pop %v4204
        %v4221 = vtanh.pop %v4205
        %v4222 = vtanh.pop %v4206
        %v4223 = vtanh.pop %v4207
        %v4224 = vtanh.pop %v4208
        %v4225 = vtanh.pop %v4209
        %v4226 = vtanh.pop %v4210
        %v4227 = vtanh.pop %v4211
        %v4228 = vmul.f32 %v4164, 1.1952286
        %v4229 = vmul.f32 %v4165, 1.1952286
        %v4230 = vmul.f32 %v4166, 1.1952286
        %v4231 = vmul.f32 %v4167, 1.1952286
        %v4232 = vmul.f32 %v4168, 1.1952286
        %v4233 = vmul.f32 %v4169, 1.1952286
        %v4234 = vmul.f32 %v4170, 1.1952286
        %v4235 = vmul.f32 %v4171, 1.1952286
        %v4236 = vmul.f32 %v4172, 1.1952286
        %v4237 = vmul.f32 %v4173, 1.1952286
        %v4238 = vmul.f32 %v4174, 1.1952286
        %v4239 = vmul.f32 %v4175, 1.1952286
        %v4240 = vmul.f32 %v4176, 1.1952286
        %v4241 = vmul.f32 %v4177, 1.1952286
        %v4242 = vmul.f32 %v4178, 1.1952286
        %v4243 = vmul.f32 %v4179, 1.1952286
        %v4244 = vmul.f32 %v4212, %v4228
        %v4245 = vmul.f32 %v4213, %v4229
        %v4246 = vmul.f32 %v4214, %v4230
        %v4247 = vmul.f32 %v4215, %v4231
        %v4248 = vmul.f32 %v4216, %v4232
        %v4249 = vmul.f32 %v4217, %v4233
        %v4250 = vmul.f32 %v4218, %v4234
        %v4251 = vmul.f32 %v4219, %v4235
        %v4252 = vmul.f32 %v4220, %v4236
        %v4253 = vmul.f32 %v4221, %v4237
        %v4254 = vmul.f32 %v4222, %v4238
        %v4255 = vmul.f32 %v4223, %v4239
        %v4256 = vmul.f32 %v4224, %v4240
        %v4257 = vmul.f32 %v4225, %v4241
        %v4258 = vmul.f32 %v4226, %v4242
        %v4259 = vmul.f32 %v4227, %v4243
        %v4260 = vmul.f32 %v4038, %v4244
        %v4261 = vmul.f32 %v4041, %v4245
        %v4262 = vmul.f32 %v4046, %v4246
        %v4263 = vmul.f32 %v4049, %v4247
        %v4264 = vmul.f32 %v4054, %v4248
        %v4265 = vmul.f32 %v4057, %v4249
        %v4266 = vmul.f32 %v4062, %v4250
        %v4267 = vmul.f32 %v4065, %v4251
        %v4268 = vmul.f32 %v4070, %v4252
        %v4269 = vmul.f32 %v4073, %v4253
        %v4270 = vmul.f32 %v4078, %v4254
        %v4271 = vmul.f32 %v4081, %v4255
        %v4272 = vmul.f32 %v4086, %v4256
        %v4273 = vmul.f32 %v4089, %v4257
        %v4274 = vmul.f32 %v4094, %v4258
        %v4275 = vmul.f32 %v4097, %v4259
        %v4276 = vld [vmem:[%s8] sm:$0x1]
        %v4278 = vlaneseq
        %v4279 = vshrl.u32 %v4278, 7
        %v4280 = vsub.s32 0, %v4279
        %v4281 = vrot.slane %v4276, %v4280
        %v4283 = vmul.f32 %v3549, %v4281
        %v4284 = vmul.f32 %v3552, %v4281
        %v4285 = vmul.f32 %v3557, %v4281
        %v4286 = vmul.f32 %v3560, %v4281
        %v4287 = vmul.f32 %v3565, %v4281
        %v4288 = vmul.f32 %v3568, %v4281
        %v4289 = vmul.f32 %v3573, %v4281
        %v4290 = vmul.f32 %v3576, %v4281
        %v4291 = vmul.f32 %v3581, %v4281
        %v4292 = vmul.f32 %v3584, %v4281
        %v4293 = vmul.f32 %v3589, %v4281
        %v4294 = vmul.f32 %v3592, %v4281
        %v4295 = vmul.f32 %v3597, %v4281
        %v4296 = vmul.f32 %v3600, %v4281
        %v4297 = vmul.f32 %v3605, %v4281
        %v4298 = vmul.f32 %v3608, %v4281
        %4299 = vadd.xlane.f32.xlu0 %v4283
        %v4300 = vpop.xlane.xlu0 %4299
        %4301 = vadd.xlane.f32.xlu0 %v4284
        %v4302 = vpop.xlane.xlu0 %4301
        %4303 = vadd.xlane.f32.xlu0 %v4285
        %v4304 = vpop.xlane.xlu0 %4303
        %4305 = vadd.xlane.f32.xlu0 %v4286
        %v4306 = vpop.xlane.xlu0 %4305
        %4307 = vadd.xlane.f32.xlu0 %v4287
        %v4308 = vpop.xlane.xlu0 %4307
        %4309 = vadd.xlane.f32.xlu0 %v4288
        %v4310 = vpop.xlane.xlu0 %4309
        %4311 = vadd.xlane.f32.xlu0 %v4289
        %v4312 = vpop.xlane.xlu0 %4311
        %4313 = vadd.xlane.f32.xlu0 %v4290
        %v4314 = vpop.xlane.xlu0 %4313
        %4315 = vadd.xlane.f32.xlu0 %v4291
        %v4316 = vpop.xlane.xlu0 %4315
        %4317 = vadd.xlane.f32.xlu0 %v4292
        %v4318 = vpop.xlane.xlu0 %4317
        %4319 = vadd.xlane.f32.xlu0 %v4293
        %v4320 = vpop.xlane.xlu0 %4319
        %4321 = vadd.xlane.f32.xlu0 %v4294
        %v4322 = vpop.xlane.xlu0 %4321
        %4323 = vadd.xlane.f32.xlu0 %v4295
        %v4324 = vpop.xlane.xlu0 %4323
        %4325 = vadd.xlane.f32.xlu0 %v4296
        %v4326 = vpop.xlane.xlu0 %4325
        %4327 = vadd.xlane.f32.xlu0 %v4297
        %v4328 = vpop.xlane.xlu0 %4327
        %4329 = vadd.xlane.f32.xlu0 %v4298
        %v4330 = vpop.xlane.xlu0 %4329
        %s4331 = sld [smem:[#allocation12]]
        %v4332 = vstv %s4331
        %v4333 = vadd.f32 %v4300, %v4332
        %v4334 = vadd.f32 %v4302, %v4332
        %v4335 = vadd.f32 %v4304, %v4332
        %v4336 = vadd.f32 %v4306, %v4332
        %v4337 = vadd.f32 %v4308, %v4332
        %v4338 = vadd.f32 %v4310, %v4332
        %v4339 = vadd.f32 %v4312, %v4332
        %v4340 = vadd.f32 %v4314, %v4332
        %v4341 = vadd.f32 %v4316, %v4332
        %v4342 = vadd.f32 %v4318, %v4332
        %v4343 = vadd.f32 %v4320, %v4332
        %v4344 = vadd.f32 %v4322, %v4332
        %v4345 = vadd.f32 %v4324, %v4332
        %v4346 = vadd.f32 %v4326, %v4332
        %v4347 = vadd.f32 %v4328, %v4332
        %v4348 = vadd.f32 %v4330, %v4332
        %v4349 = vxor.u32 %v4333, 2147483648
        %v4350 = vxor.u32 %v4334, 2147483648
        %v4351 = vxor.u32 %v4335, 2147483648
        %v4352 = vxor.u32 %v4336, 2147483648
        %v4353 = vxor.u32 %v4337, 2147483648
        %v4354 = vxor.u32 %v4338, 2147483648
        %v4355 = vxor.u32 %v4339, 2147483648
        %v4356 = vxor.u32 %v4340, 2147483648
        %v4357 = vxor.u32 %v4341, 2147483648
        %v4358 = vxor.u32 %v4342, 2147483648
        %v4359 = vxor.u32 %v4343, 2147483648
        %v4360 = vxor.u32 %v4344, 2147483648
        %v4361 = vxor.u32 %v4345, 2147483648
        %v4362 = vxor.u32 %v4346, 2147483648
        %v4363 = vxor.u32 %v4347, 2147483648
        %v4364 = vxor.u32 %v4348, 2147483648
        %v4365 = vmul.f32 %v4349, 1.442695
        %v4366 = vpow.pop %v4365
        %v4367 = vmul.f32 %v4350, 1.442695
        %v4368 = vpow.pop %v4367
        %v4369 = vmul.f32 %v4351, 1.442695
        %v4370 = vpow.pop %v4369
        %v4371 = vmul.f32 %v4352, 1.442695
        %v4372 = vpow.pop %v4371
        %v4373 = vmul.f32 %v4353, 1.442695
        %v4374 = vpow.pop %v4373
        %v4375 = vmul.f32 %v4354, 1.442695
        %v4376 = vpow.pop %v4375
        %v4377 = vmul.f32 %v4355, 1.442695
        %v4378 = vpow.pop %v4377
        %v4379 = vmul.f32 %v4356, 1.442695
        %v4380 = vpow.pop %v4379
        %v4381 = vmul.f32 %v4357, 1.442695
        %v4382 = vpow.pop %v4381
        %v4383 = vmul.f32 %v4358, 1.442695
        %v4384 = vpow.pop %v4383
        %v4385 = vmul.f32 %v4359, 1.442695
        %v4386 = vpow.pop %v4385
        %v4387 = vmul.f32 %v4360, 1.442695
        %v4388 = vpow.pop %v4387
        %v4389 = vmul.f32 %v4361, 1.442695
        %v4390 = vpow.pop %v4389
        %v4391 = vmul.f32 %v4362, 1.442695
        %v4392 = vpow.pop %v4391
        %v4393 = vmul.f32 %v4363, 1.442695
        %v4394 = vpow.pop %v4393
        %v4395 = vmul.f32 %v4364, 1.442695
        %v4396 = vpow.pop %v4395
        %v4397 = vadd.f32 %v4366, 1.0
        %v4398 = vadd.f32 %v4368, 1.0
        %v4399 = vadd.f32 %v4370, 1.0
        %v4400 = vadd.f32 %v4372, 1.0
        %v4401 = vadd.f32 %v4374, 1.0
        %v4402 = vadd.f32 %v4376, 1.0
        %v4403 = vadd.f32 %v4378, 1.0
        %v4404 = vadd.f32 %v4380, 1.0
        %v4405 = vadd.f32 %v4382, 1.0
        %v4406 = vadd.f32 %v4384, 1.0
        %v4407 = vadd.f32 %v4386, 1.0
        %v4408 = vadd.f32 %v4388, 1.0
        %v4409 = vadd.f32 %v4390, 1.0
        %v4410 = vadd.f32 %v4392, 1.0
        %v4411 = vadd.f32 %v4394, 1.0
        %v4412 = vadd.f32 %v4396, 1.0
        %v4413 = vrcp.pop %v4397
        %v4414 = vmul.f32 1.0, %v4413
        %v4415 = vrcp.pop %v4398
        %v4416 = vmul.f32 1.0, %v4415
        %v4417 = vrcp.pop %v4399
        %v4418 = vmul.f32 1.0, %v4417
        %v4419 = vrcp.pop %v4400
        %v4420 = vmul.f32 1.0, %v4419
        %v4421 = vrcp.pop %v4401
        %v4422 = vmul.f32 1.0, %v4421
        %v4423 = vrcp.pop %v4402
        %v4424 = vmul.f32 1.0, %v4423
        %v4425 = vrcp.pop %v4403
        %v4426 = vmul.f32 1.0, %v4425
        %v4427 = vrcp.pop %v4404
        %v4428 = vmul.f32 1.0, %v4427
        %v4429 = vrcp.pop %v4405
        %v4430 = vmul.f32 1.0, %v4429
        %v4431 = vrcp.pop %v4406
        %v4432 = vmul.f32 1.0, %v4431
        %v4433 = vrcp.pop %v4407
        %v4434 = vmul.f32 1.0, %v4433
        %v4435 = vrcp.pop %v4408
        %v4436 = vmul.f32 1.0, %v4435
        %v4437 = vrcp.pop %v4409
        %v4438 = vmul.f32 1.0, %v4437
        %v4439 = vrcp.pop %v4410
        %v4440 = vmul.f32 1.0, %v4439
        %v4441 = vrcp.pop %v4411
        %v4442 = vmul.f32 1.0, %v4441
        %v4443 = vrcp.pop %v4412
        %v4444 = vmul.f32 1.0, %v4443
        %v4445 = vld [vmem:[%s9] sm:$0x1]
        %v4447 = vlaneseq
        %v4448 = vshrl.u32 %v4447, 7
        %v4449 = vsub.s32 0, %v4448
        %v4450 = vrot.slane %v4445, %v4449
        %v4452 = vmul.f32 %v4260, %v4450
        %v4453 = vmul.f32 %v4261, %v4450
        %v4454 = vmul.f32 %v4262, %v4450
        %v4455 = vmul.f32 %v4263, %v4450
        %v4456 = vmul.f32 %v4264, %v4450
        %v4457 = vmul.f32 %v4265, %v4450
        %v4458 = vmul.f32 %v4266, %v4450
        %v4459 = vmul.f32 %v4267, %v4450
        %v4460 = vmul.f32 %v4268, %v4450
        %v4461 = vmul.f32 %v4269, %v4450
        %v4462 = vmul.f32 %v4270, %v4450
        %v4463 = vmul.f32 %v4271, %v4450
        %v4464 = vmul.f32 %v4272, %v4450
        %v4465 = vmul.f32 %v4273, %v4450
        %v4466 = vmul.f32 %v4274, %v4450
        %v4467 = vmul.f32 %v4275, %v4450
        %4468 = vadd.xlane.f32.xlu0 %v4452
        %v4469 = vpop.xlane.xlu0 %4468
        %4470 = vadd.xlane.f32.xlu0 %v4453
        %v4471 = vpop.xlane.xlu0 %4470
        %4472 = vadd.xlane.f32.xlu0 %v4454
        %v4473 = vpop.xlane.xlu0 %4472
        %4474 = vadd.xlane.f32.xlu0 %v4455
        %v4475 = vpop.xlane.xlu0 %4474
        %4476 = vadd.xlane.f32.xlu0 %v4456
        %v4477 = vpop.xlane.xlu0 %4476
        %4478 = vadd.xlane.f32.xlu0 %v4457
        %v4479 = vpop.xlane.xlu0 %4478
        %4480 = vadd.xlane.f32.xlu0 %v4458
        %v4481 = vpop.xlane.xlu0 %4480
        %4482 = vadd.xlane.f32.xlu0 %v4459
        %v4483 = vpop.xlane.xlu0 %4482
        %4484 = vadd.xlane.f32.xlu0 %v4460
        %v4485 = vpop.xlane.xlu0 %4484
        %4486 = vadd.xlane.f32.xlu0 %v4461
        %v4487 = vpop.xlane.xlu0 %4486
        %4488 = vadd.xlane.f32.xlu0 %v4462
        %v4489 = vpop.xlane.xlu0 %4488
        %4490 = vadd.xlane.f32.xlu0 %v4463
        %v4491 = vpop.xlane.xlu0 %4490
        %4492 = vadd.xlane.f32.xlu0 %v4464
        %v4493 = vpop.xlane.xlu0 %4492
        %4494 = vadd.xlane.f32.xlu0 %v4465
        %v4495 = vpop.xlane.xlu0 %4494
        %4496 = vadd.xlane.f32.xlu0 %v4466
        %v4497 = vpop.xlane.xlu0 %4496
        %4498 = vadd.xlane.f32.xlu0 %v4467
        %v4499 = vpop.xlane.xlu0 %4498
        %s4500 = sld [smem:[#allocation12 + $0x1]]
        %v4501 = vstv %s4500
        %v4502 = vadd.f32 %v4469, %v4501
        %v4503 = vadd.f32 %v4471, %v4501
        %v4504 = vadd.f32 %v4473, %v4501
        %v4505 = vadd.f32 %v4475, %v4501
        %v4506 = vadd.f32 %v4477, %v4501
        %v4507 = vadd.f32 %v4479, %v4501
        %v4508 = vadd.f32 %v4481, %v4501
        %v4509 = vadd.f32 %v4483, %v4501
        %v4510 = vadd.f32 %v4485, %v4501
        %v4511 = vadd.f32 %v4487, %v4501
        %v4512 = vadd.f32 %v4489, %v4501
        %v4513 = vadd.f32 %v4491, %v4501
        %v4514 = vadd.f32 %v4493, %v4501
        %v4515 = vadd.f32 %v4495, %v4501
        %v4516 = vadd.f32 %v4497, %v4501
        %v4517 = vadd.f32 %v4499, %v4501
        %v4518 = vxor.u32 %v4502, 2147483648
        %v4519 = vxor.u32 %v4503, 2147483648
        %v4520 = vxor.u32 %v4504, 2147483648
        %v4521 = vxor.u32 %v4505, 2147483648
        %v4522 = vxor.u32 %v4506, 2147483648
        %v4523 = vxor.u32 %v4507, 2147483648
        %v4524 = vxor.u32 %v4508, 2147483648
        %v4525 = vxor.u32 %v4509, 2147483648
        %v4526 = vxor.u32 %v4510, 2147483648
        %v4527 = vxor.u32 %v4511, 2147483648
        %v4528 = vxor.u32 %v4512, 2147483648
        %v4529 = vxor.u32 %v4513, 2147483648
        %v4530 = vxor.u32 %v4514, 2147483648
        %v4531 = vxor.u32 %v4515, 2147483648
        %v4532 = vxor.u32 %v4516, 2147483648
        %v4533 = vxor.u32 %v4517, 2147483648
        %v4534 = vmul.f32 %v4518, 1.442695
        %v4535 = vpow.pop %v4534
        %v4536 = vmul.f32 %v4519, 1.442695
        %v4537 = vpow.pop %v4536
        %v4538 = vmul.f32 %v4520, 1.442695
        %v4539 = vpow.pop %v4538
        %v4540 = vmul.f32 %v4521, 1.442695
        %v4541 = vpow.pop %v4540
        %v4542 = vmul.f32 %v4522, 1.442695
        %v4543 = vpow.pop %v4542
        %v4544 = vmul.f32 %v4523, 1.442695
        %v4545 = vpow.pop %v4544
        %v4546 = vmul.f32 %v4524, 1.442695
        %v4547 = vpow.pop %v4546
        %v4548 = vmul.f32 %v4525, 1.442695
        %v4549 = vpow.pop %v4548
        %v4550 = vmul.f32 %v4526, 1.442695
        %v4551 = vpow.pop %v4550
        %v4552 = vmul.f32 %v4527, 1.442695
        %v4553 = vpow.pop %v4552
        %v4554 = vmul.f32 %v4528, 1.442695
        %v4555 = vpow.pop %v4554
        %v4556 = vmul.f32 %v4529, 1.442695
        %v4557 = vpow.pop %v4556
        %v4558 = vmul.f32 %v4530, 1.442695
        %v4559 = vpow.pop %v4558
        %v4560 = vmul.f32 %v4531, 1.442695
        %v4561 = vpow.pop %v4560
        %v4562 = vmul.f32 %v4532, 1.442695
        %v4563 = vpow.pop %v4562
        %v4564 = vmul.f32 %v4533, 1.442695
        %v4565 = vpow.pop %v4564
        %v4566 = vadd.f32 %v4535, 1.0
        %v4567 = vadd.f32 %v4537, 1.0
        %v4568 = vadd.f32 %v4539, 1.0
        %v4569 = vadd.f32 %v4541, 1.0
        %v4570 = vadd.f32 %v4543, 1.0
        %v4571 = vadd.f32 %v4545, 1.0
        %v4572 = vadd.f32 %v4547, 1.0
        %v4573 = vadd.f32 %v4549, 1.0
        %v4574 = vadd.f32 %v4551, 1.0
        %v4575 = vadd.f32 %v4553, 1.0
        %v4576 = vadd.f32 %v4555, 1.0
        %v4577 = vadd.f32 %v4557, 1.0
        %v4578 = vadd.f32 %v4559, 1.0
        %v4579 = vadd.f32 %v4561, 1.0
        %v4580 = vadd.f32 %v4563, 1.0
        %v4581 = vadd.f32 %v4565, 1.0
        %v4582 = vrcp.pop %v4566
        %v4583 = vmul.f32 1.0, %v4582
        %v4584 = vrcp.pop %v4567
        %v4585 = vmul.f32 1.0, %v4584
        %v4586 = vrcp.pop %v4568
        %v4587 = vmul.f32 1.0, %v4586
        %v4588 = vrcp.pop %v4569
        %v4589 = vmul.f32 1.0, %v4588
        %v4590 = vrcp.pop %v4570
        %v4591 = vmul.f32 1.0, %v4590
        %v4592 = vrcp.pop %v4571
        %v4593 = vmul.f32 1.0, %v4592
        %v4594 = vrcp.pop %v4572
        %v4595 = vmul.f32 1.0, %v4594
        %v4596 = vrcp.pop %v4573
        %v4597 = vmul.f32 1.0, %v4596
        %v4598 = vrcp.pop %v4574
        %v4599 = vmul.f32 1.0, %v4598
        %v4600 = vrcp.pop %v4575
        %v4601 = vmul.f32 1.0, %v4600
        %v4602 = vrcp.pop %v4576
        %v4603 = vmul.f32 1.0, %v4602
        %v4604 = vrcp.pop %v4577
        %v4605 = vmul.f32 1.0, %v4604
        %v4606 = vrcp.pop %v4578
        %v4607 = vmul.f32 1.0, %v4606
        %v4608 = vrcp.pop %v4579
        %v4609 = vmul.f32 1.0, %v4608
        %v4610 = vrcp.pop %v4580
        %v4611 = vmul.f32 1.0, %v4610
        %v4612 = vrcp.pop %v4581
        %v4613 = vmul.f32 1.0, %v4612
        %v4614 = vmul.f32 %v4414, %v3549
        %v4615 = vmul.f32 %v4416, %v3552
        %v4616 = vmul.f32 %v4418, %v3557
        %v4617 = vmul.f32 %v4420, %v3560
        %v4618 = vmul.f32 %v4422, %v3565
        %v4619 = vmul.f32 %v4424, %v3568
        %v4620 = vmul.f32 %v4426, %v3573
        %v4621 = vmul.f32 %v4428, %v3576
        %v4622 = vmul.f32 %v4430, %v3581
        %v4623 = vmul.f32 %v4432, %v3584
        %v4624 = vmul.f32 %v4434, %v3589
        %v4625 = vmul.f32 %v4436, %v3592
        %v4626 = vmul.f32 %v4438, %v3597
        %v4627 = vmul.f32 %v4440, %v3600
        %v4628 = vmul.f32 %v4442, %v3605
        %v4629 = vmul.f32 %v4444, %v3608
        %v4630 = vmul.f32 %v4583, %v4260
        %v4631 = vmul.f32 %v4585, %v4261
        %v4632 = vmul.f32 %v4587, %v4262
        %v4633 = vmul.f32 %v4589, %v4263
        %v4634 = vmul.f32 %v4591, %v4264
        %v4635 = vmul.f32 %v4593, %v4265
        %v4636 = vmul.f32 %v4595, %v4266
        %v4637 = vmul.f32 %v4597, %v4267
        %v4638 = vmul.f32 %v4599, %v4268
        %v4639 = vmul.f32 %v4601, %v4269
        %v4640 = vmul.f32 %v4603, %v4270
        %v4641 = vmul.f32 %v4605, %v4271
        %v4642 = vmul.f32 %v4607, %v4272
        %v4643 = vmul.f32 %v4609, %v4273
        %v4644 = vmul.f32 %v4611, %v4274
        %v4645 = vmul.f32 %v4613, %v4275
        %v4646 = vadd.f32 %v4614, %v4630
        %v4647 = vadd.f32 %v4615, %v4631
        %v4648 = vadd.f32 %v4616, %v4632
        %v4649 = vadd.f32 %v4617, %v4633
        %v4650 = vadd.f32 %v4618, %v4634
        %v4651 = vadd.f32 %v4619, %v4635
        %v4652 = vadd.f32 %v4620, %v4636
        %v4653 = vadd.f32 %v4621, %v4637
        %v4654 = vadd.f32 %v4622, %v4638
        %v4655 = vadd.f32 %v4623, %v4639
        %v4656 = vadd.f32 %v4624, %v4640
        %v4657 = vadd.f32 %v4625, %v4641
        %v4658 = vadd.f32 %v4626, %v4642
        %v4659 = vadd.f32 %v4627, %v4643
        %v4660 = vadd.f32 %v4628, %v4644
        %v4661 = vadd.f32 %v4629, %v4645
        %4662 = vst [vmem:[%s559] sm:$0xff] %v3549
        %4663 = vst [vmem:[%s559 + $0x8] sm:$0xff] %v3552
        %4664 = vst [vmem:[%s559 + $0x10] sm:$0xff] %v3557
        %4665 = vst [vmem:[%s559 + $0x18] sm:$0xff] %v3560
        %4666 = vst [vmem:[%s559 + $0x20] sm:$0xff] %v3565
        %4667 = vst [vmem:[%s559 + $0x28] sm:$0xff] %v3568
        %4668 = vst [vmem:[%s559 + $0x30] sm:$0xff] %v3573
        %4669 = vst [vmem:[%s559 + $0x38] sm:$0xff] %v3576
        %4670 = vst [vmem:[%s559 + $0x40] sm:$0xff] %v3581
        %4671 = vst [vmem:[%s559 + $0x48] sm:$0xff] %v3584
        %4672 = vst [vmem:[%s559 + $0x50] sm:$0xff] %v3589
        %4673 = vst [vmem:[%s559 + $0x58] sm:$0xff] %v3592
        %4674 = vst [vmem:[%s559 + $0x60] sm:$0xff] %v3597
        %4675 = vst [vmem:[%s559 + $0x68] sm:$0xff] %v3600
        %4676 = vst [vmem:[%s559 + $0x70] sm:$0xff] %v3605
        %4677 = vst [vmem:[%s559 + $0x78] sm:$0xff] %v3608
        %4678 = vst [vmem:[%s566] sm:$0xff] %v4260
        %4679 = vst [vmem:[%s566 + $0x8] sm:$0xff] %v4261
        %4680 = vst [vmem:[%s566 + $0x10] sm:$0xff] %v4262
        %4681 = vst [vmem:[%s566 + $0x18] sm:$0xff] %v4263
        %4682 = vst [vmem:[%s566 + $0x20] sm:$0xff] %v4264
        %4683 = vst [vmem:[%s566 + $0x28] sm:$0xff] %v4265
        %4684 = vst [vmem:[%s566 + $0x30] sm:$0xff] %v4266
        %4685 = vst [vmem:[%s566 + $0x38] sm:$0xff] %v4267
        %4686 = vst [vmem:[%s566 + $0x40] sm:$0xff] %v4268
        %4687 = vst [vmem:[%s566 + $0x48] sm:$0xff] %v4269
        %4688 = vst [vmem:[%s566 + $0x50] sm:$0xff] %v4270
        %4689 = vst [vmem:[%s566 + $0x58] sm:$0xff] %v4271
        %4690 = vst [vmem:[%s566 + $0x60] sm:$0xff] %v4272
        %4691 = vst [vmem:[%s566 + $0x68] sm:$0xff] %v4273
        %4692 = vst [vmem:[%s566 + $0x70] sm:$0xff] %v4274
        %4693 = vst [vmem:[%s566 + $0x78] sm:$0xff] %v4275
        %4694 = vst [vmem:[%s573] sm:$0xff] %v4646
        %4695 = vst [vmem:[%s573 + $0x8] sm:$0xff] %v4647
        %4696 = vst [vmem:[%s573 + $0x10] sm:$0xff] %v4648
        %4697 = vst [vmem:[%s573 + $0x18] sm:$0xff] %v4649
        %4698 = vst [vmem:[%s573 + $0x20] sm:$0xff] %v4650
        %4699 = vst [vmem:[%s573 + $0x28] sm:$0xff] %v4651
        %4700 = vst [vmem:[%s573 + $0x30] sm:$0xff] %v4652
        %4701 = vst [vmem:[%s573 + $0x38] sm:$0xff] %v4653
        %4702 = vst [vmem:[%s573 + $0x40] sm:$0xff] %v4654
        %4703 = vst [vmem:[%s573 + $0x48] sm:$0xff] %v4655
        %4704 = vst [vmem:[%s573 + $0x50] sm:$0xff] %v4656
        %4705 = vst [vmem:[%s573 + $0x58] sm:$0xff] %v4657
        %4706 = vst [vmem:[%s573 + $0x60] sm:$0xff] %v4658
        %4707 = vst [vmem:[%s573 + $0x68] sm:$0xff] %v4659
        %4708 = vst [vmem:[%s573 + $0x70] sm:$0xff] %v4660
        %4709 = vst [vmem:[%s573 + $0x78] sm:$0xff] %v4661
        %s4710 = sand.u32 %s288, 1
        %s4711 = scalar_lea.sflag [#allocation4], %s4710
        %s4712 = sand.u32 %s288, 1
        %s4713 = smul.addr %s4712, 128
        %s4714 = scalar_lea.vmem [#allocation13], %s4713
        %s4715 = sand.u32 %s39, 1
        %s4716 = scalar_lea.sflag [#allocation15], %s4715
        %s4717 = sand.u32 %s314, 1
        %s4718 = smul.addr %s4717, 128
        %s4719 = scalar_lea.vmem [#allocation14], %s4718
        %s4720 = sand.u32 %s39, 1
        %s4721 = scalar_lea.sflag [#allocation15], %s4720
        %s4722 = sand.u32 %s340, 1
        %s4723 = smul.addr %s4722, 128
        %s4724 = scalar_lea.vmem [#allocation16], %s4723
        // Predicated region
        $region89: #{tpu_custom_call.1} parent=63 // pred_check
          %p4725 = pneg %p298
        $region90: #{tpu_custom_call.1} parent=63 // pred_check_branch
          %4727 = sbr.rel (%p4725) target = $region92
        $region91: #{tpu_custom_call.1} parent=63 // pred_region
          %s4728 = smul.u32 16, %s39
          %s4730 = ssub.s32 2048, 2048
          %4731 = vsyncadd %s4711, %s4730
          %s4732 = smul.addr %s4728, 128
          %s4733 = scalar_lea.hbm %s11, %s4732
          %s4734 = sshll.u32 %s4714, 4
          %s4735 = int_to_ptr.vmem [resolvable:$true] %s4734
          %4740 = dma.vmem_to_hbm [thread:$0]  %s4735, 2048, %s4733, %s4711, 128, 128, 8
        $region92: #{tpu_custom_call.1} parent=63 // pred_fallthru
          _
        // Predicated region
        $region93: #{tpu_custom_call.1} parent=63 // pred_check
          %p4741 = pneg %p324
        $region94: #{tpu_custom_call.1} parent=63 // pred_check_branch
          %4743 = sbr.rel (%p4741) target = $region96
        $region95: #{tpu_custom_call.1} parent=63 // pred_region
          %s4744 = smul.u32 16, %s39
          %s4746 = ssub.s32 2048, 2048
          %4747 = vsyncadd %s4716, %s4746
          %s4748 = smul.addr %s4744, 128
          %s4749 = scalar_lea.hbm %s12, %s4748
          %s4750 = sshll.u32 %s4719, 4
          %s4751 = int_to_ptr.vmem [resolvable:$true] %s4750
          %4756 = dma.vmem_to_hbm [thread:$0]  %s4751, 2048, %s4749, %s4716, 128, 128, 8
        $region96: #{tpu_custom_call.1} parent=63 // pred_fallthru
          _
        // Predicated region
        $region97: #{tpu_custom_call.1} parent=63 // pred_check
          %p4757 = pneg %p350
        $region98: #{tpu_custom_call.1} parent=63 // pred_check_branch
          %4759 = sbr.rel (%p4757) target = $region100
        $region99: #{tpu_custom_call.1} parent=63 // pred_region
          %s4760 = smul.u32 16, %s39
          %s4762 = ssub.s32 2048, 2048
          %4763 = vsyncadd %s4721, %s4762
          %s4764 = smul.addr %s4760, 128
          %s4765 = scalar_lea.hbm %s13, %s4764
          %s4766 = sshll.u32 %s4724, 4
          %s4767 = int_to_ptr.vmem [resolvable:$true] %s4766
          %4772 = dma.vmem_to_hbm [thread:$0]  %s4767, 2048, %s4765, %s4721, 128, 128, 8
        $region100: #{tpu_custom_call.1} parent=63 // pred_fallthru
          _
      $region64: #{tpu_custom_call.1} parent=5 // pred_fallthru
        _
      %p4773 = scmp.le.s32.totalorder 2, %s34
      // Predicated region
      $region101: #{tpu_custom_call.1} parent=5 // pred_check
        %p4774 = pneg %p4773
      $region102: #{tpu_custom_call.1} parent=5 // pred_check_branch
        %4776 = sbr.rel (%p4774) target = $region104
      $region103: #{tpu_custom_call.1} parent=5 // pred_region
        %s4777 = ssub.s32 %s34, 2
        // Predicated region
        $region105: #{tpu_custom_call.1} parent=103 // pred_check
          %p4778 = pneg %p304
        $region106: #{tpu_custom_call.1} parent=103 // pred_check_branch
          %4780 = sbr.rel (%p4778) target = $region108
        $region107: #{tpu_custom_call.1} parent=103 // pred_region
          %s4781 = sand.u32 %s289, 1
          %s4782 = scalar_lea.sflag [#allocation4], %s4781
          %s4783 = sand.u32 %s289, 1
          %s4784 = smul.addr %s4783, 128
          %s4785 = scalar_lea.vmem [#allocation13], %s4784
          %4786 = dma.done %s4782, 2048
        $region108: #{tpu_custom_call.1} parent=103 // pred_fallthru
          _
        // Predicated region
        $region109: #{tpu_custom_call.1} parent=103 // pred_check
          %p4787 = pneg %p330
        $region110: #{tpu_custom_call.1} parent=103 // pred_check_branch
          %4789 = sbr.rel (%p4787) target = $region112
        $region111: #{tpu_custom_call.1} parent=103 // pred_region
          %s4790 = sand.u32 %s40, 1
          %s4791 = scalar_lea.sflag [#allocation15], %s4790
          %s4792 = sand.u32 %s315, 1
          %s4793 = smul.addr %s4792, 128
          %s4794 = scalar_lea.vmem [#allocation14], %s4793
          %4795 = dma.done %s4791, 2048
        $region112: #{tpu_custom_call.1} parent=103 // pred_fallthru
          _
        // Predicated region
        $region113: #{tpu_custom_call.1} parent=103 // pred_check
          %p4796 = pneg %p356
        $region114: #{tpu_custom_call.1} parent=103 // pred_check_branch
          %4798 = sbr.rel (%p4796) target = $region116
        $region115: #{tpu_custom_call.1} parent=103 // pred_region
          %s4799 = sand.u32 %s40, 1
          %s4800 = scalar_lea.sflag [#allocation15], %s4799
          %s4801 = sand.u32 %s341, 1
          %s4802 = smul.addr %s4801, 128
          %s4803 = scalar_lea.vmem [#allocation16], %s4802
          %4804 = dma.done %s4800, 2048
        $region116: #{tpu_custom_call.1} parent=103 // pred_fallthru
          _
      $region104: #{tpu_custom_call.1} parent=5 // pred_fallthru
        _
    $region6: #{tpu_custom_call.1} parent=1 // loop_footer
      %s38 = sadd.s32 1, %s34
    $region7: #{tpu_custom_call.1} parent=1 // loop_footer_branch
      %33 = sbr.rel target = $region3
    $region8: #{tpu_custom_call.1} parent=1 // loop_exit
      _
    %4805 = vsyncpa [#allocation3], 1
    %s4806 = scalar_lea.sflag [#allocation3], 1
    %4807 = vsyncpa %s4806, 1
    %4808 = vsyncpa [#allocation7], 1
    %s4809 = scalar_lea.sflag [#allocation7], 1
    %4810 = vsyncpa %s4809, 1
    %4811 = vsyncpa [#allocation10], 1
    %4812 = vsyncpa [#allocation4], 1
    %s4813 = scalar_lea.sflag [#allocation4], 1
    %4814 = vsyncpa %s4813, 1
    %4815 = vsyncpa [#allocation15], 1
    %s4816 = scalar_lea.sflag [#allocation15], 1
    %4817 = vsyncpa %s4816, 1
    %4818 = vsyncpa [#allocation5], 1
    %s4819 = scalar_lea.sflag [#allocation5], 1
    %4820 = vsyncpa %s4819, 1

</llo_original>
